<compile_context>
chip_gen: v6e
topology: v6e:2x2x1
jax: 0.10.0
libtpu: 0.0.40
codegen_flags: <defaults>
</compile_context>

<pallas_src>
import math
import functools

import jax
import jax.numpy as jnp
from jax.experimental import pallas as pl
from jax.experimental.pallas import tpu as pltpu


# ----------------------------------------------------------------------------
# Shared math
# ----------------------------------------------------------------------------
def _layer_norm(z, g, b, eps=1e-6):
    mu = jnp.mean(z, axis=-1, keepdims=True)
    var = jnp.mean((z - mu) ** 2, axis=-1, keepdims=True)
    return (z - mu) * jax.lax.rsqrt(var + eps) * g + b


# ----------------------------------------------------------------------------
# Pallas kernel: one batch block (bb elements, whole model) per grid step.
# ----------------------------------------------------------------------------
def _transformer_kernel(x_ref, temb_ref, pos_ref,
                        w_in_ref, b_in_ref,
                        wqkv_ref, bqkv_ref, wo_ref, bo_ref,
                        ln1g_ref, ln1b_ref,
                        w1_ref, b1_ref, w2_ref, b2_ref,
                        ln2g_ref, ln2b_ref,
                        wout_ref, bout_ref,
                        out_ref,
                        *, n_layers, n_head, d_k, d_v, seq_valid, matmul_dtype):
    f32 = jnp.float32
    cdt = matmul_dtype
    bb, S_pad, d_in = x_ref.shape
    dm = pos_ref.shape[-1]
    T_out = out_ref.shape[1]
    R = bb * S_pad                       # all rows of the block, flattened
    HDK = n_head * d_k
    HDV = n_head * d_v
    scale = 1.0 / math.sqrt(d_k)

    # ---- input projection over ALL (aligned) rows; bf16 operands, f32 accumulate.
    x2 = x_ref[...].reshape(R, d_in)
    h = jnp.dot(x2.astype(cdt), w_in_ref[...].astype(cdt),
                preferred_element_type=f32) + b_in_ref[...]
    h3 = h.reshape(bb, S_pad, dm)

    # ---- time token injected at row (seq_valid-1): that row of x is zero, so its
    #      projection is exactly b_in -> correct with (temb - b_in).  Positional
    #      encoding (already reordered wrapper-side for time-token-last) added.
    row = jax.lax.broadcasted_iota(jnp.int32, (S_pad, 1), 0)
    tmask = (row == (seq_valid - 1)).astype(f32)                         # (S_pad, 1)
    h3 = h3 + tmask[None] * (temb_ref[...] - b_in_ref[...][None]) + pos_ref[...][None]
    h2 = h3.reshape(R, dm)               # running activations, (R, d_model)

    # key-padding bias for pad rows (rows >= seq_valid); built from iota, no DMA.
    if S_pad > seq_valid:
        kpos = jax.lax.broadcasted_iota(jnp.int32, (1, 1, S_pad), 2)
        kbias = jnp.where(kpos < seq_valid, 0.0, -1e9).astype(f32)
    else:
        kbias = None

    for i in range(n_layers):
        # ---- fused QKV projection --------------------------------------------
        qkv = jnp.dot(h2.astype(cdt), wqkv_ref[i].astype(cdt),
                      preferred_element_type=f32) + bqkv_ref[i]          # (R, 2HDK+HDV)
        qkv3 = qkv.reshape(bb, S_pad, 2 * HDK + HDV)

        # ---- heads folded into the leading (batch) dim: one score einsum, ONE
        #      softmax and one PV einsum per layer (instead of per head).
        # TODO(synk): a fully slice-free head fold needs a (bb,S,H,dk)->(bb*H,S,dk)
        #             relayout (pltpu.einshape); kept as static lane slices because
        #             Mosaic support for that relayout at d_k=8 lanes is shaky.
        q = jnp.concatenate(
            [qkv3[:, :, hh * d_k:(hh + 1) * d_k] for hh in range(n_head)], axis=0)
        k = jnp.concatenate(
            [qkv3[:, :, HDK + hh * d_k:HDK + (hh + 1) * d_k] for hh in range(n_head)],
            axis=0)
        v = jnp.concatenate(
            [qkv3[:, :, 2 * HDK + hh * d_v:2 * HDK + (hh + 1) * d_v]
             for hh in range(n_head)], axis=0)                           # (H*bb, S, d)
        att = jnp.einsum('bqd,bkd->bqk', q.astype(cdt), k.astype(cdt),
                         preferred_element_type=f32) * scale             # (H*bb, S, S)
        if kbias is not None:
            att = att + kbias
        # manual softmax: denominator via approximate reciprocal on the EUP slot
        m = jnp.max(att, axis=-1, keepdims=True)
        p = jnp.exp(att - m)
        l = jnp.sum(p, axis=-1, keepdims=True)
        att = p * pl.reciprocal(l, approx=True)
        o = jnp.einsum('bqk,bkd->bqd', att.astype(cdt), v.astype(cdt),
                       preferred_element_type=f32)                       # (H*bb, S, d_v)
        a = jnp.concatenate([o[hh * bb:(hh + 1) * bb] for hh in range(n_head)],
                            axis=-1).reshape(R, HDV)
        a = jnp.dot(a.astype(cdt), wo_ref[i].astype(cdt),
                    preferred_element_type=f32) + bo_ref[i]
        h2 = _layer_norm(a + h2, ln1g_ref[i], ln1b_ref[i])

        # ---- position-wise feed-forward (post-LN, residual) -------------------
        ff = jnp.dot(h2.astype(cdt), w1_ref[i].astype(cdt),
                     preferred_element_type=f32) + b1_ref[i]
        ff = jnp.maximum(ff, 0.0)
        ff = jnp.dot(ff.astype(cdt), w2_ref[i].astype(cdt),
                     preferred_element_type=f32) + b2_ref[i]
        h2 = _layer_norm(ff + h2, ln2g_ref[i], ln2b_ref[i])

    # ---- output projection; weights are zero-padded to 128 lanes wrapper-side,
    #      so this store is an unmasked, lane-dense vst on an aligned row prefix.
    out_all = jnp.dot(h2.astype(cdt), wout_ref[...].astype(cdt),
                      preferred_element_type=f32) + bout_ref[...]        # (R, out_lanes)
    out3 = out_all.reshape(bb, S_pad, out_ref.shape[-1])
    out_ref[...] = out3[:, :T_out, :].astype(out_ref.dtype)


# ----------------------------------------------------------------------------
# Plain-JAX glue: time MLP and sinusoidal positional encoding (jitted with wrapper)
# ----------------------------------------------------------------------------
def time_mlp(params, noise_t, dim=64):
    # SinusoidalPosEmb(dim) -> Linear(dim, 4*dim) -> GELU(exact) -> Linear(4*dim, d_model)
    half = dim // 2
    emb = math.log(10000.0) / (half - 1)
    freqs = jnp.exp(jnp.arange(half, dtype=jnp.float32) * -emb)
    e = noise_t.astype(jnp.float32)[:, None] * freqs[None, :]
    sinu = jnp.concatenate([jnp.sin(e), jnp.cos(e)], axis=-1)            # (B, dim)
    h = sinu @ params["wt1"] + params["bt1"]
    h = jax.nn.gelu(h, approximate=False)                                # nn.GELU (erf)
    return h @ params["wt2"] + params["bt2"]                             # (B, d_model)


def positional_encoding(pos_vec, d_model):
    pos = pos_vec.astype(jnp.float32)
    i = jnp.arange(0, d_model, 2, dtype=jnp.float32)
    div = jnp.exp(i * -(math.log(10000.0) / d_model))
    ang = pos[:, None] * div[None, :]
    pe = jnp.zeros((pos.shape[0], d_model), jnp.float32)
    pe = pe.at[:, 0::2].set(jnp.sin(ang))
    pe = pe.at[:, 1::2].set(jnp.cos(ang))
    return pe


# ----------------------------------------------------------------------------
# One-time, parameter-only prep (hoisted out of the per-call path)
# ----------------------------------------------------------------------------
def prepare_params(params, *, d_model, seq_len):
    S = seq_len + 1
    S_pad = ((S + 7) // 8) * 8
    d_feats = params["wout"].shape[-1]
    out_lanes = max(128, ((d_feats + 127) // 128) * 128)

    pos = positional_encoding(jnp.arange(S) + 1, d_model)                # row j -> PE(j+1)
    # time-token-LAST reorder: frames get PE rows 1..S-1, time token gets PE row 0
    pos_reord = jnp.concatenate([pos[1:], pos[:1]], axis=0)
    pos_pad = jnp.zeros((S_pad, d_model), jnp.float32).at[:S].set(pos_reord)

    prep = dict(params)
    prep["pos_pad"] = pos_pad
    prep["w_qkv"] = jnp.concatenate([params["wq"], params["wk"], params["wv"]], axis=-1)
    prep["b_qkv"] = jnp.concatenate([params["bq"], params["bk"], params["bv"]], axis=-1)
    prep["wout128"] = (jnp.zeros((d_model, out_lanes), jnp.float32)
                       .at[:, :d_feats].set(params["wout"]))
    prep["bout128"] = (jnp.zeros((1, out_lanes), jnp.float32)
                       .at[:, :d_feats].set(params["bout"]))
    return prep


# ----------------------------------------------------------------------------
# Pallas wrapper (forward pass)
# ----------------------------------------------------------------------------
def transformer_diffusion_forward(prep, src, noise_t, condition,
                                  *, d_model, n_layers, n_head, d_k, d_v, d_feats,
                                  matmul_dtype=jnp.bfloat16, num_blocks=1):
    B, T, _ = src.shape
    S = T + 1                                                            # num_steps
    S_pad = prep["pos_pad"].shape[0]
    out_lanes = prep["wout128"].shape[-1]

    x = jnp.concatenate([src, condition], axis=-1).astype(jnp.float32)   # (B, T, d_in)
    d_in = x.shape[-1]
    # sequence-aligned input block: rows 0..T-1 = data, rows T..S_pad-1 = 0
    x_pad = jnp.zeros((B, S_pad, d_in), jnp.float32).at[:, :T, :].set(x)
    t_emb = time_mlp(prep, noise_t).astype(jnp.float32)[:, None, :]      # (B, 1, d_model)

    # batch blocking: 1 block by default (v5e/v6e have a single TensorCore, so a
    # multi-step "parallel" grid is just serialized overhead and halves row fill).
    # num_blocks=2 is available for v7x (2 TCs) -- benchmark before enabling.
    nb = max(1, min(num_blocks, B))
    bb = -(-B // nb)
    B_pad = bb * nb
    if B_pad != B:
        padb = B_pad - B
        x_pad = jnp.concatenate([x_pad, jnp.zeros((padb, S_pad, d_in), x_pad.dtype)], axis=0)
        t_emb = jnp.concatenate([t_emb, jnp.zeros((padb, 1, d_model), t_emb.dtype)], axis=0)

    kernel = functools.partial(_transformer_kernel,
                               n_layers=n_layers, n_head=n_head, d_k=d_k, d_v=d_v,
                               seq_valid=S, matmul_dtype=matmul_dtype)

    def full_spec(a):
        n = a.ndim
        return pl.BlockSpec(a.shape, lambda g, _n=n: (0,) * _n)

    def batch_spec(a):
        n = a.ndim
        return pl.BlockSpec((bb,) + a.shape[1:], lambda g, _n=n: (g,) + (0,) * (_n - 1))

    inputs = [x_pad, t_emb, prep["pos_pad"],
              prep["w_in"], prep["b_in"],
              prep["w_qkv"], prep["b_qkv"], prep["wo"], prep["bo"],
              prep["ln1g"], prep["ln1b"],
              prep["w1"], prep["b1"], prep["w2"], prep["b2"],
              prep["ln2g"], prep["ln2b"],
              prep["wout128"], prep["bout128"]]
    in_specs = [batch_spec(x_pad), batch_spec(t_emb)] + [full_spec(a) for a in inputs[2:]]
    out_spec = pl.BlockSpec((bb, T, out_lanes), lambda g: (g, 0, 0))

    out = pl.pallas_call(
        kernel,
        out_shape=jax.ShapeDtypeStruct((B_pad, T, out_lanes), jnp.float32),
        grid_spec=pltpu.PrefetchScalarGridSpec(
            num_scalar_prefetch=0, grid=(nb,),
            in_specs=in_specs, out_specs=out_spec),
        compiler_params=pltpu.CompilerParams(dimension_semantics=("parallel",)),
    )(*inputs)
    return out[:B, :, :d_feats]


# ----------------------------------------------------------------------------
# Pure-JAX reference (independent batched formulation, unfused weights,
# time token FIRST as in the PyTorch module)
# ----------------------------------------------------------------------------
def transformer_diffusion_forward_ref(params, src, noise_t, condition,
                                      *, d_model, n_layers, n_head, d_k, d_v):
    hi = jax.lax.Precision.HIGHEST
    B, T, _ = src.shape
    x = jnp.concatenate([src, condition], axis=-1)
    S = T + 1
    t_emb = time_mlp(params, noise_t)[:, None, :]
    pos = positional_encoding(jnp.arange(S) + 1, d_model)
    scale = 1.0 / math.sqrt(d_k)

    h = jnp.einsum('btd,df->btf', x, params["w_in"], precision=hi) + params["b_in"]
    h = jnp.concatenate([t_emb, h], axis=1) + pos[None]
    for i in range(n_layers):
        q = (jnp.einsum('bsd,df->bsf', h, params["wq"][i], precision=hi)
             + params["bq"][i]).reshape(B, S, n_head, d_k)
        k = (jnp.einsum('bsd,df->bsf', h, params["wk"][i], precision=hi)
             + params["bk"][i]).reshape(B, S, n_head, d_k)
        v = (jnp.einsum('bsd,df->bsf', h, params["wv"][i], precision=hi)
             + params["bv"][i]).reshape(B, S, n_head, d_v)
        att = jnp.einsum('bqhd,bkhd->bhqk', q, k, precision=hi) * scale
        att = jax.nn.softmax(att, axis=-1)
        o = jnp.einsum('bhqk,bkhd->bqhd', att, v, precision=hi).reshape(B, S, n_head * d_v)
        o = jnp.einsum('bsf,fd->bsd', o, params["wo"][i], precision=hi) + params["bo"][i]
        h = _layer_norm(o + h, params["ln1g"][i], params["ln1b"][i])

        ff = jnp.einsum('bsd,dh->bsh', h, params["w1"][i], precision=hi) + params["b1"][i]
        ff = jnp.maximum(ff, 0.0)
        ff = jnp.einsum('bsh,hd->bsd', ff, params["w2"][i], precision=hi) + params["b2"][i]
        h = _layer_norm(ff + h, params["ln2g"][i], params["ln2b"][i])

    return jnp.einsum('btd,df->btf', h[:, 1:], params["wout"], precision=hi) + params["bout"]


# ----------------------------------------------------------------------------
# Deterministic parameter init (synthetic; shapes follow the module __init__)
# ----------------------------------------------------------------------------
def init_params(key, d_input_feats, d_feats, d_model, n_layers, n_head, d_k, d_v,
                fourier_dim=64, time_dim=256):
    keys = jax.random.split(key, 24)
    it = iter(keys)

    def w(shape, scale=0.05):
        return (scale * jax.random.normal(next(it), shape)).astype(jnp.float32)

    d_hid = 2 * d_model
    return dict(
        wt1=w((fourier_dim, time_dim)), bt1=w((time_dim,)),
        wt2=w((time_dim, d_model)), bt2=w((d_model,)),
        w_in=w((d_input_feats, d_model)), b_in=w((1, d_model)),
        wq=w((n_layers, d_model, n_head * d_k)), bq=w((n_layers, 1, n_head * d_k)),
        wk=w((n_layers, d_model, n_head * d_k)), bk=w((n_layers, 1, n_head * d_k)),
        wv=w((n_layers, d_model, n_head * d_v)), bv=w((n_layers, 1, n_head * d_v)),
        wo=w((n_layers, n_head * d_v, d_model)), bo=w((n_layers, 1, d_model)),
        ln1g=jnp.ones((n_layers, 1, d_model), jnp.float32),
        ln1b=jnp.zeros((n_layers, 1, d_model), jnp.float32),
        w1=w((n_layers, d_model, d_hid)), b1=w((n_layers, 1, d_hid)),
        w2=w((n_layers, d_hid, d_model)), b2=w((n_layers, 1, d_model)),
        ln2g=jnp.ones((n_layers, 1, d_model), jnp.float32),
        ln2b=jnp.zeros((n_layers, 1, d_model), jnp.float32),
        wout=w((d_model, d_feats)), bout=w((1, d_feats)),
    )


if __name__ == "__main__":
    # Small shapes consistent with the module's forward.
    B, T = 2, 8
    d_feats, d_cond = 16, 16
    d_input_feats = d_feats + d_cond
    d_model, n_dec_layers, n_head, d_k, d_v = 32, 2, 4, 8, 8

    root = jax.random.PRNGKey(0)
    k_src, k_cond, k_t, k_param = jax.random.split(root, 4)
    src = jax.random.normal(k_src, (B, T, d_feats), dtype=jnp.float32)
    condition = jax.random.normal(k_cond, (B, T, d_cond), dtype=jnp.float32)
    noise_t = jax.random.randint(k_t, (B,), 0, 1000).astype(jnp.float32)

    params = init_params(k_param, d_input_feats, d_feats, d_model,
                         n_dec_layers, n_head, d_k, d_v)
    prep = prepare_params(params, d_model=d_model, seq_len=T)

    hp = dict(d_model=d_model, n_layers=n_dec_layers, n_head=n_head,
              d_k=d_k, d_v=d_v, d_feats=d_feats)
    fwd_bf16 = jax.jit(functools.partial(transformer_diffusion_forward, **hp,
                                         matmul_dtype=jnp.bfloat16))
    fwd_f32 = jax.jit(functools.partial(transformer_diffusion_forward, **hp,
                                        matmul_dtype=jnp.float32))
    ref_fn = jax.jit(functools.partial(
        transformer_diffusion_forward_ref,
        d_model=d_model, n_layers=n_dec_layers, n_head=n_head, d_k=d_k, d_v=d_v))

    # Production path: bf16 MXU operands, f32 accumulation.
    out = jax.block_until_ready(fwd_bf16(prep, src, noise_t, condition))
    ref = jax.block_until_ready(ref_fn(params, src, noise_t, condition))

    assert out.shape == (B, T, d_feats)
    assert bool(jnp.all(jnp.isfinite(out)))
    err_bf16 = float(jnp.max(jnp.abs(out - ref)))
    assert err_bf16 < 6e-2, f"bf16 max abs err = {err_bf16}"

    # f32 validation path: checks the kernel math independently of bf16 rounding.
    out_f32 = jax.block_until_ready(fwd_f32(prep, src, noise_t, condition))
    err_f32 = float(jnp.max(jnp.abs(out_f32 - ref)))
    assert err_f32 < 5e-3, f"f32 max abs err = {err_f32}"

    print("KERNEL_OK")
</pallas_src>

<mosaic_0001>
module attributes {stable_mosaic.version = 11 : i64} {
  func.func @_transformer_kernel(%arg0: i32, %arg1: memref<2x16x32xf32, #tpu.memory_space<vmem>>, %arg2: memref<2x1x32xf32, #tpu.memory_space<vmem>>, %arg3: memref<16x32xf32, #tpu.memory_space<vmem>>, %arg4: memref<32x32xf32, #tpu.memory_space<vmem>>, %arg5: memref<1x32xf32, #tpu.memory_space<vmem>>, %arg6: memref<2x32x96xf32, #tpu.memory_space<vmem>>, %arg7: memref<2x1x96xf32, #tpu.memory_space<vmem>>, %arg8: memref<2x32x32xf32, #tpu.memory_space<vmem>>, %arg9: memref<2x1x32xf32, #tpu.memory_space<vmem>>, %arg10: memref<2x1x32xf32, #tpu.memory_space<vmem>>, %arg11: memref<2x1x32xf32, #tpu.memory_space<vmem>>, %arg12: memref<2x32x64xf32, #tpu.memory_space<vmem>>, %arg13: memref<2x1x64xf32, #tpu.memory_space<vmem>>, %arg14: memref<2x64x32xf32, #tpu.memory_space<vmem>>, %arg15: memref<2x1x32xf32, #tpu.memory_space<vmem>>, %arg16: memref<2x1x32xf32, #tpu.memory_space<vmem>>, %arg17: memref<2x1x32xf32, #tpu.memory_space<vmem>>, %arg18: memref<32x128xf32, #tpu.memory_space<vmem>>, %arg19: memref<1x128xf32, #tpu.memory_space<vmem>>, %arg20: memref<2x8x128xf32, #tpu.memory_space<vmem>>) attributes {dimension_semantics = [#tpu.dimension_semantics<parallel>], iteration_bounds = array<i64: 1>, scalar_prefetch = 0 : i64, scratch_operands = 0 : i64, tpu.core_type = #tpu.core_type<tc>, window_params = [{transform_indices = @transform_0, window_bounds = array<i64: 2, 16, 32>}, {transform_indices = @transform_1, window_bounds = array<i64: 2, 1, 32>}, {pipeline_mode = #tpu.pipeline_mode<synchronous>, transform_indices = @transform_2, window_bounds = array<i64: 16, 32>}, {pipeline_mode = #tpu.pipeline_mode<synchronous>, transform_indices = @transform_3, window_bounds = array<i64: 32, 32>}, {pipeline_mode = #tpu.pipeline_mode<synchronous>, transform_indices = @transform_4, window_bounds = array<i64: 1, 32>}, {pipeline_mode = #tpu.pipeline_mode<synchronous>, transform_indices = @transform_5, window_bounds = array<i64: 2, 32, 96>}, {pipeline_mode = #tpu.pipeline_mode<synchronous>, transform_indices = @transform_6, window_bounds = array<i64: 2, 1, 96>}, {pipeline_mode = #tpu.pipeline_mode<synchronous>, transform_indices = @transform_7, window_bounds = array<i64: 2, 32, 32>}, {pipeline_mode = #tpu.pipeline_mode<synchronous>, transform_indices = @transform_8, window_bounds = array<i64: 2, 1, 32>}, {pipeline_mode = #tpu.pipeline_mode<synchronous>, transform_indices = @transform_9, window_bounds = array<i64: 2, 1, 32>}, {pipeline_mode = #tpu.pipeline_mode<synchronous>, transform_indices = @transform_10, window_bounds = array<i64: 2, 1, 32>}, {pipeline_mode = #tpu.pipeline_mode<synchronous>, transform_indices = @transform_11, window_bounds = array<i64: 2, 32, 64>}, {pipeline_mode = #tpu.pipeline_mode<synchronous>, transform_indices = @transform_12, window_bounds = array<i64: 2, 1, 64>}, {pipeline_mode = #tpu.pipeline_mode<synchronous>, transform_indices = @transform_13, window_bounds = array<i64: 2, 64, 32>}, {pipeline_mode = #tpu.pipeline_mode<synchronous>, transform_indices = @transform_14, window_bounds = array<i64: 2, 1, 32>}, {pipeline_mode = #tpu.pipeline_mode<synchronous>, transform_indices = @transform_15, window_bounds = array<i64: 2, 1, 32>}, {pipeline_mode = #tpu.pipeline_mode<synchronous>, transform_indices = @transform_16, window_bounds = array<i64: 2, 1, 32>}, {pipeline_mode = #tpu.pipeline_mode<synchronous>, transform_indices = @transform_17, window_bounds = array<i64: 32, 128>}, {pipeline_mode = #tpu.pipeline_mode<synchronous>, transform_indices = @transform_18, window_bounds = array<i64: 1, 128>}, {transform_indices = @transform_19, window_bounds = array<i64: 2, 8, 128>}]} {
    %c0 = arith.constant 0 : index
    %c0_0 = arith.constant 0 : index
    %c0_1 = arith.constant 0 : index
    %0 = vector.load %arg1[%c0, %c0_0, %c0_1] : memref<2x16x32xf32, #tpu.memory_space<vmem>>, vector<2x16x32xf32>
    %1 = vector.shape_cast %0 : vector<2x16x32xf32> to vector<32x32xf32>
    %2 = arith.truncf %1 : vector<32x32xf32> to vector<32x32xbf16>
    %c0_2 = arith.constant 0 : index
    %c0_3 = arith.constant 0 : index
    %3 = vector.load %arg4[%c0_2, %c0_3] : memref<32x32xf32, #tpu.memory_space<vmem>>, vector<32x32xf32>
    %4 = arith.truncf %3 : vector<32x32xf32> to vector<32x32xbf16>
    %cst = arith.constant dense<0.000000e+00> : vector<32x32xf32>
    %5 = tpu.matmul %2, %4, %cst {dimension_numbers = #tpu.dot_dimension_numbers<[1], [0], [0], [1], [0, 0, 1, 1], [], []>} : vector<32x32xbf16>, vector<32x32xbf16>, vector<32x32xf32> -> vector<32x32xf32>
    %c0_4 = arith.constant 0 : index
    %c0_5 = arith.constant 0 : index
    %6 = vector.load %arg5[%c0_4, %c0_5] : memref<1x32xf32, #tpu.memory_space<vmem>>, vector<1x32xf32>
    %7 = vector.broadcast %6 : vector<1x32xf32> to vector<32x32xf32>
    %8 = arith.addf %5, %7 : vector<32x32xf32>
    %9 = vector.shape_cast %8 : vector<32x32xf32> to vector<2x16x32xf32>
    %10 = tpu.iota {dimensions = array<i32: 0>} : vector<16x1xi32>
    %c8_i32 = arith.constant 8 : i32
    %11 = vector.broadcast %c8_i32 : i32 to vector<16x1xi32>
    %12 = arith.cmpi eq, %10, %11 : vector<16x1xi32>
    %13 = arith.extui %12 : vector<16x1xi1> to vector<16x1xi32>
    %14 = arith.sitofp %13 : vector<16x1xi32> to vector<16x1xf32>
    %15 = vector.shape_cast %14 : vector<16x1xf32> to vector<1x16x1xf32>
    %c0_6 = arith.constant 0 : index
    %c0_7 = arith.constant 0 : index
    %c0_8 = arith.constant 0 : index
    %16 = vector.load %arg2[%c0_6, %c0_7, %c0_8] : memref<2x1x32xf32, #tpu.memory_space<vmem>>, vector<2x1x32xf32>
    %c0_9 = arith.constant 0 : index
    %c0_10 = arith.constant 0 : index
    %17 = vector.load %arg5[%c0_9, %c0_10] : memref<1x32xf32, #tpu.memory_space<vmem>>, vector<1x32xf32>
    %18 = vector.shape_cast %17 : vector<1x32xf32> to vector<1x1x32xf32>
    %19 = vector.broadcast %18 : vector<1x1x32xf32> to vector<2x1x32xf32>
    %20 = arith.subf %16, %19 : vector<2x1x32xf32>
    %21 = vector.broadcast %15 : vector<1x16x1xf32> to vector<2x16x32xf32>
    %22 = vector.broadcast %20 : vector<2x1x32xf32> to vector<2x16x32xf32>
    %23 = arith.mulf %21, %22 : vector<2x16x32xf32>
    %24 = arith.addf %9, %23 : vector<2x16x32xf32>
    %c0_11 = arith.constant 0 : index
    %c0_12 = arith.constant 0 : index
    %25 = vector.load %arg3[%c0_11, %c0_12] : memref<16x32xf32, #tpu.memory_space<vmem>>, vector<16x32xf32>
    %26 = vector.shape_cast %25 : vector<16x32xf32> to vector<1x16x32xf32>
    %27 = vector.broadcast %26 : vector<1x16x32xf32> to vector<2x16x32xf32>
    %28 = arith.addf %24, %27 : vector<2x16x32xf32>
    %29 = vector.shape_cast %28 : vector<2x16x32xf32> to vector<32x32xf32>
    %30 = tpu.iota {dimensions = array<i32: 2>} : vector<1x1x16xi32>
    %c9_i32 = arith.constant 9 : i32
    %31 = vector.broadcast %c9_i32 : i32 to vector<1x1x16xi32>
    %32 = arith.cmpi slt, %30, %31 : vector<1x1x16xi32>
    %cst_13 = arith.constant 0.000000e+00 : f32
    %cst_14 = arith.constant -1.000000e+09 : f32
    %33 = vector.broadcast %cst_13 : f32 to vector<1x1x16xf32>
    %34 = vector.broadcast %cst_14 : f32 to vector<1x1x16xf32>
    %35 = arith.select %32, %33, %34 : vector<1x1x16xi1>, vector<1x1x16xf32>
    %36 = arith.truncf %29 : vector<32x32xf32> to vector<32x32xbf16>
    %c0_15 = arith.constant 0 : index
    %c0_16 = arith.constant 0 : index
    %c0_17 = arith.constant 0 : index
    %37 = vector.load %arg6[%c0_15, %c0_16, %c0_17] : memref<2x32x96xf32, #tpu.memory_space<vmem>>, vector<1x32x96xf32>
    %38 = vector.shape_cast %37 : vector<1x32x96xf32> to vector<32x96xf32>
    %39 = arith.truncf %38 : vector<32x96xf32> to vector<32x96xbf16>
    %cst_18 = arith.constant dense<0.000000e+00> : vector<32x96xf32>
    %40 = tpu.matmul %36, %39, %cst_18 {dimension_numbers = #tpu.dot_dimension_numbers<[1], [0], [0], [1], [0, 0, 1, 1], [], []>} : vector<32x32xbf16>, vector<32x96xbf16>, vector<32x96xf32> -> vector<32x96xf32>
    %c0_19 = arith.constant 0 : index
    %c0_20 = arith.constant 0 : index
    %c0_21 = arith.constant 0 : index
    %41 = vector.load %arg7[%c0_19, %c0_20, %c0_21] : memref<2x1x96xf32, #tpu.memory_space<vmem>>, vector<1x1x96xf32>
    %42 = vector.shape_cast %41 : vector<1x1x96xf32> to vector<1x96xf32>
    %43 = vector.broadcast %42 : vector<1x96xf32> to vector<32x96xf32>
    %44 = arith.addf %40, %43 : vector<32x96xf32>
    %45 = vector.shape_cast %44 : vector<32x96xf32> to vector<2x16x96xf32>
    %46 = vector.extract_strided_slice %45 {offsets = [0, 0, 0], sizes = [2, 16, 8], strides = [1, 1, 1]} : vector<2x16x96xf32> to vector<2x16x8xf32>
    %47 = vector.extract_strided_slice %45 {offsets = [0, 0, 8], sizes = [2, 16, 8], strides = [1, 1, 1]} : vector<2x16x96xf32> to vector<2x16x8xf32>
    %48 = vector.extract_strided_slice %45 {offsets = [0, 0, 16], sizes = [2, 16, 8], strides = [1, 1, 1]} : vector<2x16x96xf32> to vector<2x16x8xf32>
    %49 = vector.extract_strided_slice %45 {offsets = [0, 0, 24], sizes = [2, 16, 8], strides = [1, 1, 1]} : vector<2x16x96xf32> to vector<2x16x8xf32>
    %50 = tpu.concatenate %46, %47, %48, %49 in 0 : vector<2x16x8xf32>, vector<2x16x8xf32>, vector<2x16x8xf32>, vector<2x16x8xf32> -> vector<8x16x8xf32>
    %51 = vector.extract_strided_slice %45 {offsets = [0, 0, 32], sizes = [2, 16, 8], strides = [1, 1, 1]} : vector<2x16x96xf32> to vector<2x16x8xf32>
    %52 = vector.extract_strided_slice %45 {offsets = [0, 0, 40], sizes = [2, 16, 8], strides = [1, 1, 1]} : vector<2x16x96xf32> to vector<2x16x8xf32>
    %53 = vector.extract_strided_slice %45 {offsets = [0, 0, 48], sizes = [2, 16, 8], strides = [1, 1, 1]} : vector<2x16x96xf32> to vector<2x16x8xf32>
    %54 = vector.extract_strided_slice %45 {offsets = [0, 0, 56], sizes = [2, 16, 8], strides = [1, 1, 1]} : vector<2x16x96xf32> to vector<2x16x8xf32>
    %55 = tpu.concatenate %51, %52, %53, %54 in 0 : vector<2x16x8xf32>, vector<2x16x8xf32>, vector<2x16x8xf32>, vector<2x16x8xf32> -> vector<8x16x8xf32>
    %56 = vector.extract_strided_slice %45 {offsets = [0, 0, 64], sizes = [2, 16, 8], strides = [1, 1, 1]} : vector<2x16x96xf32> to vector<2x16x8xf32>
    %57 = vector.extract_strided_slice %45 {offsets = [0, 0, 72], sizes = [2, 16, 8], strides = [1, 1, 1]} : vector<2x16x96xf32> to vector<2x16x8xf32>
    %58 = vector.extract_strided_slice %45 {offsets = [0, 0, 80], sizes = [2, 16, 8], strides = [1, 1, 1]} : vector<2x16x96xf32> to vector<2x16x8xf32>
    %59 = vector.extract_strided_slice %45 {offsets = [0, 0, 88], sizes = [2, 16, 8], strides = [1, 1, 1]} : vector<2x16x96xf32> to vector<2x16x8xf32>
    %60 = tpu.concatenate %56, %57, %58, %59 in 0 : vector<2x16x8xf32>, vector<2x16x8xf32>, vector<2x16x8xf32>, vector<2x16x8xf32> -> vector<8x16x8xf32>
    %61 = arith.truncf %50 : vector<8x16x8xf32> to vector<8x16x8xbf16>
    %62 = arith.truncf %55 : vector<8x16x8xf32> to vector<8x16x8xbf16>
    "tpu.trace_start"() <{level = 10 : i32, message = "bqd,bkd->bqk"}> : () -> ()
    %cst_22 = arith.constant dense<0.000000e+00> : vector<8x16x16xf32>
    %63 = tpu.matmul %61, %62, %cst_22 {dimension_numbers = #tpu.dot_dimension_numbers<[2], [2], [1], [1], [0, 0, 0, 1, 1, 1], [0], [0]>} : vector<8x16x8xbf16>, vector<8x16x8xbf16>, vector<8x16x16xf32> -> vector<8x16x16xf32>
    "tpu.trace_stop"() : () -> ()
    %cst_23 = arith.constant 0.353553385 : f32
    %64 = vector.broadcast %cst_23 : f32 to vector<8x16x16xf32>
    %65 = arith.mulf %63, %64 : vector<8x16x16xf32>
    %66 = vector.broadcast %35 : vector<1x1x16xf32> to vector<8x16x16xf32>
    %67 = arith.addf %65, %66 : vector<8x16x16xf32>
    %cst_24 = arith.constant dense<0xFF800000> : vector<8x16xf32>
    %68 = vector.multi_reduction <maximumf>, %67, %cst_24 [2] : vector<8x16x16xf32> to vector<8x16xf32>
    %69 = vector.shape_cast %68 : vector<8x16xf32> to vector<8x16x1xf32>
    %70 = vector.broadcast %69 : vector<8x16x1xf32> to vector<8x16x16xf32>
    %71 = arith.subf %67, %70 : vector<8x16x16xf32>
    %72 = math.exp %71 : vector<8x16x16xf32>
    %cst_25 = arith.constant dense<0.000000e+00> : vector<8x16xf32>
    %73 = vector.multi_reduction <add>, %72, %cst_25 [2] : vector<8x16x16xf32> to vector<8x16xf32>
    %74 = vector.shape_cast %73 : vector<8x16xf32> to vector<8x16x1xf32>
    %75 = tpu.reciprocal %74 {approx = true} : vector<8x16x1xf32> -> vector<8x16x1xf32>
    %76 = vector.broadcast %75 : vector<8x16x1xf32> to vector<8x16x16xf32>
    %77 = arith.mulf %72, %76 : vector<8x16x16xf32>
    %78 = arith.truncf %77 : vector<8x16x16xf32> to vector<8x16x16xbf16>
    %79 = arith.truncf %60 : vector<8x16x8xf32> to vector<8x16x8xbf16>
    "tpu.trace_start"() <{level = 10 : i32, message = "bqk,bkd->bqd"}> : () -> ()
    %cst_26 = arith.constant dense<0.000000e+00> : vector<8x16x8xf32>
    %80 = tpu.matmul %78, %79, %cst_26 {dimension_numbers = #tpu.dot_dimension_numbers<[2], [1], [1], [2], [0, 0, 0, 1, 1, 2], [0], [0]>} : vector<8x16x16xbf16>, vector<8x16x8xbf16>, vector<8x16x8xf32> -> vector<8x16x8xf32>
    "tpu.trace_stop"() : () -> ()
    %81 = vector.extract_strided_slice %80 {offsets = [0, 0, 0], sizes = [2, 16, 8], strides = [1, 1, 1]} : vector<8x16x8xf32> to vector<2x16x8xf32>
    %82 = vector.extract_strided_slice %80 {offsets = [2, 0, 0], sizes = [2, 16, 8], strides = [1, 1, 1]} : vector<8x16x8xf32> to vector<2x16x8xf32>
    %83 = vector.extract_strided_slice %80 {offsets = [4, 0, 0], sizes = [2, 16, 8], strides = [1, 1, 1]} : vector<8x16x8xf32> to vector<2x16x8xf32>
    %84 = vector.extract_strided_slice %80 {offsets = [6, 0, 0], sizes = [2, 16, 8], strides = [1, 1, 1]} : vector<8x16x8xf32> to vector<2x16x8xf32>
    %85 = tpu.concatenate %81, %82, %83, %84 in 2 : vector<2x16x8xf32>, vector<2x16x8xf32>, vector<2x16x8xf32>, vector<2x16x8xf32> -> vector<2x16x32xf32>
    %86 = vector.shape_cast %85 : vector<2x16x32xf32> to vector<32x32xf32>
    %87 = arith.truncf %86 : vector<32x32xf32> to vector<32x32xbf16>
    %c0_27 = arith.constant 0 : index
    %c0_28 = arith.constant 0 : index
    %c0_29 = arith.constant 0 : index
    %88 = vector.load %arg8[%c0_27, %c0_28, %c0_29] : memref<2x32x32xf32, #tpu.memory_space<vmem>>, vector<1x32x32xf32>
    %89 = vector.shape_cast %88 : vector<1x32x32xf32> to vector<32x32xf32>
    %90 = arith.truncf %89 : vector<32x32xf32> to vector<32x32xbf16>
    %cst_30 = arith.constant dense<0.000000e+00> : vector<32x32xf32>
    %91 = tpu.matmul %87, %90, %cst_30 {dimension_numbers = #tpu.dot_dimension_numbers<[1], [0], [0], [1], [0, 0, 1, 1], [], []>} : vector<32x32xbf16>, vector<32x32xbf16>, vector<32x32xf32> -> vector<32x32xf32>
    %c0_31 = arith.constant 0 : index
    %c0_32 = arith.constant 0 : index
    %c0_33 = arith.constant 0 : index
    %92 = vector.load %arg9[%c0_31, %c0_32, %c0_33] : memref<2x1x32xf32, #tpu.memory_space<vmem>>, vector<1x1x32xf32>
    %93 = vector.shape_cast %92 : vector<1x1x32xf32> to vector<1x32xf32>
    %94 = vector.broadcast %93 : vector<1x32xf32> to vector<32x32xf32>
    %95 = arith.addf %91, %94 : vector<32x32xf32>
    %96 = arith.addf %95, %29 : vector<32x32xf32>
    %c0_34 = arith.constant 0 : index
    %c0_35 = arith.constant 0 : index
    %c0_36 = arith.constant 0 : index
    %97 = vector.load %arg10[%c0_34, %c0_35, %c0_36] : memref<2x1x32xf32, #tpu.memory_space<vmem>>, vector<1x1x32xf32>
    %98 = vector.shape_cast %97 : vector<1x1x32xf32> to vector<1x32xf32>
    %c0_37 = arith.constant 0 : index
    %c0_38 = arith.constant 0 : index
    %c0_39 = arith.constant 0 : index
    %99 = vector.load %arg11[%c0_37, %c0_38, %c0_39] : memref<2x1x32xf32, #tpu.memory_space<vmem>>, vector<1x1x32xf32>
    %100 = vector.shape_cast %99 : vector<1x1x32xf32> to vector<1x32xf32>
    %cst_40 = arith.constant dense<0.000000e+00> : vector<32xf32>
    %101 = vector.multi_reduction <add>, %96, %cst_40 [1] : vector<32x32xf32> to vector<32xf32>
    %102 = vector.shape_cast %101 : vector<32xf32> to vector<32x1xf32>
    %cst_41 = arith.constant 3.200000e+01 : f32
    %103 = vector.broadcast %cst_41 : f32 to vector<32x1xf32>
    %104 = arith.divf %102, %103 : vector<32x1xf32>
    %105 = vector.broadcast %104 : vector<32x1xf32> to vector<32x32xf32>
    %106 = arith.subf %96, %105 : vector<32x32xf32>
    %107 = arith.mulf %106, %106 : vector<32x32xf32>
    %cst_42 = arith.constant dense<0.000000e+00> : vector<32xf32>
    %108 = vector.multi_reduction <add>, %107, %cst_42 [1] : vector<32x32xf32> to vector<32xf32>
    %109 = vector.shape_cast %108 : vector<32xf32> to vector<32x1xf32>
    %cst_43 = arith.constant 3.200000e+01 : f32
    %110 = vector.broadcast %cst_43 : f32 to vector<32x1xf32>
    %111 = arith.divf %109, %110 : vector<32x1xf32>
    %112 = vector.broadcast %104 : vector<32x1xf32> to vector<32x32xf32>
    %113 = arith.subf %96, %112 : vector<32x32xf32>
    %cst_44 = arith.constant 9.99999997E-7 : f32
    %114 = vector.broadcast %cst_44 : f32 to vector<32x1xf32>
    %115 = arith.addf %111, %114 : vector<32x1xf32>
    %116 = math.rsqrt %115 : vector<32x1xf32>
    %117 = vector.broadcast %116 : vector<32x1xf32> to vector<32x32xf32>
    %118 = arith.mulf %113, %117 : vector<32x32xf32>
    %119 = vector.broadcast %98 : vector<1x32xf32> to vector<32x32xf32>
    %120 = arith.mulf %118, %119 : vector<32x32xf32>
    %121 = vector.broadcast %100 : vector<1x32xf32> to vector<32x32xf32>
    %122 = arith.addf %120, %121 : vector<32x32xf32>
    %123 = arith.truncf %122 : vector<32x32xf32> to vector<32x32xbf16>
    %c0_45 = arith.constant 0 : index
    %c0_46 = arith.constant 0 : index
    %c0_47 = arith.constant 0 : index
    %124 = vector.load %arg12[%c0_45, %c0_46, %c0_47] : memref<2x32x64xf32, #tpu.memory_space<vmem>>, vector<1x32x64xf32>
    %125 = vector.shape_cast %124 : vector<1x32x64xf32> to vector<32x64xf32>
    %126 = arith.truncf %125 : vector<32x64xf32> to vector<32x64xbf16>
    %cst_48 = arith.constant dense<0.000000e+00> : vector<32x64xf32>
    %127 = tpu.matmul %123, %126, %cst_48 {dimension_numbers = #tpu.dot_dimension_numbers<[1], [0], [0], [1], [0, 0, 1, 1], [], []>} : vector<32x32xbf16>, vector<32x64xbf16>, vector<32x64xf32> -> vector<32x64xf32>
    %c0_49 = arith.constant 0 : index
    %c0_50 = arith.constant 0 : index
    %c0_51 = arith.constant 0 : index
    %128 = vector.load %arg13[%c0_49, %c0_50, %c0_51] : memref<2x1x64xf32, #tpu.memory_space<vmem>>, vector<1x1x64xf32>
    %129 = vector.shape_cast %128 : vector<1x1x64xf32> to vector<1x64xf32>
    %130 = vector.broadcast %129 : vector<1x64xf32> to vector<32x64xf32>
    %131 = arith.addf %127, %130 : vector<32x64xf32>
    %cst_52 = arith.constant 0.000000e+00 : f32
    %132 = vector.broadcast %cst_52 : f32 to vector<32x64xf32>
    %133 = arith.maximumf %131, %132 : vector<32x64xf32>
    %134 = arith.truncf %133 : vector<32x64xf32> to vector<32x64xbf16>
    %c0_53 = arith.constant 0 : index
    %c0_54 = arith.constant 0 : index
    %c0_55 = arith.constant 0 : index
    %135 = vector.load %arg14[%c0_53, %c0_54, %c0_55] : memref<2x64x32xf32, #tpu.memory_space<vmem>>, vector<1x64x32xf32>
    %136 = vector.shape_cast %135 : vector<1x64x32xf32> to vector<64x32xf32>
    %137 = arith.truncf %136 : vector<64x32xf32> to vector<64x32xbf16>
    %cst_56 = arith.constant dense<0.000000e+00> : vector<32x32xf32>
    %138 = tpu.matmul %134, %137, %cst_56 {dimension_numbers = #tpu.dot_dimension_numbers<[1], [0], [0], [1], [0, 0, 1, 1], [], []>} : vector<32x64xbf16>, vector<64x32xbf16>, vector<32x32xf32> -> vector<32x32xf32>
    %c0_57 = arith.constant 0 : index
    %c0_58 = arith.constant 0 : index
    %c0_59 = arith.constant 0 : index
    %139 = vector.load %arg15[%c0_57, %c0_58, %c0_59] : memref<2x1x32xf32, #tpu.memory_space<vmem>>, vector<1x1x32xf32>
    %140 = vector.shape_cast %139 : vector<1x1x32xf32> to vector<1x32xf32>
    %141 = vector.broadcast %140 : vector<1x32xf32> to vector<32x32xf32>
    %142 = arith.addf %138, %141 : vector<32x32xf32>
    %143 = arith.addf %142, %122 : vector<32x32xf32>
    %c0_60 = arith.constant 0 : index
    %c0_61 = arith.constant 0 : index
    %c0_62 = arith.constant 0 : index
    %144 = vector.load %arg16[%c0_60, %c0_61, %c0_62] : memref<2x1x32xf32, #tpu.memory_space<vmem>>, vector<1x1x32xf32>
    %145 = vector.shape_cast %144 : vector<1x1x32xf32> to vector<1x32xf32>
    %c0_63 = arith.constant 0 : index
    %c0_64 = arith.constant 0 : index
    %c0_65 = arith.constant 0 : index
    %146 = vector.load %arg17[%c0_63, %c0_64, %c0_65] : memref<2x1x32xf32, #tpu.memory_space<vmem>>, vector<1x1x32xf32>
    %147 = vector.shape_cast %146 : vector<1x1x32xf32> to vector<1x32xf32>
    %cst_66 = arith.constant dense<0.000000e+00> : vector<32xf32>
    %148 = vector.multi_reduction <add>, %143, %cst_66 [1] : vector<32x32xf32> to vector<32xf32>
    %149 = vector.shape_cast %148 : vector<32xf32> to vector<32x1xf32>
    %cst_67 = arith.constant 3.200000e+01 : f32
    %150 = vector.broadcast %cst_67 : f32 to vector<32x1xf32>
    %151 = arith.divf %149, %150 : vector<32x1xf32>
    %152 = vector.broadcast %151 : vector<32x1xf32> to vector<32x32xf32>
    %153 = arith.subf %143, %152 : vector<32x32xf32>
    %154 = arith.mulf %153, %153 : vector<32x32xf32>
    %cst_68 = arith.constant dense<0.000000e+00> : vector<32xf32>
    %155 = vector.multi_reduction <add>, %154, %cst_68 [1] : vector<32x32xf32> to vector<32xf32>
    %156 = vector.shape_cast %155 : vector<32xf32> to vector<32x1xf32>
    %cst_69 = arith.constant 3.200000e+01 : f32
    %157 = vector.broadcast %cst_69 : f32 to vector<32x1xf32>
    %158 = arith.divf %156, %157 : vector<32x1xf32>
    %159 = vector.broadcast %151 : vector<32x1xf32> to vector<32x32xf32>
    %160 = arith.subf %143, %159 : vector<32x32xf32>
    %cst_70 = arith.constant 9.99999997E-7 : f32
    %161 = vector.broadcast %cst_70 : f32 to vector<32x1xf32>
    %162 = arith.addf %158, %161 : vector<32x1xf32>
    %163 = math.rsqrt %162 : vector<32x1xf32>
    %164 = vector.broadcast %163 : vector<32x1xf32> to vector<32x32xf32>
    %165 = arith.mulf %160, %164 : vector<32x32xf32>
    %166 = vector.broadcast %145 : vector<1x32xf32> to vector<32x32xf32>
    %167 = arith.mulf %165, %166 : vector<32x32xf32>
    %168 = vector.broadcast %147 : vector<1x32xf32> to vector<32x32xf32>
    %169 = arith.addf %167, %168 : vector<32x32xf32>
    %170 = arith.truncf %169 : vector<32x32xf32> to vector<32x32xbf16>
    %c1 = arith.constant 1 : index
    %c0_71 = arith.constant 0 : index
    %c0_72 = arith.constant 0 : index
    %171 = vector.load %arg6[%c1, %c0_71, %c0_72] : memref<2x32x96xf32, #tpu.memory_space<vmem>>, vector<1x32x96xf32>
    %172 = vector.shape_cast %171 : vector<1x32x96xf32> to vector<32x96xf32>
    %173 = arith.truncf %172 : vector<32x96xf32> to vector<32x96xbf16>
    %cst_73 = arith.constant dense<0.000000e+00> : vector<32x96xf32>
    %174 = tpu.matmul %170, %173, %cst_73 {dimension_numbers = #tpu.dot_dimension_numbers<[1], [0], [0], [1], [0, 0, 1, 1], [], []>} : vector<32x32xbf16>, vector<32x96xbf16>, vector<32x96xf32> -> vector<32x96xf32>
    %c1_74 = arith.constant 1 : index
    %c0_75 = arith.constant 0 : index
    %c0_76 = arith.constant 0 : index
    %175 = vector.load %arg7[%c1_74, %c0_75, %c0_76] : memref<2x1x96xf32, #tpu.memory_space<vmem>>, vector<1x1x96xf32>
    %176 = vector.shape_cast %175 : vector<1x1x96xf32> to vector<1x96xf32>
    %177 = vector.broadcast %176 : vector<1x96xf32> to vector<32x96xf32>
    %178 = arith.addf %174, %177 : vector<32x96xf32>
    %179 = vector.shape_cast %178 : vector<32x96xf32> to vector<2x16x96xf32>
    %180 = vector.extract_strided_slice %179 {offsets = [0, 0, 0], sizes = [2, 16, 8], strides = [1, 1, 1]} : vector<2x16x96xf32> to vector<2x16x8xf32>
    %181 = vector.extract_strided_slice %179 {offsets = [0, 0, 8], sizes = [2, 16, 8], strides = [1, 1, 1]} : vector<2x16x96xf32> to vector<2x16x8xf32>
    %182 = vector.extract_strided_slice %179 {offsets = [0, 0, 16], sizes = [2, 16, 8], strides = [1, 1, 1]} : vector<2x16x96xf32> to vector<2x16x8xf32>
    %183 = vector.extract_strided_slice %179 {offsets = [0, 0, 24], sizes = [2, 16, 8], strides = [1, 1, 1]} : vector<2x16x96xf32> to vector<2x16x8xf32>
    %184 = tpu.concatenate %180, %181, %182, %183 in 0 : vector<2x16x8xf32>, vector<2x16x8xf32>, vector<2x16x8xf32>, vector<2x16x8xf32> -> vector<8x16x8xf32>
    %185 = vector.extract_strided_slice %179 {offsets = [0, 0, 32], sizes = [2, 16, 8], strides = [1, 1, 1]} : vector<2x16x96xf32> to vector<2x16x8xf32>
    %186 = vector.extract_strided_slice %179 {offsets = [0, 0, 40], sizes = [2, 16, 8], strides = [1, 1, 1]} : vector<2x16x96xf32> to vector<2x16x8xf32>
    %187 = vector.extract_strided_slice %179 {offsets = [0, 0, 48], sizes = [2, 16, 8], strides = [1, 1, 1]} : vector<2x16x96xf32> to vector<2x16x8xf32>
    %188 = vector.extract_strided_slice %179 {offsets = [0, 0, 56], sizes = [2, 16, 8], strides = [1, 1, 1]} : vector<2x16x96xf32> to vector<2x16x8xf32>
    %189 = tpu.concatenate %185, %186, %187, %188 in 0 : vector<2x16x8xf32>, vector<2x16x8xf32>, vector<2x16x8xf32>, vector<2x16x8xf32> -> vector<8x16x8xf32>
    %190 = vector.extract_strided_slice %179 {offsets = [0, 0, 64], sizes = [2, 16, 8], strides = [1, 1, 1]} : vector<2x16x96xf32> to vector<2x16x8xf32>
    %191 = vector.extract_strided_slice %179 {offsets = [0, 0, 72], sizes = [2, 16, 8], strides = [1, 1, 1]} : vector<2x16x96xf32> to vector<2x16x8xf32>
    %192 = vector.extract_strided_slice %179 {offsets = [0, 0, 80], sizes = [2, 16, 8], strides = [1, 1, 1]} : vector<2x16x96xf32> to vector<2x16x8xf32>
    %193 = vector.extract_strided_slice %179 {offsets = [0, 0, 88], sizes = [2, 16, 8], strides = [1, 1, 1]} : vector<2x16x96xf32> to vector<2x16x8xf32>
    %194 = tpu.concatenate %190, %191, %192, %193 in 0 : vector<2x16x8xf32>, vector<2x16x8xf32>, vector<2x16x8xf32>, vector<2x16x8xf32> -> vector<8x16x8xf32>
    %195 = arith.truncf %184 : vector<8x16x8xf32> to vector<8x16x8xbf16>
    %196 = arith.truncf %189 : vector<8x16x8xf32> to vector<8x16x8xbf16>
    "tpu.trace_start"() <{level = 10 : i32, message = "bqd,bkd->bqk"}> : () -> ()
    %cst_77 = arith.constant dense<0.000000e+00> : vector<8x16x16xf32>
    %197 = tpu.matmul %195, %196, %cst_77 {dimension_numbers = #tpu.dot_dimension_numbers<[2], [2], [1], [1], [0, 0, 0, 1, 1, 1], [0], [0]>} : vector<8x16x8xbf16>, vector<8x16x8xbf16>, vector<8x16x16xf32> -> vector<8x16x16xf32>
    "tpu.trace_stop"() : () -> ()
    %cst_78 = arith.constant 0.353553385 : f32
    %198 = vector.broadcast %cst_78 : f32 to vector<8x16x16xf32>
    %199 = arith.mulf %197, %198 : vector<8x16x16xf32>
    %200 = vector.broadcast %35 : vector<1x1x16xf32> to vector<8x16x16xf32>
    %201 = arith.addf %199, %200 : vector<8x16x16xf32>
    %cst_79 = arith.constant dense<0xFF800000> : vector<8x16xf32>
    %202 = vector.multi_reduction <maximumf>, %201, %cst_79 [2] : vector<8x16x16xf32> to vector<8x16xf32>
    %203 = vector.shape_cast %202 : vector<8x16xf32> to vector<8x16x1xf32>
    %204 = vector.broadcast %203 : vector<8x16x1xf32> to vector<8x16x16xf32>
    %205 = arith.subf %201, %204 : vector<8x16x16xf32>
    %206 = math.exp %205 : vector<8x16x16xf32>
    %cst_80 = arith.constant dense<0.000000e+00> : vector<8x16xf32>
    %207 = vector.multi_reduction <add>, %206, %cst_80 [2] : vector<8x16x16xf32> to vector<8x16xf32>
    %208 = vector.shape_cast %207 : vector<8x16xf32> to vector<8x16x1xf32>
    %209 = tpu.reciprocal %208 {approx = true} : vector<8x16x1xf32> -> vector<8x16x1xf32>
    %210 = vector.broadcast %209 : vector<8x16x1xf32> to vector<8x16x16xf32>
    %211 = arith.mulf %206, %210 : vector<8x16x16xf32>
    %212 = arith.truncf %211 : vector<8x16x16xf32> to vector<8x16x16xbf16>
    %213 = arith.truncf %194 : vector<8x16x8xf32> to vector<8x16x8xbf16>
    "tpu.trace_start"() <{level = 10 : i32, message = "bqk,bkd->bqd"}> : () -> ()
    %cst_81 = arith.constant dense<0.000000e+00> : vector<8x16x8xf32>
    %214 = tpu.matmul %212, %213, %cst_81 {dimension_numbers = #tpu.dot_dimension_numbers<[2], [1], [1], [2], [0, 0, 0, 1, 1, 2], [0], [0]>} : vector<8x16x16xbf16>, vector<8x16x8xbf16>, vector<8x16x8xf32> -> vector<8x16x8xf32>
    "tpu.trace_stop"() : () -> ()
    %215 = vector.extract_strided_slice %214 {offsets = [0, 0, 0], sizes = [2, 16, 8], strides = [1, 1, 1]} : vector<8x16x8xf32> to vector<2x16x8xf32>
    %216 = vector.extract_strided_slice %214 {offsets = [2, 0, 0], sizes = [2, 16, 8], strides = [1, 1, 1]} : vector<8x16x8xf32> to vector<2x16x8xf32>
    %217 = vector.extract_strided_slice %214 {offsets = [4, 0, 0], sizes = [2, 16, 8], strides = [1, 1, 1]} : vector<8x16x8xf32> to vector<2x16x8xf32>
    %218 = vector.extract_strided_slice %214 {offsets = [6, 0, 0], sizes = [2, 16, 8], strides = [1, 1, 1]} : vector<8x16x8xf32> to vector<2x16x8xf32>
    %219 = tpu.concatenate %215, %216, %217, %218 in 2 : vector<2x16x8xf32>, vector<2x16x8xf32>, vector<2x16x8xf32>, vector<2x16x8xf32> -> vector<2x16x32xf32>
    %220 = vector.shape_cast %219 : vector<2x16x32xf32> to vector<32x32xf32>
    %221 = arith.truncf %220 : vector<32x32xf32> to vector<32x32xbf16>
    %c1_82 = arith.constant 1 : index
    %c0_83 = arith.constant 0 : index
    %c0_84 = arith.constant 0 : index
    %222 = vector.load %arg8[%c1_82, %c0_83, %c0_84] : memref<2x32x32xf32, #tpu.memory_space<vmem>>, vector<1x32x32xf32>
    %223 = vector.shape_cast %222 : vector<1x32x32xf32> to vector<32x32xf32>
    %224 = arith.truncf %223 : vector<32x32xf32> to vector<32x32xbf16>
    %cst_85 = arith.constant dense<0.000000e+00> : vector<32x32xf32>
    %225 = tpu.matmul %221, %224, %cst_85 {dimension_numbers = #tpu.dot_dimension_numbers<[1], [0], [0], [1], [0, 0, 1, 1], [], []>} : vector<32x32xbf16>, vector<32x32xbf16>, vector<32x32xf32> -> vector<32x32xf32>
    %c1_86 = arith.constant 1 : index
    %c0_87 = arith.constant 0 : index
    %c0_88 = arith.constant 0 : index
    %226 = vector.load %arg9[%c1_86, %c0_87, %c0_88] : memref<2x1x32xf32, #tpu.memory_space<vmem>>, vector<1x1x32xf32>
    %227 = vector.shape_cast %226 : vector<1x1x32xf32> to vector<1x32xf32>
    %228 = vector.broadcast %227 : vector<1x32xf32> to vector<32x32xf32>
    %229 = arith.addf %225, %228 : vector<32x32xf32>
    %230 = arith.addf %229, %169 : vector<32x32xf32>
    %c1_89 = arith.constant 1 : index
    %c0_90 = arith.constant 0 : index
    %c0_91 = arith.constant 0 : index
    %231 = vector.load %arg10[%c1_89, %c0_90, %c0_91] : memref<2x1x32xf32, #tpu.memory_space<vmem>>, vector<1x1x32xf32>
    %232 = vector.shape_cast %231 : vector<1x1x32xf32> to vector<1x32xf32>
    %c1_92 = arith.constant 1 : index
    %c0_93 = arith.constant 0 : index
    %c0_94 = arith.constant 0 : index
    %233 = vector.load %arg11[%c1_92, %c0_93, %c0_94] : memref<2x1x32xf32, #tpu.memory_space<vmem>>, vector<1x1x32xf32>
    %234 = vector.shape_cast %233 : vector<1x1x32xf32> to vector<1x32xf32>
    %cst_95 = arith.constant dense<0.000000e+00> : vector<32xf32>
    %235 = vector.multi_reduction <add>, %230, %cst_95 [1] : vector<32x32xf32> to vector<32xf32>
    %236 = vector.shape_cast %235 : vector<32xf32> to vector<32x1xf32>
    %cst_96 = arith.constant 3.200000e+01 : f32
    %237 = vector.broadcast %cst_96 : f32 to vector<32x1xf32>
    %238 = arith.divf %236, %237 : vector<32x1xf32>
    %239 = vector.broadcast %238 : vector<32x1xf32> to vector<32x32xf32>
    %240 = arith.subf %230, %239 : vector<32x32xf32>
    %241 = arith.mulf %240, %240 : vector<32x32xf32>
    %cst_97 = arith.constant dense<0.000000e+00> : vector<32xf32>
    %242 = vector.multi_reduction <add>, %241, %cst_97 [1] : vector<32x32xf32> to vector<32xf32>
    %243 = vector.shape_cast %242 : vector<32xf32> to vector<32x1xf32>
    %cst_98 = arith.constant 3.200000e+01 : f32
    %244 = vector.broadcast %cst_98 : f32 to vector<32x1xf32>
    %245 = arith.divf %243, %244 : vector<32x1xf32>
    %246 = vector.broadcast %238 : vector<32x1xf32> to vector<32x32xf32>
    %247 = arith.subf %230, %246 : vector<32x32xf32>
    %cst_99 = arith.constant 9.99999997E-7 : f32
    %248 = vector.broadcast %cst_99 : f32 to vector<32x1xf32>
    %249 = arith.addf %245, %248 : vector<32x1xf32>
    %250 = math.rsqrt %249 : vector<32x1xf32>
    %251 = vector.broadcast %250 : vector<32x1xf32> to vector<32x32xf32>
    %252 = arith.mulf %247, %251 : vector<32x32xf32>
    %253 = vector.broadcast %232 : vector<1x32xf32> to vector<32x32xf32>
    %254 = arith.mulf %252, %253 : vector<32x32xf32>
    %255 = vector.broadcast %234 : vector<1x32xf32> to vector<32x32xf32>
    %256 = arith.addf %254, %255 : vector<32x32xf32>
    %257 = arith.truncf %256 : vector<32x32xf32> to vector<32x32xbf16>
    %c1_100 = arith.constant 1 : index
    %c0_101 = arith.constant 0 : index
    %c0_102 = arith.constant 0 : index
    %258 = vector.load %arg12[%c1_100, %c0_101, %c0_102] : memref<2x32x64xf32, #tpu.memory_space<vmem>>, vector<1x32x64xf32>
    %259 = vector.shape_cast %258 : vector<1x32x64xf32> to vector<32x64xf32>
    %260 = arith.truncf %259 : vector<32x64xf32> to vector<32x64xbf16>
    %cst_103 = arith.constant dense<0.000000e+00> : vector<32x64xf32>
    %261 = tpu.matmul %257, %260, %cst_103 {dimension_numbers = #tpu.dot_dimension_numbers<[1], [0], [0], [1], [0, 0, 1, 1], [], []>} : vector<32x32xbf16>, vector<32x64xbf16>, vector<32x64xf32> -> vector<32x64xf32>
    %c1_104 = arith.constant 1 : index
    %c0_105 = arith.constant 0 : index
    %c0_106 = arith.constant 0 : index
    %262 = vector.load %arg13[%c1_104, %c0_105, %c0_106] : memref<2x1x64xf32, #tpu.memory_space<vmem>>, vector<1x1x64xf32>
    %263 = vector.shape_cast %262 : vector<1x1x64xf32> to vector<1x64xf32>
    %264 = vector.broadcast %263 : vector<1x64xf32> to vector<32x64xf32>
    %265 = arith.addf %261, %264 : vector<32x64xf32>
    %cst_107 = arith.constant 0.000000e+00 : f32
    %266 = vector.broadcast %cst_107 : f32 to vector<32x64xf32>
    %267 = arith.maximumf %265, %266 : vector<32x64xf32>
    %268 = arith.truncf %267 : vector<32x64xf32> to vector<32x64xbf16>
    %c1_108 = arith.constant 1 : index
    %c0_109 = arith.constant 0 : index
    %c0_110 = arith.constant 0 : index
    %269 = vector.load %arg14[%c1_108, %c0_109, %c0_110] : memref<2x64x32xf32, #tpu.memory_space<vmem>>, vector<1x64x32xf32>
    %270 = vector.shape_cast %269 : vector<1x64x32xf32> to vector<64x32xf32>
    %271 = arith.truncf %270 : vector<64x32xf32> to vector<64x32xbf16>
    %cst_111 = arith.constant dense<0.000000e+00> : vector<32x32xf32>
    %272 = tpu.matmul %268, %271, %cst_111 {dimension_numbers = #tpu.dot_dimension_numbers<[1], [0], [0], [1], [0, 0, 1, 1], [], []>} : vector<32x64xbf16>, vector<64x32xbf16>, vector<32x32xf32> -> vector<32x32xf32>
    %c1_112 = arith.constant 1 : index
    %c0_113 = arith.constant 0 : index
    %c0_114 = arith.constant 0 : index
    %273 = vector.load %arg15[%c1_112, %c0_113, %c0_114] : memref<2x1x32xf32, #tpu.memory_space<vmem>>, vector<1x1x32xf32>
    %274 = vector.shape_cast %273 : vector<1x1x32xf32> to vector<1x32xf32>
    %275 = vector.broadcast %274 : vector<1x32xf32> to vector<32x32xf32>
    %276 = arith.addf %272, %275 : vector<32x32xf32>
    %277 = arith.addf %276, %256 : vector<32x32xf32>
    %c1_115 = arith.constant 1 : index
    %c0_116 = arith.constant 0 : index
    %c0_117 = arith.constant 0 : index
    %278 = vector.load %arg16[%c1_115, %c0_116, %c0_117] : memref<2x1x32xf32, #tpu.memory_space<vmem>>, vector<1x1x32xf32>
    %279 = vector.shape_cast %278 : vector<1x1x32xf32> to vector<1x32xf32>
    %c1_118 = arith.constant 1 : index
    %c0_119 = arith.constant 0 : index
    %c0_120 = arith.constant 0 : index
    %280 = vector.load %arg17[%c1_118, %c0_119, %c0_120] : memref<2x1x32xf32, #tpu.memory_space<vmem>>, vector<1x1x32xf32>
    %281 = vector.shape_cast %280 : vector<1x1x32xf32> to vector<1x32xf32>
    %cst_121 = arith.constant dense<0.000000e+00> : vector<32xf32>
    %282 = vector.multi_reduction <add>, %277, %cst_121 [1] : vector<32x32xf32> to vector<32xf32>
    %283 = vector.shape_cast %282 : vector<32xf32> to vector<32x1xf32>
    %cst_122 = arith.constant 3.200000e+01 : f32
    %284 = vector.broadcast %cst_122 : f32 to vector<32x1xf32>
    %285 = arith.divf %283, %284 : vector<32x1xf32>
    %286 = vector.broadcast %285 : vector<32x1xf32> to vector<32x32xf32>
    %287 = arith.subf %277, %286 : vector<32x32xf32>
    %288 = arith.mulf %287, %287 : vector<32x32xf32>
    %cst_123 = arith.constant dense<0.000000e+00> : vector<32xf32>
    %289 = vector.multi_reduction <add>, %288, %cst_123 [1] : vector<32x32xf32> to vector<32xf32>
    %290 = vector.shape_cast %289 : vector<32xf32> to vector<32x1xf32>
    %cst_124 = arith.constant 3.200000e+01 : f32
    %291 = vector.broadcast %cst_124 : f32 to vector<32x1xf32>
    %292 = arith.divf %290, %291 : vector<32x1xf32>
    %293 = vector.broadcast %285 : vector<32x1xf32> to vector<32x32xf32>
    %294 = arith.subf %277, %293 : vector<32x32xf32>
    %cst_125 = arith.constant 9.99999997E-7 : f32
    %295 = vector.broadcast %cst_125 : f32 to vector<32x1xf32>
    %296 = arith.addf %292, %295 : vector<32x1xf32>
    %297 = math.rsqrt %296 : vector<32x1xf32>
    %298 = vector.broadcast %297 : vector<32x1xf32> to vector<32x32xf32>
    %299 = arith.mulf %294, %298 : vector<32x32xf32>
    %300 = vector.broadcast %279 : vector<1x32xf32> to vector<32x32xf32>
    %301 = arith.mulf %299, %300 : vector<32x32xf32>
    %302 = vector.broadcast %281 : vector<1x32xf32> to vector<32x32xf32>
    %303 = arith.addf %301, %302 : vector<32x32xf32>
    %304 = arith.truncf %303 : vector<32x32xf32> to vector<32x32xbf16>
    %c0_126 = arith.constant 0 : index
    %c0_127 = arith.constant 0 : index
    %305 = vector.load %arg18[%c0_126, %c0_127] : memref<32x128xf32, #tpu.memory_space<vmem>>, vector<32x128xf32>
    %306 = arith.truncf %305 : vector<32x128xf32> to vector<32x128xbf16>
    %cst_128 = arith.constant dense<0.000000e+00> : vector<32x128xf32>
    %307 = tpu.matmul %304, %306, %cst_128 {dimension_numbers = #tpu.dot_dimension_numbers<[1], [0], [0], [1], [0, 0, 1, 1], [], []>} : vector<32x32xbf16>, vector<32x128xbf16>, vector<32x128xf32> -> vector<32x128xf32>
    %c0_129 = arith.constant 0 : index
    %c0_130 = arith.constant 0 : index
    %308 = vector.load %arg19[%c0_129, %c0_130] : memref<1x128xf32, #tpu.memory_space<vmem>>, vector<1x128xf32>
    %309 = vector.broadcast %308 : vector<1x128xf32> to vector<32x128xf32>
    %310 = arith.addf %307, %309 : vector<32x128xf32>
    %311 = vector.shape_cast %310 : vector<32x128xf32> to vector<2x16x128xf32>
    %312 = vector.extract_strided_slice %311 {offsets = [0, 0, 0], sizes = [2, 8, 128], strides = [1, 1, 1]} : vector<2x16x128xf32> to vector<2x8x128xf32>
    %c0_131 = arith.constant 0 : index
    %c0_132 = arith.constant 0 : index
    %c0_133 = arith.constant 0 : index
    %313 = vector.load %arg20[%c0_131, %c0_132, %c0_133] : memref<2x8x128xf32, #tpu.memory_space<vmem>>, vector<2x8x128xf32>
    tpu.vector_store %arg20[%c0_131, %c0_132, %c0_133], %312 {strides = array<i32>} : memref<2x8x128xf32, #tpu.memory_space<vmem>>, vector<2x8x128xf32>,
    return
  }
  func.func @transform_0(%arg0: i32) -> (i32, i32, i32) {
    %c0_i32 = arith.constant 0 : i32
    %c0_i32_0 = arith.constant 0 : i32
    %c0_i32_1 = arith.constant 0 : i32
    return %arg0, %c0_i32, %c0_i32_0 : i32, i32, i32
  }
  func.func @transform_1(%arg0: i32) -> (i32, i32, i32) {
    %c0_i32 = arith.constant 0 : i32
    %c0_i32_0 = arith.constant 0 : i32
    %c0_i32_1 = arith.constant 0 : i32
    return %arg0, %c0_i32, %c0_i32_0 : i32, i32, i32
  }
  func.func @transform_2(%arg0: i32) -> (i32, i32) {
    %c0_i32 = arith.constant 0 : i32
    %c0_i32_0 = arith.constant 0 : i32
    %c0_i32_1 = arith.constant 0 : i32
    return %c0_i32, %c0_i32_0 : i32, i32
  }
  func.func @transform_3(%arg0: i32) -> (i32, i32) {
    %c0_i32 = arith.constant 0 : i32
    %c0_i32_0 = arith.constant 0 : i32
    %c0_i32_1 = arith.constant 0 : i32
    return %c0_i32, %c0_i32_0 : i32, i32
  }
  func.func @transform_4(%arg0: i32) -> (i32, i32) {
    %c0_i32 = arith.constant 0 : i32
    %c0_i32_0 = arith.constant 0 : i32
    %c0_i32_1 = arith.constant 0 : i32
    return %c0_i32, %c0_i32_0 : i32, i32
  }
  func.func @transform_5(%arg0: i32) -> (i32, i32, i32) {
    %c0_i32 = arith.constant 0 : i32
    %c0_i32_0 = arith.constant 0 : i32
    %c0_i32_1 = arith.constant 0 : i32
    %c0_i32_2 = arith.constant 0 : i32
    return %c0_i32, %c0_i32_0, %c0_i32_1 : i32, i32, i32
  }
  func.func @transform_6(%arg0: i32) -> (i32, i32, i32) {
    %c0_i32 = arith.constant 0 : i32
    %c0_i32_0 = arith.constant 0 : i32
    %c0_i32_1 = arith.constant 0 : i32
    %c0_i32_2 = arith.constant 0 : i32
    return %c0_i32, %c0_i32_0, %c0_i32_1 : i32, i32, i32
  }
  func.func @transform_7(%arg0: i32) -> (i32, i32, i32) {
    %c0_i32 = arith.constant 0 : i32
    %c0_i32_0 = arith.constant 0 : i32
    %c0_i32_1 = arith.constant 0 : i32
    %c0_i32_2 = arith.constant 0 : i32
    return %c0_i32, %c0_i32_0, %c0_i32_1 : i32, i32, i32
  }
  func.func @transform_8(%arg0: i32) -> (i32, i32, i32) {
    %c0_i32 = arith.constant 0 : i32
    %c0_i32_0 = arith.constant 0 : i32
    %c0_i32_1 = arith.constant 0 : i32
    %c0_i32_2 = arith.constant 0 : i32
    return %c0_i32, %c0_i32_0, %c0_i32_1 : i32, i32, i32
  }
  func.func @transform_9(%arg0: i32) -> (i32, i32, i32) {
    %c0_i32 = arith.constant 0 : i32
    %c0_i32_0 = arith.constant 0 : i32
    %c0_i32_1 = arith.constant 0 : i32
    %c0_i32_2 = arith.constant 0 : i32
    return %c0_i32, %c0_i32_0, %c0_i32_1 : i32, i32, i32
  }
  func.func @transform_10(%arg0: i32) -> (i32, i32, i32) {
    %c0_i32 = arith.constant 0 : i32
    %c0_i32_0 = arith.constant 0 : i32
    %c0_i32_1 = arith.constant 0 : i32
    %c0_i32_2 = arith.constant 0 : i32
    return %c0_i32, %c0_i32_0, %c0_i32_1 : i32, i32, i32
  }
  func.func @transform_11(%arg0: i32) -> (i32, i32, i32) {
    %c0_i32 = arith.constant 0 : i32
    %c0_i32_0 = arith.constant 0 : i32
    %c0_i32_1 = arith.constant 0 : i32
    %c0_i32_2 = arith.constant 0 : i32
    return %c0_i32, %c0_i32_0, %c0_i32_1 : i32, i32, i32
  }
  func.func @transform_12(%arg0: i32) -> (i32, i32, i32) {
    %c0_i32 = arith.constant 0 : i32
    %c0_i32_0 = arith.constant 0 : i32
    %c0_i32_1 = arith.constant 0 : i32
    %c0_i32_2 = arith.constant 0 : i32
    return %c0_i32, %c0_i32_0, %c0_i32_1 : i32, i32, i32
  }
  func.func @transform_13(%arg0: i32) -> (i32, i32, i32) {
    %c0_i32 = arith.constant 0 : i32
    %c0_i32_0 = arith.constant 0 : i32
    %c0_i32_1 = arith.constant 0 : i32
    %c0_i32_2 = arith.constant 0 : i32
    return %c0_i32, %c0_i32_0, %c0_i32_1 : i32, i32, i32
  }
  func.func @transform_14(%arg0: i32) -> (i32, i32, i32) {
    %c0_i32 = arith.constant 0 : i32
    %c0_i32_0 = arith.constant 0 : i32
    %c0_i32_1 = arith.constant 0 : i32
    %c0_i32_2 = arith.constant 0 : i32
    return %c0_i32, %c0_i32_0, %c0_i32_1 : i32, i32, i32
  }
  func.func @transform_15(%arg0: i32) -> (i32, i32, i32) {
    %c0_i32 = arith.constant 0 : i32
    %c0_i32_0 = arith.constant 0 : i32
    %c0_i32_1 = arith.constant 0 : i32
    %c0_i32_2 = arith.constant 0 : i32
    return %c0_i32, %c0_i32_0, %c0_i32_1 : i32, i32, i32
  }
  func.func @transform_16(%arg0: i32) -> (i32, i32, i32) {
    %c0_i32 = arith.constant 0 : i32
    %c0_i32_0 = arith.constant 0 : i32
    %c0_i32_1 = arith.constant 0 : i32
    %c0_i32_2 = arith.constant 0 : i32
    return %c0_i32, %c0_i32_0, %c0_i32_1 : i32, i32, i32
  }
  func.func @transform_17(%arg0: i32) -> (i32, i32) {
    %c0_i32 = arith.constant 0 : i32
    %c0_i32_0 = arith.constant 0 : i32
    %c0_i32_1 = arith.constant 0 : i32
    return %c0_i32, %c0_i32_0 : i32, i32
  }
  func.func @transform_18(%arg0: i32) -> (i32, i32) {
    %c0_i32 = arith.constant 0 : i32
    %c0_i32_0 = arith.constant 0 : i32
    %c0_i32_1 = arith.constant 0 : i32
    return %c0_i32, %c0_i32_0 : i32, i32
  }
  func.func @transform_19(%arg0: i32) -> (i32, i32, i32) {
    %c0_i32 = arith.constant 0 : i32
    %c0_i32_0 = arith.constant 0 : i32
    %c0_i32_1 = arith.constant 0 : i32
    return %arg0, %c0_i32, %c0_i32_0 : i32, i32, i32
  }
}

</mosaic_0001>

<llo_original>
// kernel: transformer_diffusion_forward.1
$region0: #{transformer_diffusion_forward.1}
  #allocation0 [shape = 'u32[]', space=smem, size = 0x4, offset = 0x4, fixed_abs, tag = 'smem constant byte address 0x4 - core index']
  #allocation1 [shape = 'u32[144,128]{1,0:T(1,128)}', space=vmem, size = 0x12000, scoped, tag = 'internal scratch']
  %s0 = inlined_call_operand.vmem [shape: f32[2,16,32], index: 0, kind: input, shape index: {}]
  %s1 = inlined_call_operand.vmem [shape: f32[2,1,32], index: 1, kind: input, shape index: {}]
  %s2 = inlined_call_operand.vmem [shape: f32[16,32], index: 2, kind: input, shape index: {}]
  %s3 = inlined_call_operand.vmem [shape: f32[32,32], index: 3, kind: input, shape index: {}]
  %s4 = inlined_call_operand.vmem [shape: f32[1,32], index: 4, kind: input, shape index: {}]
  %s5 = inlined_call_operand.vmem [shape: f32[2,32,96], index: 5, kind: input, shape index: {}]
  %s6 = inlined_call_operand.vmem [shape: f32[2,1,96], index: 6, kind: input, shape index: {}]
  %s7 = inlined_call_operand.vmem [shape: f32[2,32,32], index: 7, kind: input, shape index: {}]
  %s8 = inlined_call_operand.vmem [shape: f32[2,1,32], index: 8, kind: input, shape index: {}]
  %s9 = inlined_call_operand.vmem [shape: f32[2,1,32], index: 9, kind: input, shape index: {}]
  %s10 = inlined_call_operand.vmem [shape: f32[2,1,32], index: 10, kind: input, shape index: {}]
  %s11 = inlined_call_operand.vmem [shape: f32[2,32,64], index: 11, kind: input, shape index: {}]
  %s12 = inlined_call_operand.vmem [shape: f32[2,1,64], index: 12, kind: input, shape index: {}]
  %s13 = inlined_call_operand.vmem [shape: f32[2,64,32], index: 13, kind: input, shape index: {}]
  %s14 = inlined_call_operand.vmem [shape: f32[2,1,32], index: 14, kind: input, shape index: {}]
  %s15 = inlined_call_operand.vmem [shape: f32[2,1,32], index: 15, kind: input, shape index: {}]
  %s16 = inlined_call_operand.vmem [shape: f32[2,1,32], index: 16, kind: input, shape index: {}]
  %s17 = inlined_call_operand.vmem [shape: f32[32,128], index: 17, kind: input, shape index: {}]
  %s18 = inlined_call_operand.vmem [shape: f32[1,128], index: 18, kind: input, shape index: {}]
  %s19 = inlined_call_operand.hbm [shape: f32[2,8,128], index: 19, kind: output, shape index: {}]
  %s20 = sld [smem:[#allocation0]]
  $region86: #{transformer_diffusion_forward.1} parent=0
    _
  %s22 = ssub.s32 1, %s20
  %s23 = scalar_select 0, %s22, %s20
  $region1: #{transformer_diffusion_forward.1} parent=0
    #allocation2 [shape = 'u8[8192]{0}', space=vmem, size = 0x2000, scoped, tag = 'output window, operand 0, single buffered']
    #allocation3 [shape = 's32[1]{0}', space=sflag, size = 0x4, scoped, tag = 'scoped memory for transformer_diffusion_forward.1']
    %24 = vsyncpa [#allocation3], 0
    // Predicated region
    $region2: #{transformer_diffusion_forward.1} parent=1 // pred_check
      _
    $region3: #{transformer_diffusion_forward.1} parent=1 // pred_check_branch
      %26 = sbr.rel (0) target = $region5
    $region4: #{transformer_diffusion_forward.1} parent=1 // pred_region
      _
    $region5: #{transformer_diffusion_forward.1} parent=1 // pred_fallthru
      _
    // Predicated region
    $region6: #{transformer_diffusion_forward.1} parent=1 // pred_check
      _
    $region7: #{transformer_diffusion_forward.1} parent=1 // pred_check_branch
      %28 = sbr.rel (0) target = $region9
    $region8: #{transformer_diffusion_forward.1} parent=1 // pred_region
      _
    $region9: #{transformer_diffusion_forward.1} parent=1 // pred_fallthru
      _
    // Predicated region
    $region10: #{transformer_diffusion_forward.1} parent=1 // pred_check
      _
    $region11: #{transformer_diffusion_forward.1} parent=1 // pred_check_branch
      %30 = sbr.rel (0) target = $region13
    $region12: #{transformer_diffusion_forward.1} parent=1 // pred_region
      _
    $region13: #{transformer_diffusion_forward.1} parent=1 // pred_fallthru
      _
    // Predicated region
    $region14: #{transformer_diffusion_forward.1} parent=1 // pred_check
      _
    $region15: #{transformer_diffusion_forward.1} parent=1 // pred_check_branch
      %32 = sbr.rel (0) target = $region17
    $region16: #{transformer_diffusion_forward.1} parent=1 // pred_region
      _
    $region17: #{transformer_diffusion_forward.1} parent=1 // pred_fallthru
      _
    // Predicated region
    $region18: #{transformer_diffusion_forward.1} parent=1 // pred_check
      _
    $region19: #{transformer_diffusion_forward.1} parent=1 // pred_check_branch
      %34 = sbr.rel (0) target = $region21
    $region20: #{transformer_diffusion_forward.1} parent=1 // pred_region
      _
    $region21: #{transformer_diffusion_forward.1} parent=1 // pred_fallthru
      _
    // Predicated region
    $region22: #{transformer_diffusion_forward.1} parent=1 // pred_check
      _
    $region23: #{transformer_diffusion_forward.1} parent=1 // pred_check_branch
      %36 = sbr.rel (0) target = $region25
    $region24: #{transformer_diffusion_forward.1} parent=1 // pred_region
      _
    $region25: #{transformer_diffusion_forward.1} parent=1 // pred_fallthru
      _
    // Predicated region
    $region26: #{transformer_diffusion_forward.1} parent=1 // pred_check
      _
    $region27: #{transformer_diffusion_forward.1} parent=1 // pred_check_branch
      %38 = sbr.rel (0) target = $region29
    $region28: #{transformer_diffusion_forward.1} parent=1 // pred_region
      _
    $region29: #{transformer_diffusion_forward.1} parent=1 // pred_fallthru
      _
    // Predicated region
    $region30: #{transformer_diffusion_forward.1} parent=1 // pred_check
      _
    $region31: #{transformer_diffusion_forward.1} parent=1 // pred_check_branch
      %40 = sbr.rel (0) target = $region33
    $region32: #{transformer_diffusion_forward.1} parent=1 // pred_region
      _
    $region33: #{transformer_diffusion_forward.1} parent=1 // pred_fallthru
      _
    // Predicated region
    $region34: #{transformer_diffusion_forward.1} parent=1 // pred_check
      _
    $region35: #{transformer_diffusion_forward.1} parent=1 // pred_check_branch
      %42 = sbr.rel (0) target = $region37
    $region36: #{transformer_diffusion_forward.1} parent=1 // pred_region
      _
    $region37: #{transformer_diffusion_forward.1} parent=1 // pred_fallthru
      _
    // Predicated region
    $region38: #{transformer_diffusion_forward.1} parent=1 // pred_check
      _
    $region39: #{transformer_diffusion_forward.1} parent=1 // pred_check_branch
      %44 = sbr.rel (0) target = $region41
    $region40: #{transformer_diffusion_forward.1} parent=1 // pred_region
      _
    $region41: #{transformer_diffusion_forward.1} parent=1 // pred_fallthru
      _
    // Predicated region
    $region42: #{transformer_diffusion_forward.1} parent=1 // pred_check
      _
    $region43: #{transformer_diffusion_forward.1} parent=1 // pred_check_branch
      %46 = sbr.rel (0) target = $region45
    $region44: #{transformer_diffusion_forward.1} parent=1 // pred_region
      _
    $region45: #{transformer_diffusion_forward.1} parent=1 // pred_fallthru
      _
    // Predicated region
    $region46: #{transformer_diffusion_forward.1} parent=1 // pred_check
      _
    $region47: #{transformer_diffusion_forward.1} parent=1 // pred_check_branch
      %48 = sbr.rel (0) target = $region49
    $region48: #{transformer_diffusion_forward.1} parent=1 // pred_region
      _
    $region49: #{transformer_diffusion_forward.1} parent=1 // pred_fallthru
      _
    // Predicated region
    $region50: #{transformer_diffusion_forward.1} parent=1 // pred_check
      _
    $region51: #{transformer_diffusion_forward.1} parent=1 // pred_check_branch
      %50 = sbr.rel (0) target = $region53
    $region52: #{transformer_diffusion_forward.1} parent=1 // pred_region
      _
    $region53: #{transformer_diffusion_forward.1} parent=1 // pred_fallthru
      _
    // Predicated region
    $region54: #{transformer_diffusion_forward.1} parent=1 // pred_check
      _
    $region55: #{transformer_diffusion_forward.1} parent=1 // pred_check_branch
      %52 = sbr.rel (0) target = $region57
    $region56: #{transformer_diffusion_forward.1} parent=1 // pred_region
      _
    $region57: #{transformer_diffusion_forward.1} parent=1 // pred_fallthru
      _
    // Predicated region
    $region58: #{transformer_diffusion_forward.1} parent=1 // pred_check
      _
    $region59: #{transformer_diffusion_forward.1} parent=1 // pred_check_branch
      %54 = sbr.rel (0) target = $region61
    $region60: #{transformer_diffusion_forward.1} parent=1 // pred_region
      _
    $region61: #{transformer_diffusion_forward.1} parent=1 // pred_fallthru
      _
    // Predicated region
    $region62: #{transformer_diffusion_forward.1} parent=1 // pred_check
      _
    $region63: #{transformer_diffusion_forward.1} parent=1 // pred_check_branch
      %56 = sbr.rel (0) target = $region65
    $region64: #{transformer_diffusion_forward.1} parent=1 // pred_region
      _
    $region65: #{transformer_diffusion_forward.1} parent=1 // pred_fallthru
      _
    // Predicated region
    $region66: #{transformer_diffusion_forward.1} parent=1 // pred_check
      _
    $region67: #{transformer_diffusion_forward.1} parent=1 // pred_check_branch
      %58 = sbr.rel (0) target = $region69
    $region68: #{transformer_diffusion_forward.1} parent=1 // pred_region
      _
    $region69: #{transformer_diffusion_forward.1} parent=1 // pred_fallthru
      _
    // Predicated region
    $region70: #{transformer_diffusion_forward.1} parent=1 // pred_check
      _
    $region71: #{transformer_diffusion_forward.1} parent=1 // pred_check_branch
      %60 = sbr.rel (0) target = $region73
    $region72: #{transformer_diffusion_forward.1} parent=1 // pred_region
      _
    $region73: #{transformer_diffusion_forward.1} parent=1 // pred_fallthru
      _
    // Predicated region
    $region74: #{transformer_diffusion_forward.1} parent=1 // pred_check
      _
    $region75: #{transformer_diffusion_forward.1} parent=1 // pred_check_branch
      %62 = sbr.rel (0) target = $region77
    $region76: #{transformer_diffusion_forward.1} parent=1 // pred_region
      _
    $region77: #{transformer_diffusion_forward.1} parent=1 // pred_fallthru
      _
    %v64 = vld [vmem:[%s0] sm:$0xff]
    %v65 = vld [vmem:[%s0 + $0x8] sm:$0xff]
    %v66 = vld [vmem:[%s0 + $0x10] sm:$0xff]
    %v67 = vld [vmem:[%s0 + $0x18] sm:$0xff]
    %v68 = vpack.c.bf16 %v65, %v64
    %v69 = vpack.c.bf16 %v67, %v66
    %v70 = vld [vmem:[%s3] sm:$0xff]
    %v71 = vld [vmem:[%s3 + $0x8] sm:$0xff]
    %v72 = vld [vmem:[%s3 + $0x10] sm:$0xff]
    %v73 = vld [vmem:[%s3 + $0x18] sm:$0xff]
    %v74 = vpack.c.bf16 %v71, %v70
    %v75 = vpack.c.bf16 %v73, %v72
    %v76 = vld [vmem:[%s4] sm:$0x1]
    %v78 = vlaneseq
    %v79 = vshrl.u32 %v78, 7
    %v80 = vsub.s32 0, %v79
    %v81 = vrot.slane %v76, %v80
    %vm83 = vcmask 261120
    %v85 = vsel %vm83, %v68, 0
    %v88 = vsel %vm83, %v69, 0
    %90 = vmatprep.subr.bf16.mxu0 0
    %91 = vmatpush1.bf16.msra.mxu0 0
    %92 = vmatprep.subr.bf16.mxu0 0
    %93 = vmatpush1.bf16.msra.mxu0 0
    %94 = vmatprep.subr.bf16.mxu0 0
    %95 = vmatpush1.bf16.msra.mxu0 0
    %96 = vmatprep.subr.bf16.mxu0 0
    %97 = vmatpush1.bf16.msra.mxu0 0
    %98 = vmatprep.subr.bf16.mxu0 0
    %99 = vmatpush1.bf16.msra.mxu0 0
    %100 = vmatprep.subr.bf16.mxu0 0
    %101 = vmatpush1.bf16.msra.mxu0 0
    %102 = vmatprep.subr.bf16.mxu0 0
    %103 = vmatpush1.bf16.msra.mxu0 %v75
    %104 = vmatprep.subr.bf16.mxu0 0
    %105 = vmatpush1.bf16.msra.mxu0 %v74
    %106 = vmatprep.subr.bf16.mxu0 0
    %107 = vmatpush2.bf16.msra.mxu0 0
    %108 = vmatprep.subr.bf16.mxu0 0
    %109 = vmatpush2.bf16.msra.mxu0 0
    %110 = vmatprep.subr.bf16.mxu0 0
    %111 = vmatpush2.bf16.msra.mxu0 0
    %112 = vmatprep.subr.bf16.mxu0 0
    %113 = vmatpush2.bf16.msra.mxu0 0
    %114 = vmatprep.subr.bf16.mxu0 0
    %115 = vmatpush2.bf16.msra.mxu0 0
    %116 = vmatprep.subr.bf16.mxu0 0
    %117 = vmatpush2.bf16.msra.mxu0 0
    %118 = vmatprep.subr.bf16.mxu0 0
    %119 = vmatpush2.bf16.msra.mxu0 0
    %120 = vmatprep.subr.bf16.mxu0 0
    %121 = vmatpush2.bf16.msra.mxu0 0
    %122 = vmatprep.mubr.bf16.mxu0 0
    %123 = vmatmul.mubr.bf16.gmra.mxu0 %v85
    %v124 = vpop.f32.mrf.mxu0
    %v125 = vadd.f32 %v81, %v124
    %v126 = vpop.f32.mrf.mxu0
    %v127 = vpop.f32.mrf.mxu0
    %v128 = vadd.f32 %v81, %v127
    %v129 = vpop.f32.mrf.mxu0
    %130 = vmatprep.mubr.bf16.mxu0 0
    %131 = vmatmul.mubr.bf16.gmra.mxu0 %v88
    %v132 = vpop.f32.mrf.mxu0
    %v133 = vadd.f32 %v81, %v132
    %v134 = vpop.f32.mrf.mxu0
    %v135 = vpop.f32.mrf.mxu0
    %v136 = vadd.f32 %v81, %v135
    %v137 = vpop.f32.mrf.mxu0
    %138 = vdwg.mxu0
    %v139 = vlaneseq
    %v140 = vshrl.u32 %v139, 7
    %v141 = vadd.s32 %v140, 8
    %vm142 = vcmp.eq.s32.totalorder %v140, 8
    %vm143 = vcmp.eq.s32.totalorder %v141, 8
    %v144 = vsel %vm142, 1, 0
    %v145 = vsel %vm143, 1, 0
    %v146 = vcvt.s32.f32 %v144
    %v147 = vcvt.s32.f32 %v145
    %v148 = vld [vmem:[%s1] sm:$0x1]
    %v149 = vld [vmem:[%s1 + $0x1] sm:$0x1]
    %v150 = vsub.f32 %v148, %v76
    %v151 = vsub.f32 %v149, %v76
    %v154 = vlaneseq
    %v155 = vshrl.u32 %v154, 7
    %v156 = vsub.s32 0, %v155
    %v157 = vrot.slane %v150, %v156
    %v158 = vlaneseq
    %v159 = vshrl.u32 %v158, 7
    %v160 = vsub.s32 0, %v159
    %v161 = vrot.slane %v151, %v160
    %v164 = vmul.f32 %v146, %v157
    %v165 = vmul.f32 %v147, %v157
    %v166 = vmul.f32 %v146, %v161
    %v167 = vmul.f32 %v147, %v161
    %v168 = vadd.f32 %v125, %v164
    %v169 = vadd.f32 %v128, %v165
    %v170 = vadd.f32 %v133, %v166
    %v171 = vadd.f32 %v136, %v167
    %v172 = vld [vmem:[%s2] sm:$0xff]
    %v173 = vld [vmem:[%s2 + $0x8] sm:$0xff]
    %v174 = vadd.f32 %v168, %v172
    %v175 = vadd.f32 %v169, %v173
    %v176 = vadd.f32 %v170, %v172
    %v177 = vadd.f32 %v171, %v173
    %v178 = vlaneseq
    %v179 = vand.u32 %v178, 127
    %vm180 = vcmp.lt.s32.totalorder %v179, 9
    %v181 = vsel %vm180, 0.0, -1e+09
    %v182 = vpack.c.bf16 %v175, %v174
    %v183 = vpack.c.bf16 %v177, %v176
    %v184 = vld [vmem:[%s5] sm:$0xff]
    %v185 = vld [vmem:[%s5 + $0x8] sm:$0xff]
    %v186 = vld [vmem:[%s5 + $0x10] sm:$0xff]
    %v187 = vld [vmem:[%s5 + $0x18] sm:$0xff]
    %v188 = vpack.c.bf16 %v185, %v184
    %v189 = vpack.c.bf16 %v187, %v186
    %v190 = vld [vmem:[%s6] sm:$0x1]
    %v192 = vlaneseq
    %v193 = vshrl.u32 %v192, 7
    %v194 = vsub.s32 0, %v193
    %v195 = vrot.slane %v190, %v194
    %v198 = vsel %vm83, %v182, 0
    %v201 = vsel %vm83, %v183, 0
    %203 = vmatprep.subr.bf16.mxu0 0
    %204 = vmatpush1.bf16.msra.mxu0 0
    %205 = vmatprep.subr.bf16.mxu0 0
    %206 = vmatpush1.bf16.msra.mxu0 0
    %207 = vmatprep.subr.bf16.mxu0 0
    %208 = vmatpush1.bf16.msra.mxu0 0
    %209 = vmatprep.subr.bf16.mxu0 0
    %210 = vmatpush1.bf16.msra.mxu0 0
    %211 = vmatprep.subr.bf16.mxu0 0
    %212 = vmatpush1.bf16.msra.mxu0 0
    %213 = vmatprep.subr.bf16.mxu0 0
    %214 = vmatpush1.bf16.msra.mxu0 0
    %215 = vmatprep.subr.bf16.mxu0 0
    %216 = vmatpush1.bf16.msra.mxu0 %v189
    %217 = vmatprep.subr.bf16.mxu0 0
    %218 = vmatpush1.bf16.msra.mxu0 %v188
    %219 = vmatprep.subr.bf16.mxu0 0
    %220 = vmatpush2.bf16.msra.mxu0 0
    %221 = vmatprep.subr.bf16.mxu0 0
    %222 = vmatpush2.bf16.msra.mxu0 0
    %223 = vmatprep.subr.bf16.mxu0 0
    %224 = vmatpush2.bf16.msra.mxu0 0
    %225 = vmatprep.subr.bf16.mxu0 0
    %226 = vmatpush2.bf16.msra.mxu0 0
    %227 = vmatprep.subr.bf16.mxu0 0
    %228 = vmatpush2.bf16.msra.mxu0 0
    %229 = vmatprep.subr.bf16.mxu0 0
    %230 = vmatpush2.bf16.msra.mxu0 0
    %231 = vmatprep.subr.bf16.mxu0 0
    %232 = vmatpush2.bf16.msra.mxu0 0
    %233 = vmatprep.subr.bf16.mxu0 0
    %234 = vmatpush2.bf16.msra.mxu0 0
    %235 = vmatprep.mubr.bf16.mxu0 0
    %236 = vmatmul.mubr.bf16.gmra.mxu0 %v198
    %v237 = vpop.f32.mrf.mxu0
    %v238 = vadd.f32 %v195, %v237
    %v239 = vpop.f32.mrf.mxu0
    %v240 = vpop.f32.mrf.mxu0
    %v241 = vadd.f32 %v195, %v240
    %v242 = vpop.f32.mrf.mxu0
    %243 = vmatprep.mubr.bf16.mxu0 0
    %244 = vmatmul.mubr.bf16.gmra.mxu0 %v201
    %v245 = vpop.f32.mrf.mxu0
    %v246 = vadd.f32 %v195, %v245
    %v247 = vpop.f32.mrf.mxu0
    %v248 = vpop.f32.mrf.mxu0
    %v249 = vadd.f32 %v195, %v248
    %v250 = vpop.f32.mrf.mxu0
    %251 = vdwg.mxu0
    %256 = vrot.lane.b32.xlu0 %v238, 120
    %v257 = vpop.permute.xlu0 %256
    %258 = vrot.lane.b32.xlu0 %v241, 120
    %v259 = vpop.permute.xlu0 %258
    %260 = vrot.lane.b32.xlu0 %v246, 120
    %v261 = vpop.permute.xlu0 %260
    %262 = vrot.lane.b32.xlu0 %v249, 120
    %v263 = vpop.permute.xlu0 %262
    %268 = vrot.lane.b32.xlu0 %v238, 112
    %v269 = vpop.permute.xlu0 %268
    %270 = vrot.lane.b32.xlu0 %v241, 112
    %v271 = vpop.permute.xlu0 %270
    %272 = vrot.lane.b32.xlu0 %v246, 112
    %v273 = vpop.permute.xlu0 %272
    %274 = vrot.lane.b32.xlu0 %v249, 112
    %v275 = vpop.permute.xlu0 %274
    %280 = vrot.lane.b32.xlu0 %v238, 104
    %v281 = vpop.permute.xlu0 %280
    %282 = vrot.lane.b32.xlu0 %v241, 104
    %v283 = vpop.permute.xlu0 %282
    %284 = vrot.lane.b32.xlu0 %v246, 104
    %v285 = vpop.permute.xlu0 %284
    %286 = vrot.lane.b32.xlu0 %v249, 104
    %v287 = vpop.permute.xlu0 %286
    %v292 = vpack.c.bf16 %v241, %v238
    %v293 = vpack.c.bf16 %v249, %v246
    %v294 = vpack.c.bf16 %v259, %v257
    %v295 = vpack.c.bf16 %v263, %v261
    %v296 = vpack.c.bf16 %v271, %v269
    %v297 = vpack.c.bf16 %v275, %v273
    %v298 = vpack.c.bf16 %v283, %v281
    %v299 = vpack.c.bf16 %v287, %v285
    %301 = vrot.lane.b32.xlu0 %v292, 96
    %v302 = vpop.permute.xlu0 %301
    %vm303 = vcmask 64512
    %v305 = vsel %vm303, %v292, 0
    %v308 = vsel %vm303, %v302, 0
    %310 = vmatprep.subr.bf16.mxu0 0
    %311 = vmatpush1.bf16.xpose.msra.mxu0 0
    %312 = vmatprep.subr.bf16.mxu0 0
    %313 = vmatpush1.bf16.xpose.msra.mxu0 0
    %314 = vmatprep.subr.bf16.mxu0 0
    %315 = vmatpush1.bf16.xpose.msra.mxu0 0
    %316 = vmatprep.subr.bf16.mxu0 0
    %317 = vmatpush1.bf16.xpose.msra.mxu0 0
    %318 = vmatprep.subr.bf16.mxu0 0
    %319 = vmatpush1.bf16.xpose.msra.mxu0 0
    %320 = vmatprep.subr.bf16.mxu0 0
    %321 = vmatpush1.bf16.xpose.msra.mxu0 0
    %322 = vmatprep.subr.bf16.mxu0 0
    %323 = vmatpush1.bf16.xpose.msra.mxu0 0
    %324 = vmatprep.subr.bf16.mxu0 0
    %325 = vmatpush1.bf16.xpose.msra.mxu0 %v308
    %326 = vmatprep.subr.bf16.mxu0 0
    %327 = vmatpush2.bf16.xpose.msra.mxu0 0
    %328 = vmatprep.subr.bf16.mxu0 0
    %329 = vmatpush2.bf16.xpose.msra.mxu0 0
    %330 = vmatprep.subr.bf16.mxu0 0
    %331 = vmatpush2.bf16.xpose.msra.mxu0 0
    %332 = vmatprep.subr.bf16.mxu0 0
    %333 = vmatpush2.bf16.xpose.msra.mxu0 0
    %334 = vmatprep.subr.bf16.mxu0 0
    %335 = vmatpush2.bf16.xpose.msra.mxu0 0
    %336 = vmatprep.subr.bf16.mxu0 0
    %337 = vmatpush2.bf16.xpose.msra.mxu0 0
    %338 = vmatprep.subr.bf16.mxu0 0
    %339 = vmatpush2.bf16.xpose.msra.mxu0 0
    %340 = vmatprep.subr.bf16.mxu0 0
    %341 = vmatpush2.bf16.xpose.msra.mxu0 0
    %342 = vmatprep.mubr.bf16.mxu0 0
    %343 = vmatmul.mubr.bf16.gmra.mxu0 %v305
    %v344 = vpop.f32.mrf.mxu0
    %v345 = vadd.f32 0.0, %v344
    %v346 = vpop.f32.mrf.mxu0
    %v347 = vpop.f32.mrf.mxu0
    %v348 = vadd.f32 0.0, %v347
    %v349 = vpop.f32.mrf.mxu0
    %350 = vdwg.mxu0
    %352 = vrot.lane.b32.xlu0 %v293, 96
    %v353 = vpop.permute.xlu0 %352
    %v355 = vsel %vm303, %v293, 0
    %v358 = vsel %vm303, %v353, 0
    %360 = vmatprep.subr.bf16.mxu0 0
    %361 = vmatpush1.bf16.xpose.msra.mxu0 0
    %362 = vmatprep.subr.bf16.mxu0 0
    %363 = vmatpush1.bf16.xpose.msra.mxu0 0
    %364 = vmatprep.subr.bf16.mxu0 0
    %365 = vmatpush1.bf16.xpose.msra.mxu0 0
    %366 = vmatprep.subr.bf16.mxu0 0
    %367 = vmatpush1.bf16.xpose.msra.mxu0 0
    %368 = vmatprep.subr.bf16.mxu0 0
    %369 = vmatpush1.bf16.xpose.msra.mxu0 0
    %370 = vmatprep.subr.bf16.mxu0 0
    %371 = vmatpush1.bf16.xpose.msra.mxu0 0
    %372 = vmatprep.subr.bf16.mxu0 0
    %373 = vmatpush1.bf16.xpose.msra.mxu0 0
    %374 = vmatprep.subr.bf16.mxu0 0
    %375 = vmatpush1.bf16.xpose.msra.mxu0 %v358
    %376 = vmatprep.subr.bf16.mxu0 0
    %377 = vmatpush2.bf16.xpose.msra.mxu0 0
    %378 = vmatprep.subr.bf16.mxu0 0
    %379 = vmatpush2.bf16.xpose.msra.mxu0 0
    %380 = vmatprep.subr.bf16.mxu0 0
    %381 = vmatpush2.bf16.xpose.msra.mxu0 0
    %382 = vmatprep.subr.bf16.mxu0 0
    %383 = vmatpush2.bf16.xpose.msra.mxu0 0
    %384 = vmatprep.subr.bf16.mxu0 0
    %385 = vmatpush2.bf16.xpose.msra.mxu0 0
    %386 = vmatprep.subr.bf16.mxu0 0
    %387 = vmatpush2.bf16.xpose.msra.mxu0 0
    %388 = vmatprep.subr.bf16.mxu0 0
    %389 = vmatpush2.bf16.xpose.msra.mxu0 0
    %390 = vmatprep.subr.bf16.mxu0 0
    %391 = vmatpush2.bf16.xpose.msra.mxu0 0
    %392 = vmatprep.mubr.bf16.mxu0 0
    %393 = vmatmul.mubr.bf16.gmra.mxu0 %v355
    %v394 = vpop.f32.mrf.mxu0
    %v395 = vadd.f32 0.0, %v394
    %v396 = vpop.f32.mrf.mxu0
    %v397 = vpop.f32.mrf.mxu0
    %v398 = vadd.f32 0.0, %v397
    %v399 = vpop.f32.mrf.mxu0
    %400 = vdwg.mxu0
    %402 = vrot.lane.b32.xlu0 %v294, 96
    %v403 = vpop.permute.xlu0 %402
    %v405 = vsel %vm303, %v294, 0
    %v408 = vsel %vm303, %v403, 0
    %410 = vmatprep.subr.bf16.mxu0 0
    %411 = vmatpush1.bf16.xpose.msra.mxu0 0
    %412 = vmatprep.subr.bf16.mxu0 0
    %413 = vmatpush1.bf16.xpose.msra.mxu0 0
    %414 = vmatprep.subr.bf16.mxu0 0
    %415 = vmatpush1.bf16.xpose.msra.mxu0 0
    %416 = vmatprep.subr.bf16.mxu0 0
    %417 = vmatpush1.bf16.xpose.msra.mxu0 0
    %418 = vmatprep.subr.bf16.mxu0 0
    %419 = vmatpush1.bf16.xpose.msra.mxu0 0
    %420 = vmatprep.subr.bf16.mxu0 0
    %421 = vmatpush1.bf16.xpose.msra.mxu0 0
    %422 = vmatprep.subr.bf16.mxu0 0
    %423 = vmatpush1.bf16.xpose.msra.mxu0 0
    %424 = vmatprep.subr.bf16.mxu0 0
    %425 = vmatpush1.bf16.xpose.msra.mxu0 %v408
    %426 = vmatprep.subr.bf16.mxu0 0
    %427 = vmatpush2.bf16.xpose.msra.mxu0 0
    %428 = vmatprep.subr.bf16.mxu0 0
    %429 = vmatpush2.bf16.xpose.msra.mxu0 0
    %430 = vmatprep.subr.bf16.mxu0 0
    %431 = vmatpush2.bf16.xpose.msra.mxu0 0
    %432 = vmatprep.subr.bf16.mxu0 0
    %433 = vmatpush2.bf16.xpose.msra.mxu0 0
    %434 = vmatprep.subr.bf16.mxu0 0
    %435 = vmatpush2.bf16.xpose.msra.mxu0 0
    %436 = vmatprep.subr.bf16.mxu0 0
    %437 = vmatpush2.bf16.xpose.msra.mxu0 0
    %438 = vmatprep.subr.bf16.mxu0 0
    %439 = vmatpush2.bf16.xpose.msra.mxu0 0
    %440 = vmatprep.subr.bf16.mxu0 0
    %441 = vmatpush2.bf16.xpose.msra.mxu0 0
    %442 = vmatprep.mubr.bf16.mxu0 0
    %443 = vmatmul.mubr.bf16.gmra.mxu0 %v405
    %v444 = vpop.f32.mrf.mxu0
    %v445 = vadd.f32 0.0, %v444
    %v446 = vpop.f32.mrf.mxu0
    %v447 = vpop.f32.mrf.mxu0
    %v448 = vadd.f32 0.0, %v447
    %v449 = vpop.f32.mrf.mxu0
    %450 = vdwg.mxu0
    %452 = vrot.lane.b32.xlu0 %v295, 96
    %v453 = vpop.permute.xlu0 %452
    %v455 = vsel %vm303, %v295, 0
    %v458 = vsel %vm303, %v453, 0
    %460 = vmatprep.subr.bf16.mxu0 0
    %461 = vmatpush1.bf16.xpose.msra.mxu0 0
    %462 = vmatprep.subr.bf16.mxu0 0
    %463 = vmatpush1.bf16.xpose.msra.mxu0 0
    %464 = vmatprep.subr.bf16.mxu0 0
    %465 = vmatpush1.bf16.xpose.msra.mxu0 0
    %466 = vmatprep.subr.bf16.mxu0 0
    %467 = vmatpush1.bf16.xpose.msra.mxu0 0
    %468 = vmatprep.subr.bf16.mxu0 0
    %469 = vmatpush1.bf16.xpose.msra.mxu0 0
    %470 = vmatprep.subr.bf16.mxu0 0
    %471 = vmatpush1.bf16.xpose.msra.mxu0 0
    %472 = vmatprep.subr.bf16.mxu0 0
    %473 = vmatpush1.bf16.xpose.msra.mxu0 0
    %474 = vmatprep.subr.bf16.mxu0 0
    %475 = vmatpush1.bf16.xpose.msra.mxu0 %v458
    %476 = vmatprep.subr.bf16.mxu0 0
    %477 = vmatpush2.bf16.xpose.msra.mxu0 0
    %478 = vmatprep.subr.bf16.mxu0 0
    %479 = vmatpush2.bf16.xpose.msra.mxu0 0
    %480 = vmatprep.subr.bf16.mxu0 0
    %481 = vmatpush2.bf16.xpose.msra.mxu0 0
    %482 = vmatprep.subr.bf16.mxu0 0
    %483 = vmatpush2.bf16.xpose.msra.mxu0 0
    %484 = vmatprep.subr.bf16.mxu0 0
    %485 = vmatpush2.bf16.xpose.msra.mxu0 0
    %486 = vmatprep.subr.bf16.mxu0 0
    %487 = vmatpush2.bf16.xpose.msra.mxu0 0
    %488 = vmatprep.subr.bf16.mxu0 0
    %489 = vmatpush2.bf16.xpose.msra.mxu0 0
    %490 = vmatprep.subr.bf16.mxu0 0
    %491 = vmatpush2.bf16.xpose.msra.mxu0 0
    %492 = vmatprep.mubr.bf16.mxu0 0
    %493 = vmatmul.mubr.bf16.gmra.mxu0 %v455
    %v494 = vpop.f32.mrf.mxu0
    %v495 = vadd.f32 0.0, %v494
    %v496 = vpop.f32.mrf.mxu0
    %v497 = vpop.f32.mrf.mxu0
    %v498 = vadd.f32 0.0, %v497
    %v499 = vpop.f32.mrf.mxu0
    %500 = vdwg.mxu0
    %502 = vrot.lane.b32.xlu0 %v296, 96
    %v503 = vpop.permute.xlu0 %502
    %v505 = vsel %vm303, %v296, 0
    %v508 = vsel %vm303, %v503, 0
    %510 = vmatprep.subr.bf16.mxu0 0
    %511 = vmatpush1.bf16.xpose.msra.mxu0 0
    %512 = vmatprep.subr.bf16.mxu0 0
    %513 = vmatpush1.bf16.xpose.msra.mxu0 0
    %514 = vmatprep.subr.bf16.mxu0 0
    %515 = vmatpush1.bf16.xpose.msra.mxu0 0
    %516 = vmatprep.subr.bf16.mxu0 0
    %517 = vmatpush1.bf16.xpose.msra.mxu0 0
    %518 = vmatprep.subr.bf16.mxu0 0
    %519 = vmatpush1.bf16.xpose.msra.mxu0 0
    %520 = vmatprep.subr.bf16.mxu0 0
    %521 = vmatpush1.bf16.xpose.msra.mxu0 0
    %522 = vmatprep.subr.bf16.mxu0 0
    %523 = vmatpush1.bf16.xpose.msra.mxu0 0
    %524 = vmatprep.subr.bf16.mxu0 0
    %525 = vmatpush1.bf16.xpose.msra.mxu0 %v508
    %526 = vmatprep.subr.bf16.mxu0 0
    %527 = vmatpush2.bf16.xpose.msra.mxu0 0
    %528 = vmatprep.subr.bf16.mxu0 0
    %529 = vmatpush2.bf16.xpose.msra.mxu0 0
    %530 = vmatprep.subr.bf16.mxu0 0
    %531 = vmatpush2.bf16.xpose.msra.mxu0 0
    %532 = vmatprep.subr.bf16.mxu0 0
    %533 = vmatpush2.bf16.xpose.msra.mxu0 0
    %534 = vmatprep.subr.bf16.mxu0 0
    %535 = vmatpush2.bf16.xpose.msra.mxu0 0
    %536 = vmatprep.subr.bf16.mxu0 0
    %537 = vmatpush2.bf16.xpose.msra.mxu0 0
    %538 = vmatprep.subr.bf16.mxu0 0
    %539 = vmatpush2.bf16.xpose.msra.mxu0 0
    %540 = vmatprep.subr.bf16.mxu0 0
    %541 = vmatpush2.bf16.xpose.msra.mxu0 0
    %542 = vmatprep.mubr.bf16.mxu0 0
    %543 = vmatmul.mubr.bf16.gmra.mxu0 %v505
    %v544 = vpop.f32.mrf.mxu0
    %v545 = vadd.f32 0.0, %v544
    %v546 = vpop.f32.mrf.mxu0
    %v547 = vpop.f32.mrf.mxu0
    %v548 = vadd.f32 0.0, %v547
    %v549 = vpop.f32.mrf.mxu0
    %550 = vdwg.mxu0
    %552 = vrot.lane.b32.xlu0 %v297, 96
    %v553 = vpop.permute.xlu0 %552
    %v555 = vsel %vm303, %v297, 0
    %v558 = vsel %vm303, %v553, 0
    %560 = vmatprep.subr.bf16.mxu0 0
    %561 = vmatpush1.bf16.xpose.msra.mxu0 0
    %562 = vmatprep.subr.bf16.mxu0 0
    %563 = vmatpush1.bf16.xpose.msra.mxu0 0
    %564 = vmatprep.subr.bf16.mxu0 0
    %565 = vmatpush1.bf16.xpose.msra.mxu0 0
    %566 = vmatprep.subr.bf16.mxu0 0
    %567 = vmatpush1.bf16.xpose.msra.mxu0 0
    %568 = vmatprep.subr.bf16.mxu0 0
    %569 = vmatpush1.bf16.xpose.msra.mxu0 0
    %570 = vmatprep.subr.bf16.mxu0 0
    %571 = vmatpush1.bf16.xpose.msra.mxu0 0
    %572 = vmatprep.subr.bf16.mxu0 0
    %573 = vmatpush1.bf16.xpose.msra.mxu0 0
    %574 = vmatprep.subr.bf16.mxu0 0
    %575 = vmatpush1.bf16.xpose.msra.mxu0 %v558
    %576 = vmatprep.subr.bf16.mxu0 0
    %577 = vmatpush2.bf16.xpose.msra.mxu0 0
    %578 = vmatprep.subr.bf16.mxu0 0
    %579 = vmatpush2.bf16.xpose.msra.mxu0 0
    %580 = vmatprep.subr.bf16.mxu0 0
    %581 = vmatpush2.bf16.xpose.msra.mxu0 0
    %582 = vmatprep.subr.bf16.mxu0 0
    %583 = vmatpush2.bf16.xpose.msra.mxu0 0
    %584 = vmatprep.subr.bf16.mxu0 0
    %585 = vmatpush2.bf16.xpose.msra.mxu0 0
    %586 = vmatprep.subr.bf16.mxu0 0
    %587 = vmatpush2.bf16.xpose.msra.mxu0 0
    %588 = vmatprep.subr.bf16.mxu0 0
    %589 = vmatpush2.bf16.xpose.msra.mxu0 0
    %590 = vmatprep.subr.bf16.mxu0 0
    %591 = vmatpush2.bf16.xpose.msra.mxu0 0
    %592 = vmatprep.mubr.bf16.mxu0 0
    %593 = vmatmul.mubr.bf16.gmra.mxu0 %v555
    %v594 = vpop.f32.mrf.mxu0
    %v595 = vadd.f32 0.0, %v594
    %v596 = vpop.f32.mrf.mxu0
    %v597 = vpop.f32.mrf.mxu0
    %v598 = vadd.f32 0.0, %v597
    %v599 = vpop.f32.mrf.mxu0
    %600 = vdwg.mxu0
    %602 = vrot.lane.b32.xlu0 %v298, 96
    %v603 = vpop.permute.xlu0 %602
    %v605 = vsel %vm303, %v298, 0
    %v608 = vsel %vm303, %v603, 0
    %610 = vmatprep.subr.bf16.mxu0 0
    %611 = vmatpush1.bf16.xpose.msra.mxu0 0
    %612 = vmatprep.subr.bf16.mxu0 0
    %613 = vmatpush1.bf16.xpose.msra.mxu0 0
    %614 = vmatprep.subr.bf16.mxu0 0
    %615 = vmatpush1.bf16.xpose.msra.mxu0 0
    %616 = vmatprep.subr.bf16.mxu0 0
    %617 = vmatpush1.bf16.xpose.msra.mxu0 0
    %618 = vmatprep.subr.bf16.mxu0 0
    %619 = vmatpush1.bf16.xpose.msra.mxu0 0
    %620 = vmatprep.subr.bf16.mxu0 0
    %621 = vmatpush1.bf16.xpose.msra.mxu0 0
    %622 = vmatprep.subr.bf16.mxu0 0
    %623 = vmatpush1.bf16.xpose.msra.mxu0 0
    %624 = vmatprep.subr.bf16.mxu0 0
    %625 = vmatpush1.bf16.xpose.msra.mxu0 %v608
    %626 = vmatprep.subr.bf16.mxu0 0
    %627 = vmatpush2.bf16.xpose.msra.mxu0 0
    %628 = vmatprep.subr.bf16.mxu0 0
    %629 = vmatpush2.bf16.xpose.msra.mxu0 0
    %630 = vmatprep.subr.bf16.mxu0 0
    %631 = vmatpush2.bf16.xpose.msra.mxu0 0
    %632 = vmatprep.subr.bf16.mxu0 0
    %633 = vmatpush2.bf16.xpose.msra.mxu0 0
    %634 = vmatprep.subr.bf16.mxu0 0
    %635 = vmatpush2.bf16.xpose.msra.mxu0 0
    %636 = vmatprep.subr.bf16.mxu0 0
    %637 = vmatpush2.bf16.xpose.msra.mxu0 0
    %638 = vmatprep.subr.bf16.mxu0 0
    %639 = vmatpush2.bf16.xpose.msra.mxu0 0
    %640 = vmatprep.subr.bf16.mxu0 0
    %641 = vmatpush2.bf16.xpose.msra.mxu0 0
    %642 = vmatprep.mubr.bf16.mxu0 0
    %643 = vmatmul.mubr.bf16.gmra.mxu0 %v605
    %v644 = vpop.f32.mrf.mxu0
    %v645 = vadd.f32 0.0, %v644
    %v646 = vpop.f32.mrf.mxu0
    %v647 = vpop.f32.mrf.mxu0
    %v648 = vadd.f32 0.0, %v647
    %v649 = vpop.f32.mrf.mxu0
    %650 = vdwg.mxu0
    %652 = vrot.lane.b32.xlu0 %v299, 96
    %v653 = vpop.permute.xlu0 %652
    %v655 = vsel %vm303, %v299, 0
    %v658 = vsel %vm303, %v653, 0
    %660 = vmatprep.subr.bf16.mxu0 0
    %661 = vmatpush1.bf16.xpose.msra.mxu0 0
    %662 = vmatprep.subr.bf16.mxu0 0
    %663 = vmatpush1.bf16.xpose.msra.mxu0 0
    %664 = vmatprep.subr.bf16.mxu0 0
    %665 = vmatpush1.bf16.xpose.msra.mxu0 0
    %666 = vmatprep.subr.bf16.mxu0 0
    %667 = vmatpush1.bf16.xpose.msra.mxu0 0
    %668 = vmatprep.subr.bf16.mxu0 0
    %669 = vmatpush1.bf16.xpose.msra.mxu0 0
    %670 = vmatprep.subr.bf16.mxu0 0
    %671 = vmatpush1.bf16.xpose.msra.mxu0 0
    %672 = vmatprep.subr.bf16.mxu0 0
    %673 = vmatpush1.bf16.xpose.msra.mxu0 0
    %674 = vmatprep.subr.bf16.mxu0 0
    %675 = vmatpush1.bf16.xpose.msra.mxu0 %v658
    %676 = vmatprep.subr.bf16.mxu0 0
    %677 = vmatpush2.bf16.xpose.msra.mxu0 0
    %678 = vmatprep.subr.bf16.mxu0 0
    %679 = vmatpush2.bf16.xpose.msra.mxu0 0
    %680 = vmatprep.subr.bf16.mxu0 0
    %681 = vmatpush2.bf16.xpose.msra.mxu0 0
    %682 = vmatprep.subr.bf16.mxu0 0
    %683 = vmatpush2.bf16.xpose.msra.mxu0 0
    %684 = vmatprep.subr.bf16.mxu0 0
    %685 = vmatpush2.bf16.xpose.msra.mxu0 0
    %686 = vmatprep.subr.bf16.mxu0 0
    %687 = vmatpush2.bf16.xpose.msra.mxu0 0
    %688 = vmatprep.subr.bf16.mxu0 0
    %689 = vmatpush2.bf16.xpose.msra.mxu0 0
    %690 = vmatprep.subr.bf16.mxu0 0
    %691 = vmatpush2.bf16.xpose.msra.mxu0 0
    %692 = vmatprep.mubr.bf16.mxu0 0
    %693 = vmatmul.mubr.bf16.gmra.mxu0 %v655
    %v694 = vpop.f32.mrf.mxu0
    %v695 = vadd.f32 0.0, %v694
    %v696 = vpop.f32.mrf.mxu0
    %v697 = vpop.f32.mrf.mxu0
    %v698 = vadd.f32 0.0, %v697
    %v699 = vpop.f32.mrf.mxu0
    %700 = vdwg.mxu0
    %v701 = vmul.f32 %v345, 0.35355338
    %v702 = vmul.f32 %v348, 0.35355338
    %v703 = vmul.f32 %v395, 0.35355338
    %v704 = vmul.f32 %v398, 0.35355338
    %v705 = vmul.f32 %v445, 0.35355338
    %v706 = vmul.f32 %v448, 0.35355338
    %v707 = vmul.f32 %v495, 0.35355338
    %v708 = vmul.f32 %v498, 0.35355338
    %v709 = vmul.f32 %v545, 0.35355338
    %v710 = vmul.f32 %v548, 0.35355338
    %v711 = vmul.f32 %v595, 0.35355338
    %v712 = vmul.f32 %v598, 0.35355338
    %v713 = vmul.f32 %v645, 0.35355338
    %v714 = vmul.f32 %v648, 0.35355338
    %v715 = vmul.f32 %v695, 0.35355338
    %v716 = vmul.f32 %v698, 0.35355338
    %v717 = vadd.f32 %v701, %v181
    %v718 = vadd.f32 %v702, %v181
    %v719 = vadd.f32 %v703, %v181
    %v720 = vadd.f32 %v704, %v181
    %v721 = vadd.f32 %v705, %v181
    %v722 = vadd.f32 %v706, %v181
    %v723 = vadd.f32 %v707, %v181
    %v724 = vadd.f32 %v708, %v181
    %v725 = vadd.f32 %v709, %v181
    %v726 = vadd.f32 %v710, %v181
    %v727 = vadd.f32 %v711, %v181
    %v728 = vadd.f32 %v712, %v181
    %v729 = vadd.f32 %v713, %v181
    %v730 = vadd.f32 %v714, %v181
    %v731 = vadd.f32 %v715, %v181
    %v732 = vadd.f32 %v716, %v181
    %vm733 = vcmask 130048
    %v734 = vsel %vm733, %v717, -inf
    %735 = vmax.xlane.f32.xlu0 %v734
    %v736 = vpop.xlane.xlu0 %735
    %v737 = vsel %vm733, %v718, -inf
    %738 = vmax.xlane.f32.xlu0 %v737
    %v739 = vpop.xlane.xlu0 %738
    %v740 = vsel %vm733, %v719, -inf
    %741 = vmax.xlane.f32.xlu0 %v740
    %v742 = vpop.xlane.xlu0 %741
    %v743 = vsel %vm733, %v720, -inf
    %744 = vmax.xlane.f32.xlu0 %v743
    %v745 = vpop.xlane.xlu0 %744
    %v746 = vsel %vm733, %v721, -inf
    %747 = vmax.xlane.f32.xlu0 %v746
    %v748 = vpop.xlane.xlu0 %747
    %v749 = vsel %vm733, %v722, -inf
    %750 = vmax.xlane.f32.xlu0 %v749
    %v751 = vpop.xlane.xlu0 %750
    %v752 = vsel %vm733, %v723, -inf
    %753 = vmax.xlane.f32.xlu0 %v752
    %v754 = vpop.xlane.xlu0 %753
    %v755 = vsel %vm733, %v724, -inf
    %756 = vmax.xlane.f32.xlu0 %v755
    %v757 = vpop.xlane.xlu0 %756
    %v758 = vsel %vm733, %v725, -inf
    %759 = vmax.xlane.f32.xlu0 %v758
    %v760 = vpop.xlane.xlu0 %759
    %v761 = vsel %vm733, %v726, -inf
    %762 = vmax.xlane.f32.xlu0 %v761
    %v763 = vpop.xlane.xlu0 %762
    %v764 = vsel %vm733, %v727, -inf
    %765 = vmax.xlane.f32.xlu0 %v764
    %v766 = vpop.xlane.xlu0 %765
    %v767 = vsel %vm733, %v728, -inf
    %768 = vmax.xlane.f32.xlu0 %v767
    %v769 = vpop.xlane.xlu0 %768
    %v770 = vsel %vm733, %v729, -inf
    %771 = vmax.xlane.f32.xlu0 %v770
    %v772 = vpop.xlane.xlu0 %771
    %v773 = vsel %vm733, %v730, -inf
    %774 = vmax.xlane.f32.xlu0 %v773
    %v775 = vpop.xlane.xlu0 %774
    %v776 = vsel %vm733, %v731, -inf
    %777 = vmax.xlane.f32.xlu0 %v776
    %v778 = vpop.xlane.xlu0 %777
    %v779 = vsel %vm733, %v732, -inf
    %780 = vmax.xlane.f32.xlu0 %v779
    %v781 = vpop.xlane.xlu0 %780
    %v782 = vsub.f32 %v717, %v736
    %v783 = vsub.f32 %v718, %v739
    %v784 = vsub.f32 %v719, %v742
    %v785 = vsub.f32 %v720, %v745
    %v786 = vsub.f32 %v721, %v748
    %v787 = vsub.f32 %v722, %v751
    %v788 = vsub.f32 %v723, %v754
    %v789 = vsub.f32 %v724, %v757
    %v790 = vsub.f32 %v725, %v760
    %v791 = vsub.f32 %v726, %v763
    %v792 = vsub.f32 %v727, %v766
    %v793 = vsub.f32 %v728, %v769
    %v794 = vsub.f32 %v729, %v772
    %v795 = vsub.f32 %v730, %v775
    %v796 = vsub.f32 %v731, %v778
    %v797 = vsub.f32 %v732, %v781
    %v798 = vmul.f32 %v782, 1.442695
    %v799 = vpow.pop %v798
    %v800 = vmul.f32 %v783, 1.442695
    %v801 = vpow.pop %v800
    %v802 = vmul.f32 %v784, 1.442695
    %v803 = vpow.pop %v802
    %v804 = vmul.f32 %v785, 1.442695
    %v805 = vpow.pop %v804
    %v806 = vmul.f32 %v786, 1.442695
    %v807 = vpow.pop %v806
    %v808 = vmul.f32 %v787, 1.442695
    %v809 = vpow.pop %v808
    %v810 = vmul.f32 %v788, 1.442695
    %v811 = vpow.pop %v810
    %v812 = vmul.f32 %v789, 1.442695
    %v813 = vpow.pop %v812
    %v814 = vmul.f32 %v790, 1.442695
    %v815 = vpow.pop %v814
    %v816 = vmul.f32 %v791, 1.442695
    %v817 = vpow.pop %v816
    %v818 = vmul.f32 %v792, 1.442695
    %v819 = vpow.pop %v818
    %v820 = vmul.f32 %v793, 1.442695
    %v821 = vpow.pop %v820
    %v822 = vmul.f32 %v794, 1.442695
    %v823 = vpow.pop %v822
    %v824 = vmul.f32 %v795, 1.442695
    %v825 = vpow.pop %v824
    %v826 = vmul.f32 %v796, 1.442695
    %v827 = vpow.pop %v826
    %v828 = vmul.f32 %v797, 1.442695
    %v829 = vpow.pop %v828
    %v830 = vsel %vm733, %v799, 0.0
    %831 = vadd.xlane.f32.xlu0 %v830
    %v832 = vpop.xlane.xlu0 %831
    %v833 = vsel %vm733, %v801, 0.0
    %834 = vadd.xlane.f32.xlu0 %v833
    %v835 = vpop.xlane.xlu0 %834
    %v836 = vsel %vm733, %v803, 0.0
    %837 = vadd.xlane.f32.xlu0 %v836
    %v838 = vpop.xlane.xlu0 %837
    %v839 = vsel %vm733, %v805, 0.0
    %840 = vadd.xlane.f32.xlu0 %v839
    %v841 = vpop.xlane.xlu0 %840
    %v842 = vsel %vm733, %v807, 0.0
    %843 = vadd.xlane.f32.xlu0 %v842
    %v844 = vpop.xlane.xlu0 %843
    %v845 = vsel %vm733, %v809, 0.0
    %846 = vadd.xlane.f32.xlu0 %v845
    %v847 = vpop.xlane.xlu0 %846
    %v848 = vsel %vm733, %v811, 0.0
    %849 = vadd.xlane.f32.xlu0 %v848
    %v850 = vpop.xlane.xlu0 %849
    %v851 = vsel %vm733, %v813, 0.0
    %852 = vadd.xlane.f32.xlu0 %v851
    %v853 = vpop.xlane.xlu0 %852
    %v854 = vsel %vm733, %v815, 0.0
    %855 = vadd.xlane.f32.xlu0 %v854
    %v856 = vpop.xlane.xlu0 %855
    %v857 = vsel %vm733, %v817, 0.0
    %858 = vadd.xlane.f32.xlu0 %v857
    %v859 = vpop.xlane.xlu0 %858
    %v860 = vsel %vm733, %v819, 0.0
    %861 = vadd.xlane.f32.xlu0 %v860
    %v862 = vpop.xlane.xlu0 %861
    %v863 = vsel %vm733, %v821, 0.0
    %864 = vadd.xlane.f32.xlu0 %v863
    %v865 = vpop.xlane.xlu0 %864
    %v866 = vsel %vm733, %v823, 0.0
    %867 = vadd.xlane.f32.xlu0 %v866
    %v868 = vpop.xlane.xlu0 %867
    %v869 = vsel %vm733, %v825, 0.0
    %870 = vadd.xlane.f32.xlu0 %v869
    %v871 = vpop.xlane.xlu0 %870
    %v872 = vsel %vm733, %v827, 0.0
    %873 = vadd.xlane.f32.xlu0 %v872
    %v874 = vpop.xlane.xlu0 %873
    %v875 = vsel %vm733, %v829, 0.0
    %876 = vadd.xlane.f32.xlu0 %v875
    %v877 = vpop.xlane.xlu0 %876
    %v878 = vrcp.pop %v832
    %v879 = vrcp.pop %v835
    %v880 = vrcp.pop %v838
    %v881 = vrcp.pop %v841
    %v882 = vrcp.pop %v844
    %v883 = vrcp.pop %v847
    %v884 = vrcp.pop %v850
    %v885 = vrcp.pop %v853
    %v886 = vrcp.pop %v856
    %v887 = vrcp.pop %v859
    %v888 = vrcp.pop %v862
    %v889 = vrcp.pop %v865
    %v890 = vrcp.pop %v868
    %v891 = vrcp.pop %v871
    %v892 = vrcp.pop %v874
    %v893 = vrcp.pop %v877
    %v894 = vmul.f32 %v799, %v878
    %v895 = vmul.f32 %v801, %v879
    %v896 = vmul.f32 %v803, %v880
    %v897 = vmul.f32 %v805, %v881
    %v898 = vmul.f32 %v807, %v882
    %v899 = vmul.f32 %v809, %v883
    %v900 = vmul.f32 %v811, %v884
    %v901 = vmul.f32 %v813, %v885
    %v902 = vmul.f32 %v815, %v886
    %v903 = vmul.f32 %v817, %v887
    %v904 = vmul.f32 %v819, %v888
    %v905 = vmul.f32 %v821, %v889
    %v906 = vmul.f32 %v823, %v890
    %v907 = vmul.f32 %v825, %v891
    %v908 = vmul.f32 %v827, %v892
    %v909 = vmul.f32 %v829, %v893
    %v910 = vpack.c.bf16 %v895, %v894
    %v911 = vpack.c.bf16 %v897, %v896
    %v912 = vpack.c.bf16 %v899, %v898
    %v913 = vpack.c.bf16 %v901, %v900
    %v914 = vpack.c.bf16 %v903, %v902
    %v915 = vpack.c.bf16 %v905, %v904
    %v916 = vpack.c.bf16 %v907, %v906
    %v917 = vpack.c.bf16 %v909, %v908
    %918 = vrot.lane.b32.xlu0 %v292, 64
    %v919 = vpop.permute.xlu0 %918
    %v922 = vsel %vm733, %v910, 0
    %924 = vmatprep.subr.bf16.mxu0 0
    %925 = vmatpush1.bf16.msra.mxu0 0
    %926 = vmatprep.subr.bf16.mxu0 0
    %927 = vmatpush1.bf16.msra.mxu0 0
    %928 = vmatprep.subr.bf16.mxu0 0
    %929 = vmatpush1.bf16.msra.mxu0 0
    %930 = vmatprep.subr.bf16.mxu0 0
    %931 = vmatpush1.bf16.msra.mxu0 0
    %932 = vmatprep.subr.bf16.mxu0 0
    %933 = vmatpush1.bf16.msra.mxu0 0
    %934 = vmatprep.subr.bf16.mxu0 0
    %935 = vmatpush1.bf16.msra.mxu0 0
    %936 = vmatprep.subr.bf16.mxu0 0
    %937 = vmatpush1.bf16.msra.mxu0 0
    %938 = vmatprep.subr.bf16.mxu0 0
    %939 = vmatpush1.bf16.msra.mxu0 %v919
    %940 = vmatprep.subr.bf16.mxu0 0
    %941 = vmatpush2.bf16.msra.mxu0 0
    %942 = vmatprep.subr.bf16.mxu0 0
    %943 = vmatpush2.bf16.msra.mxu0 0
    %944 = vmatprep.subr.bf16.mxu0 0
    %945 = vmatpush2.bf16.msra.mxu0 0
    %946 = vmatprep.subr.bf16.mxu0 0
    %947 = vmatpush2.bf16.msra.mxu0 0
    %948 = vmatprep.subr.bf16.mxu0 0
    %949 = vmatpush2.bf16.msra.mxu0 0
    %950 = vmatprep.subr.bf16.mxu0 0
    %951 = vmatpush2.bf16.msra.mxu0 0
    %952 = vmatprep.subr.bf16.mxu0 0
    %953 = vmatpush2.bf16.msra.mxu0 0
    %954 = vmatprep.subr.bf16.mxu0 0
    %955 = vmatpush2.bf16.msra.mxu0 0
    %956 = vmatprep.mubr.bf16.mxu0 0
    %957 = vmatmul.mubr.bf16.gmra.mxu0 %v922
    %v958 = vpop.f32.mrf.mxu0
    %v959 = vadd.f32 0.0, %v958
    %v960 = vpop.f32.mrf.mxu0
    %v961 = vpop.f32.mrf.mxu0
    %v962 = vadd.f32 0.0, %v961
    %v963 = vpop.f32.mrf.mxu0
    %964 = vdwg.mxu0
    %965 = vrot.lane.b32.xlu0 %v293, 64
    %v966 = vpop.permute.xlu0 %965
    %v969 = vsel %vm733, %v911, 0
    %971 = vmatprep.subr.bf16.mxu0 0
    %972 = vmatpush1.bf16.msra.mxu0 0
    %973 = vmatprep.subr.bf16.mxu0 0
    %974 = vmatpush1.bf16.msra.mxu0 0
    %975 = vmatprep.subr.bf16.mxu0 0
    %976 = vmatpush1.bf16.msra.mxu0 0
    %977 = vmatprep.subr.bf16.mxu0 0
    %978 = vmatpush1.bf16.msra.mxu0 0
    %979 = vmatprep.subr.bf16.mxu0 0
    %980 = vmatpush1.bf16.msra.mxu0 0
    %981 = vmatprep.subr.bf16.mxu0 0
    %982 = vmatpush1.bf16.msra.mxu0 0
    %983 = vmatprep.subr.bf16.mxu0 0
    %984 = vmatpush1.bf16.msra.mxu0 0
    %985 = vmatprep.subr.bf16.mxu0 0
    %986 = vmatpush1.bf16.msra.mxu0 %v966
    %987 = vmatprep.subr.bf16.mxu0 0
    %988 = vmatpush2.bf16.msra.mxu0 0
    %989 = vmatprep.subr.bf16.mxu0 0
    %990 = vmatpush2.bf16.msra.mxu0 0
    %991 = vmatprep.subr.bf16.mxu0 0
    %992 = vmatpush2.bf16.msra.mxu0 0
    %993 = vmatprep.subr.bf16.mxu0 0
    %994 = vmatpush2.bf16.msra.mxu0 0
    %995 = vmatprep.subr.bf16.mxu0 0
    %996 = vmatpush2.bf16.msra.mxu0 0
    %997 = vmatprep.subr.bf16.mxu0 0
    %998 = vmatpush2.bf16.msra.mxu0 0
    %999 = vmatprep.subr.bf16.mxu0 0
    %1000 = vmatpush2.bf16.msra.mxu0 0
    %1001 = vmatprep.subr.bf16.mxu0 0
    %1002 = vmatpush2.bf16.msra.mxu0 0
    %1003 = vmatprep.mubr.bf16.mxu0 0
    %1004 = vmatmul.mubr.bf16.gmra.mxu0 %v969
    %v1005 = vpop.f32.mrf.mxu0
    %v1006 = vadd.f32 0.0, %v1005
    %v1007 = vpop.f32.mrf.mxu0
    %v1008 = vpop.f32.mrf.mxu0
    %v1009 = vadd.f32 0.0, %v1008
    %v1010 = vpop.f32.mrf.mxu0
    %1011 = vdwg.mxu0
    %1012 = vrot.lane.b32.xlu0 %v294, 64
    %v1013 = vpop.permute.xlu0 %1012
    %v1016 = vsel %vm733, %v912, 0
    %1018 = vmatprep.subr.bf16.mxu0 0
    %1019 = vmatpush1.bf16.msra.mxu0 0
    %1020 = vmatprep.subr.bf16.mxu0 0
    %1021 = vmatpush1.bf16.msra.mxu0 0
    %1022 = vmatprep.subr.bf16.mxu0 0
    %1023 = vmatpush1.bf16.msra.mxu0 0
    %1024 = vmatprep.subr.bf16.mxu0 0
    %1025 = vmatpush1.bf16.msra.mxu0 0
    %1026 = vmatprep.subr.bf16.mxu0 0
    %1027 = vmatpush1.bf16.msra.mxu0 0
    %1028 = vmatprep.subr.bf16.mxu0 0
    %1029 = vmatpush1.bf16.msra.mxu0 0
    %1030 = vmatprep.subr.bf16.mxu0 0
    %1031 = vmatpush1.bf16.msra.mxu0 0
    %1032 = vmatprep.subr.bf16.mxu0 0
    %1033 = vmatpush1.bf16.msra.mxu0 %v1013
    %1034 = vmatprep.subr.bf16.mxu0 0
    %1035 = vmatpush2.bf16.msra.mxu0 0
    %1036 = vmatprep.subr.bf16.mxu0 0
    %1037 = vmatpush2.bf16.msra.mxu0 0
    %1038 = vmatprep.subr.bf16.mxu0 0
    %1039 = vmatpush2.bf16.msra.mxu0 0
    %1040 = vmatprep.subr.bf16.mxu0 0
    %1041 = vmatpush2.bf16.msra.mxu0 0
    %1042 = vmatprep.subr.bf16.mxu0 0
    %1043 = vmatpush2.bf16.msra.mxu0 0
    %1044 = vmatprep.subr.bf16.mxu0 0
    %1045 = vmatpush2.bf16.msra.mxu0 0
    %1046 = vmatprep.subr.bf16.mxu0 0
    %1047 = vmatpush2.bf16.msra.mxu0 0
    %1048 = vmatprep.subr.bf16.mxu0 0
    %1049 = vmatpush2.bf16.msra.mxu0 0
    %1050 = vmatprep.mubr.bf16.mxu0 0
    %1051 = vmatmul.mubr.bf16.gmra.mxu0 %v1016
    %v1052 = vpop.f32.mrf.mxu0
    %v1053 = vadd.f32 0.0, %v1052
    %v1054 = vpop.f32.mrf.mxu0
    %v1055 = vpop.f32.mrf.mxu0
    %v1056 = vadd.f32 0.0, %v1055
    %v1057 = vpop.f32.mrf.mxu0
    %1058 = vdwg.mxu0
    %1059 = vrot.lane.b32.xlu0 %v295, 64
    %v1060 = vpop.permute.xlu0 %1059
    %v1063 = vsel %vm733, %v913, 0
    %1065 = vmatprep.subr.bf16.mxu0 0
    %1066 = vmatpush1.bf16.msra.mxu0 0
    %1067 = vmatprep.subr.bf16.mxu0 0
    %1068 = vmatpush1.bf16.msra.mxu0 0
    %1069 = vmatprep.subr.bf16.mxu0 0
    %1070 = vmatpush1.bf16.msra.mxu0 0
    %1071 = vmatprep.subr.bf16.mxu0 0
    %1072 = vmatpush1.bf16.msra.mxu0 0
    %1073 = vmatprep.subr.bf16.mxu0 0
    %1074 = vmatpush1.bf16.msra.mxu0 0
    %1075 = vmatprep.subr.bf16.mxu0 0
    %1076 = vmatpush1.bf16.msra.mxu0 0
    %1077 = vmatprep.subr.bf16.mxu0 0
    %1078 = vmatpush1.bf16.msra.mxu0 0
    %1079 = vmatprep.subr.bf16.mxu0 0
    %1080 = vmatpush1.bf16.msra.mxu0 %v1060
    %1081 = vmatprep.subr.bf16.mxu0 0
    %1082 = vmatpush2.bf16.msra.mxu0 0
    %1083 = vmatprep.subr.bf16.mxu0 0
    %1084 = vmatpush2.bf16.msra.mxu0 0
    %1085 = vmatprep.subr.bf16.mxu0 0
    %1086 = vmatpush2.bf16.msra.mxu0 0
    %1087 = vmatprep.subr.bf16.mxu0 0
    %1088 = vmatpush2.bf16.msra.mxu0 0
    %1089 = vmatprep.subr.bf16.mxu0 0
    %1090 = vmatpush2.bf16.msra.mxu0 0
    %1091 = vmatprep.subr.bf16.mxu0 0
    %1092 = vmatpush2.bf16.msra.mxu0 0
    %1093 = vmatprep.subr.bf16.mxu0 0
    %1094 = vmatpush2.bf16.msra.mxu0 0
    %1095 = vmatprep.subr.bf16.mxu0 0
    %1096 = vmatpush2.bf16.msra.mxu0 0
    %1097 = vmatprep.mubr.bf16.mxu0 0
    %1098 = vmatmul.mubr.bf16.gmra.mxu0 %v1063
    %v1099 = vpop.f32.mrf.mxu0
    %v1100 = vadd.f32 0.0, %v1099
    %v1101 = vpop.f32.mrf.mxu0
    %v1102 = vpop.f32.mrf.mxu0
    %v1103 = vadd.f32 0.0, %v1102
    %v1104 = vpop.f32.mrf.mxu0
    %1105 = vdwg.mxu0
    %1106 = vrot.lane.b32.xlu0 %v296, 64
    %v1107 = vpop.permute.xlu0 %1106
    %v1110 = vsel %vm733, %v914, 0
    %1112 = vmatprep.subr.bf16.mxu0 0
    %1113 = vmatpush1.bf16.msra.mxu0 0
    %1114 = vmatprep.subr.bf16.mxu0 0
    %1115 = vmatpush1.bf16.msra.mxu0 0
    %1116 = vmatprep.subr.bf16.mxu0 0
    %1117 = vmatpush1.bf16.msra.mxu0 0
    %1118 = vmatprep.subr.bf16.mxu0 0
    %1119 = vmatpush1.bf16.msra.mxu0 0
    %1120 = vmatprep.subr.bf16.mxu0 0
    %1121 = vmatpush1.bf16.msra.mxu0 0
    %1122 = vmatprep.subr.bf16.mxu0 0
    %1123 = vmatpush1.bf16.msra.mxu0 0
    %1124 = vmatprep.subr.bf16.mxu0 0
    %1125 = vmatpush1.bf16.msra.mxu0 0
    %1126 = vmatprep.subr.bf16.mxu0 0
    %1127 = vmatpush1.bf16.msra.mxu0 %v1107
    %1128 = vmatprep.subr.bf16.mxu0 0
    %1129 = vmatpush2.bf16.msra.mxu0 0
    %1130 = vmatprep.subr.bf16.mxu0 0
    %1131 = vmatpush2.bf16.msra.mxu0 0
    %1132 = vmatprep.subr.bf16.mxu0 0
    %1133 = vmatpush2.bf16.msra.mxu0 0
    %1134 = vmatprep.subr.bf16.mxu0 0
    %1135 = vmatpush2.bf16.msra.mxu0 0
    %1136 = vmatprep.subr.bf16.mxu0 0
    %1137 = vmatpush2.bf16.msra.mxu0 0
    %1138 = vmatprep.subr.bf16.mxu0 0
    %1139 = vmatpush2.bf16.msra.mxu0 0
    %1140 = vmatprep.subr.bf16.mxu0 0
    %1141 = vmatpush2.bf16.msra.mxu0 0
    %1142 = vmatprep.subr.bf16.mxu0 0
    %1143 = vmatpush2.bf16.msra.mxu0 0
    %1144 = vmatprep.mubr.bf16.mxu0 0
    %1145 = vmatmul.mubr.bf16.gmra.mxu0 %v1110
    %v1146 = vpop.f32.mrf.mxu0
    %v1147 = vadd.f32 0.0, %v1146
    %v1148 = vpop.f32.mrf.mxu0
    %v1149 = vpop.f32.mrf.mxu0
    %v1150 = vadd.f32 0.0, %v1149
    %v1151 = vpop.f32.mrf.mxu0
    %1152 = vdwg.mxu0
    %1153 = vrot.lane.b32.xlu0 %v297, 64
    %v1154 = vpop.permute.xlu0 %1153
    %v1157 = vsel %vm733, %v915, 0
    %1159 = vmatprep.subr.bf16.mxu0 0
    %1160 = vmatpush1.bf16.msra.mxu0 0
    %1161 = vmatprep.subr.bf16.mxu0 0
    %1162 = vmatpush1.bf16.msra.mxu0 0
    %1163 = vmatprep.subr.bf16.mxu0 0
    %1164 = vmatpush1.bf16.msra.mxu0 0
    %1165 = vmatprep.subr.bf16.mxu0 0
    %1166 = vmatpush1.bf16.msra.mxu0 0
    %1167 = vmatprep.subr.bf16.mxu0 0
    %1168 = vmatpush1.bf16.msra.mxu0 0
    %1169 = vmatprep.subr.bf16.mxu0 0
    %1170 = vmatpush1.bf16.msra.mxu0 0
    %1171 = vmatprep.subr.bf16.mxu0 0
    %1172 = vmatpush1.bf16.msra.mxu0 0
    %1173 = vmatprep.subr.bf16.mxu0 0
    %1174 = vmatpush1.bf16.msra.mxu0 %v1154
    %1175 = vmatprep.subr.bf16.mxu0 0
    %1176 = vmatpush2.bf16.msra.mxu0 0
    %1177 = vmatprep.subr.bf16.mxu0 0
    %1178 = vmatpush2.bf16.msra.mxu0 0
    %1179 = vmatprep.subr.bf16.mxu0 0
    %1180 = vmatpush2.bf16.msra.mxu0 0
    %1181 = vmatprep.subr.bf16.mxu0 0
    %1182 = vmatpush2.bf16.msra.mxu0 0
    %1183 = vmatprep.subr.bf16.mxu0 0
    %1184 = vmatpush2.bf16.msra.mxu0 0
    %1185 = vmatprep.subr.bf16.mxu0 0
    %1186 = vmatpush2.bf16.msra.mxu0 0
    %1187 = vmatprep.subr.bf16.mxu0 0
    %1188 = vmatpush2.bf16.msra.mxu0 0
    %1189 = vmatprep.subr.bf16.mxu0 0
    %1190 = vmatpush2.bf16.msra.mxu0 0
    %1191 = vmatprep.mubr.bf16.mxu0 0
    %1192 = vmatmul.mubr.bf16.gmra.mxu0 %v1157
    %v1193 = vpop.f32.mrf.mxu0
    %v1194 = vadd.f32 0.0, %v1193
    %v1195 = vpop.f32.mrf.mxu0
    %v1196 = vpop.f32.mrf.mxu0
    %v1197 = vadd.f32 0.0, %v1196
    %v1198 = vpop.f32.mrf.mxu0
    %1199 = vdwg.mxu0
    %1200 = vrot.lane.b32.xlu0 %v298, 64
    %v1201 = vpop.permute.xlu0 %1200
    %v1204 = vsel %vm733, %v916, 0
    %1206 = vmatprep.subr.bf16.mxu0 0
    %1207 = vmatpush1.bf16.msra.mxu0 0
    %1208 = vmatprep.subr.bf16.mxu0 0
    %1209 = vmatpush1.bf16.msra.mxu0 0
    %1210 = vmatprep.subr.bf16.mxu0 0
    %1211 = vmatpush1.bf16.msra.mxu0 0
    %1212 = vmatprep.subr.bf16.mxu0 0
    %1213 = vmatpush1.bf16.msra.mxu0 0
    %1214 = vmatprep.subr.bf16.mxu0 0
    %1215 = vmatpush1.bf16.msra.mxu0 0
    %1216 = vmatprep.subr.bf16.mxu0 0
    %1217 = vmatpush1.bf16.msra.mxu0 0
    %1218 = vmatprep.subr.bf16.mxu0 0
    %1219 = vmatpush1.bf16.msra.mxu0 0
    %1220 = vmatprep.subr.bf16.mxu0 0
    %1221 = vmatpush1.bf16.msra.mxu0 %v1201
    %1222 = vmatprep.subr.bf16.mxu0 0
    %1223 = vmatpush2.bf16.msra.mxu0 0
    %1224 = vmatprep.subr.bf16.mxu0 0
    %1225 = vmatpush2.bf16.msra.mxu0 0
    %1226 = vmatprep.subr.bf16.mxu0 0
    %1227 = vmatpush2.bf16.msra.mxu0 0
    %1228 = vmatprep.subr.bf16.mxu0 0
    %1229 = vmatpush2.bf16.msra.mxu0 0
    %1230 = vmatprep.subr.bf16.mxu0 0
    %1231 = vmatpush2.bf16.msra.mxu0 0
    %1232 = vmatprep.subr.bf16.mxu0 0
    %1233 = vmatpush2.bf16.msra.mxu0 0
    %1234 = vmatprep.subr.bf16.mxu0 0
    %1235 = vmatpush2.bf16.msra.mxu0 0
    %1236 = vmatprep.subr.bf16.mxu0 0
    %1237 = vmatpush2.bf16.msra.mxu0 0
    %1238 = vmatprep.mubr.bf16.mxu0 0
    %1239 = vmatmul.mubr.bf16.gmra.mxu0 %v1204
    %v1240 = vpop.f32.mrf.mxu0
    %v1241 = vadd.f32 0.0, %v1240
    %v1242 = vpop.f32.mrf.mxu0
    %v1243 = vpop.f32.mrf.mxu0
    %v1244 = vadd.f32 0.0, %v1243
    %v1245 = vpop.f32.mrf.mxu0
    %1246 = vdwg.mxu0
    %1247 = vrot.lane.b32.xlu0 %v299, 64
    %v1248 = vpop.permute.xlu0 %1247
    %v1251 = vsel %vm733, %v917, 0
    %1253 = vmatprep.subr.bf16.mxu0 0
    %1254 = vmatpush1.bf16.msra.mxu0 0
    %1255 = vmatprep.subr.bf16.mxu0 0
    %1256 = vmatpush1.bf16.msra.mxu0 0
    %1257 = vmatprep.subr.bf16.mxu0 0
    %1258 = vmatpush1.bf16.msra.mxu0 0
    %1259 = vmatprep.subr.bf16.mxu0 0
    %1260 = vmatpush1.bf16.msra.mxu0 0
    %1261 = vmatprep.subr.bf16.mxu0 0
    %1262 = vmatpush1.bf16.msra.mxu0 0
    %1263 = vmatprep.subr.bf16.mxu0 0
    %1264 = vmatpush1.bf16.msra.mxu0 0
    %1265 = vmatprep.subr.bf16.mxu0 0
    %1266 = vmatpush1.bf16.msra.mxu0 0
    %1267 = vmatprep.subr.bf16.mxu0 0
    %1268 = vmatpush1.bf16.msra.mxu0 %v1248
    %1269 = vmatprep.subr.bf16.mxu0 0
    %1270 = vmatpush2.bf16.msra.mxu0 0
    %1271 = vmatprep.subr.bf16.mxu0 0
    %1272 = vmatpush2.bf16.msra.mxu0 0
    %1273 = vmatprep.subr.bf16.mxu0 0
    %1274 = vmatpush2.bf16.msra.mxu0 0
    %1275 = vmatprep.subr.bf16.mxu0 0
    %1276 = vmatpush2.bf16.msra.mxu0 0
    %1277 = vmatprep.subr.bf16.mxu0 0
    %1278 = vmatpush2.bf16.msra.mxu0 0
    %1279 = vmatprep.subr.bf16.mxu0 0
    %1280 = vmatpush2.bf16.msra.mxu0 0
    %1281 = vmatprep.subr.bf16.mxu0 0
    %1282 = vmatpush2.bf16.msra.mxu0 0
    %1283 = vmatprep.subr.bf16.mxu0 0
    %1284 = vmatpush2.bf16.msra.mxu0 0
    %1285 = vmatprep.mubr.bf16.mxu0 0
    %1286 = vmatmul.mubr.bf16.gmra.mxu0 %v1251
    %v1287 = vpop.f32.mrf.mxu0
    %v1288 = vadd.f32 0.0, %v1287
    %v1289 = vpop.f32.mrf.mxu0
    %v1290 = vpop.f32.mrf.mxu0
    %v1291 = vadd.f32 0.0, %v1290
    %v1292 = vpop.f32.mrf.mxu0
    %1293 = vdwg.mxu0
    %1298 = vrot.lane.b32.xlu0 %v1053, 8
    %v1299 = vpop.permute.xlu0 %1298
    %1300 = vrot.lane.b32.xlu0 %v1056, 8
    %v1301 = vpop.permute.xlu0 %1300
    %1302 = vrot.lane.b32.xlu0 %v1100, 8
    %v1303 = vpop.permute.xlu0 %1302
    %1304 = vrot.lane.b32.xlu0 %v1103, 8
    %v1305 = vpop.permute.xlu0 %1304
    %1314 = vrot.lane.b32.xlu0 %v1147, 16
    %v1315 = vpop.permute.xlu0 %1314
    %1316 = vrot.lane.b32.xlu0 %v1150, 16
    %v1317 = vpop.permute.xlu0 %1316
    %1318 = vrot.lane.b32.xlu0 %v1194, 16
    %v1319 = vpop.permute.xlu0 %1318
    %1320 = vrot.lane.b32.xlu0 %v1197, 16
    %v1321 = vpop.permute.xlu0 %1320
    %1330 = vrot.lane.b32.xlu0 %v1241, 24
    %v1331 = vpop.permute.xlu0 %1330
    %1332 = vrot.lane.b32.xlu0 %v1244, 24
    %v1333 = vpop.permute.xlu0 %1332
    %1334 = vrot.lane.b32.xlu0 %v1288, 24
    %v1335 = vpop.permute.xlu0 %1334
    %1336 = vrot.lane.b32.xlu0 %v1291, 24
    %v1337 = vpop.permute.xlu0 %1336
    %v1342 = vsel %vm303, %v959, %v1299
    %v1343 = vsel %vm303, %v962, %v1301
    %v1344 = vsel %vm303, %v1006, %v1303
    %v1345 = vsel %vm303, %v1009, %v1305
    %v1346 = vsel %vm733, %v1342, %v1315
    %v1347 = vsel %vm733, %v1343, %v1317
    %v1348 = vsel %vm733, %v1344, %v1319
    %v1349 = vsel %vm733, %v1345, %v1321
    %vm1350 = vcmask 195584
    %v1351 = vsel %vm1350, %v1346, %v1331
    %v1352 = vsel %vm1350, %v1347, %v1333
    %v1353 = vsel %vm1350, %v1348, %v1335
    %v1354 = vsel %vm1350, %v1349, %v1337
    %v1355 = vpack.c.bf16 %v1352, %v1351
    %v1356 = vpack.c.bf16 %v1354, %v1353
    %v1357 = vld [vmem:[%s7] sm:$0xff]
    %v1358 = vld [vmem:[%s7 + $0x8] sm:$0xff]
    %v1359 = vld [vmem:[%s7 + $0x10] sm:$0xff]
    %v1360 = vld [vmem:[%s7 + $0x18] sm:$0xff]
    %v1361 = vpack.c.bf16 %v1358, %v1357
    %v1362 = vpack.c.bf16 %v1360, %v1359
    %v1363 = vld [vmem:[%s8] sm:$0x1]
    %v1365 = vlaneseq
    %v1366 = vshrl.u32 %v1365, 7
    %v1367 = vsub.s32 0, %v1366
    %v1368 = vrot.slane %v1363, %v1367
    %v1371 = vsel %vm83, %v1355, 0
    %v1374 = vsel %vm83, %v1356, 0
    %1376 = vmatprep.subr.bf16.mxu0 0
    %1377 = vmatpush1.bf16.msra.mxu0 0
    %1378 = vmatprep.subr.bf16.mxu0 0
    %1379 = vmatpush1.bf16.msra.mxu0 0
    %1380 = vmatprep.subr.bf16.mxu0 0
    %1381 = vmatpush1.bf16.msra.mxu0 0
    %1382 = vmatprep.subr.bf16.mxu0 0
    %1383 = vmatpush1.bf16.msra.mxu0 0
    %1384 = vmatprep.subr.bf16.mxu0 0
    %1385 = vmatpush1.bf16.msra.mxu0 0
    %1386 = vmatprep.subr.bf16.mxu0 0
    %1387 = vmatpush1.bf16.msra.mxu0 0
    %1388 = vmatprep.subr.bf16.mxu0 0
    %1389 = vmatpush1.bf16.msra.mxu0 %v1362
    %1390 = vmatprep.subr.bf16.mxu0 0
    %1391 = vmatpush1.bf16.msra.mxu0 %v1361
    %1392 = vmatprep.subr.bf16.mxu0 0
    %1393 = vmatpush2.bf16.msra.mxu0 0
    %1394 = vmatprep.subr.bf16.mxu0 0
    %1395 = vmatpush2.bf16.msra.mxu0 0
    %1396 = vmatprep.subr.bf16.mxu0 0
    %1397 = vmatpush2.bf16.msra.mxu0 0
    %1398 = vmatprep.subr.bf16.mxu0 0
    %1399 = vmatpush2.bf16.msra.mxu0 0
    %1400 = vmatprep.subr.bf16.mxu0 0
    %1401 = vmatpush2.bf16.msra.mxu0 0
    %1402 = vmatprep.subr.bf16.mxu0 0
    %1403 = vmatpush2.bf16.msra.mxu0 0
    %1404 = vmatprep.subr.bf16.mxu0 0
    %1405 = vmatpush2.bf16.msra.mxu0 0
    %1406 = vmatprep.subr.bf16.mxu0 0
    %1407 = vmatpush2.bf16.msra.mxu0 0
    %1408 = vmatprep.mubr.bf16.mxu0 0
    %1409 = vmatmul.mubr.bf16.gmra.mxu0 %v1371
    %v1410 = vpop.f32.mrf.mxu0
    %v1411 = vadd.f32 %v1368, %v1410
    %v1412 = vpop.f32.mrf.mxu0
    %v1413 = vpop.f32.mrf.mxu0
    %v1414 = vadd.f32 %v1368, %v1413
    %v1415 = vpop.f32.mrf.mxu0
    %1416 = vmatprep.mubr.bf16.mxu0 0
    %1417 = vmatmul.mubr.bf16.gmra.mxu0 %v1374
    %v1418 = vpop.f32.mrf.mxu0
    %v1419 = vadd.f32 %v1368, %v1418
    %v1420 = vpop.f32.mrf.mxu0
    %v1421 = vpop.f32.mrf.mxu0
    %v1422 = vadd.f32 %v1368, %v1421
    %v1423 = vpop.f32.mrf.mxu0
    %1424 = vdwg.mxu0
    %v1425 = vadd.f32 %v1411, %v174
    %v1426 = vadd.f32 %v1414, %v175
    %v1427 = vadd.f32 %v1419, %v176
    %v1428 = vadd.f32 %v1422, %v177
    %v1429 = vld [vmem:[%s9] sm:$0x1]
    %v1430 = vld [vmem:[%s10] sm:$0x1]
    %v1431 = vsel %vm83, %v1425, 0.0
    %1432 = vadd.xlane.f32.xlu0 %v1431
    %v1433 = vpop.xlane.xlu0 %1432
    %v1434 = vsel %vm83, %v1426, 0.0
    %1435 = vadd.xlane.f32.xlu0 %v1434
    %v1436 = vpop.xlane.xlu0 %1435
    %v1437 = vsel %vm83, %v1427, 0.0
    %1438 = vadd.xlane.f32.xlu0 %v1437
    %v1439 = vpop.xlane.xlu0 %1438
    %v1440 = vsel %vm83, %v1428, 0.0
    %1441 = vadd.xlane.f32.xlu0 %v1440
    %v1442 = vpop.xlane.xlu0 %1441
    %v1443 = vrcp.pop 32.0
    %v1444 = vmul.f32 %v1433, %v1443
    %v1445 = vmul.f32 %v1436, %v1443
    %v1446 = vmul.f32 %v1439, %v1443
    %v1447 = vmul.f32 %v1442, %v1443
    %v1448 = vsub.f32 %v1425, %v1444
    %v1449 = vsub.f32 %v1426, %v1445
    %v1450 = vsub.f32 %v1427, %v1446
    %v1451 = vsub.f32 %v1428, %v1447
    %v1452 = vmul.f32 %v1448, %v1448
    %v1453 = vmul.f32 %v1449, %v1449
    %v1454 = vmul.f32 %v1450, %v1450
    %v1455 = vmul.f32 %v1451, %v1451
    %v1456 = vsel %vm83, %v1452, 0.0
    %1457 = vadd.xlane.f32.xlu0 %v1456
    %v1458 = vpop.xlane.xlu0 %1457
    %v1459 = vsel %vm83, %v1453, 0.0
    %1460 = vadd.xlane.f32.xlu0 %v1459
    %v1461 = vpop.xlane.xlu0 %1460
    %v1462 = vsel %vm83, %v1454, 0.0
    %1463 = vadd.xlane.f32.xlu0 %v1462
    %v1464 = vpop.xlane.xlu0 %1463
    %v1465 = vsel %vm83, %v1455, 0.0
    %1466 = vadd.xlane.f32.xlu0 %v1465
    %v1467 = vpop.xlane.xlu0 %1466
    %v1468 = vmul.f32 %v1458, %v1443
    %v1469 = vmul.f32 %v1461, %v1443
    %v1470 = vmul.f32 %v1464, %v1443
    %v1471 = vmul.f32 %v1467, %v1443
    %v1472 = vadd.f32 %v1468, 1e-06
    %v1473 = vadd.f32 %v1469, 1e-06
    %v1474 = vadd.f32 %v1470, 1e-06
    %v1475 = vadd.f32 %v1471, 1e-06
    %v1476 = vrsqrt.pop %v1472
    %v1477 = vrsqrt.pop %v1473
    %v1478 = vrsqrt.pop %v1474
    %v1479 = vrsqrt.pop %v1475
    %v1480 = vmul.f32 %v1448, %v1476
    %v1481 = vmul.f32 %v1449, %v1477
    %v1482 = vmul.f32 %v1450, %v1478
    %v1483 = vmul.f32 %v1451, %v1479
    %v1485 = vlaneseq
    %v1486 = vshrl.u32 %v1485, 7
    %v1487 = vsub.s32 0, %v1486
    %v1488 = vrot.slane %v1429, %v1487
    %v1490 = vmul.f32 %v1480, %v1488
    %v1491 = vmul.f32 %v1481, %v1488
    %v1492 = vmul.f32 %v1482, %v1488
    %v1493 = vmul.f32 %v1483, %v1488
    %v1495 = vlaneseq
    %v1496 = vshrl.u32 %v1495, 7
    %v1497 = vsub.s32 0, %v1496
    %v1498 = vrot.slane %v1430, %v1497
    %v1500 = vadd.f32 %v1490, %v1498
    %v1501 = vadd.f32 %v1491, %v1498
    %v1502 = vadd.f32 %v1492, %v1498
    %v1503 = vadd.f32 %v1493, %v1498
    %v1504 = vpack.c.bf16 %v1501, %v1500
    %v1505 = vpack.c.bf16 %v1503, %v1502
    %v1506 = vld [vmem:[%s11] sm:$0xff]
    %v1507 = vld [vmem:[%s11 + $0x8] sm:$0xff]
    %v1508 = vld [vmem:[%s11 + $0x10] sm:$0xff]
    %v1509 = vld [vmem:[%s11 + $0x18] sm:$0xff]
    %v1510 = vpack.c.bf16 %v1507, %v1506
    %v1511 = vpack.c.bf16 %v1509, %v1508
    %v1512 = vld [vmem:[%s12] sm:$0x1]
    %v1514 = vlaneseq
    %v1515 = vshrl.u32 %v1514, 7
    %v1516 = vsub.s32 0, %v1515
    %v1517 = vrot.slane %v1512, %v1516
    %v1520 = vsel %vm83, %v1504, 0
    %v1523 = vsel %vm83, %v1505, 0
    %1525 = vmatprep.subr.bf16.mxu0 0
    %1526 = vmatpush1.bf16.msra.mxu0 0
    %1527 = vmatprep.subr.bf16.mxu0 0
    %1528 = vmatpush1.bf16.msra.mxu0 0
    %1529 = vmatprep.subr.bf16.mxu0 0
    %1530 = vmatpush1.bf16.msra.mxu0 0
    %1531 = vmatprep.subr.bf16.mxu0 0
    %1532 = vmatpush1.bf16.msra.mxu0 0
    %1533 = vmatprep.subr.bf16.mxu0 0
    %1534 = vmatpush1.bf16.msra.mxu0 0
    %1535 = vmatprep.subr.bf16.mxu0 0
    %1536 = vmatpush1.bf16.msra.mxu0 0
    %1537 = vmatprep.subr.bf16.mxu0 0
    %1538 = vmatpush1.bf16.msra.mxu0 %v1511
    %1539 = vmatprep.subr.bf16.mxu0 0
    %1540 = vmatpush1.bf16.msra.mxu0 %v1510
    %1541 = vmatprep.subr.bf16.mxu0 0
    %1542 = vmatpush2.bf16.msra.mxu0 0
    %1543 = vmatprep.subr.bf16.mxu0 0
    %1544 = vmatpush2.bf16.msra.mxu0 0
    %1545 = vmatprep.subr.bf16.mxu0 0
    %1546 = vmatpush2.bf16.msra.mxu0 0
    %1547 = vmatprep.subr.bf16.mxu0 0
    %1548 = vmatpush2.bf16.msra.mxu0 0
    %1549 = vmatprep.subr.bf16.mxu0 0
    %1550 = vmatpush2.bf16.msra.mxu0 0
    %1551 = vmatprep.subr.bf16.mxu0 0
    %1552 = vmatpush2.bf16.msra.mxu0 0
    %1553 = vmatprep.subr.bf16.mxu0 0
    %1554 = vmatpush2.bf16.msra.mxu0 0
    %1555 = vmatprep.subr.bf16.mxu0 0
    %1556 = vmatpush2.bf16.msra.mxu0 0
    %1557 = vmatprep.mubr.bf16.mxu0 0
    %1558 = vmatmul.mubr.bf16.gmra.mxu0 %v1520
    %v1559 = vpop.f32.mrf.mxu0
    %v1560 = vadd.f32 %v1517, %v1559
    %v1561 = vpop.f32.mrf.mxu0
    %v1562 = vpop.f32.mrf.mxu0
    %v1563 = vadd.f32 %v1517, %v1562
    %v1564 = vpop.f32.mrf.mxu0
    %1565 = vmatprep.mubr.bf16.mxu0 0
    %1566 = vmatmul.mubr.bf16.gmra.mxu0 %v1523
    %v1567 = vpop.f32.mrf.mxu0
    %v1568 = vadd.f32 %v1517, %v1567
    %v1569 = vpop.f32.mrf.mxu0
    %v1570 = vpop.f32.mrf.mxu0
    %v1571 = vadd.f32 %v1517, %v1570
    %v1572 = vpop.f32.mrf.mxu0
    %1573 = vdwg.mxu0
    %v1574 = vmax.f32 %v1560, 0.0
    %v1575 = vmax.f32 %v1563, 0.0
    %v1576 = vmax.f32 %v1568, 0.0
    %v1577 = vmax.f32 %v1571, 0.0
    %v1578 = vpack.c.bf16 %v1575, %v1574
    %v1579 = vpack.c.bf16 %v1577, %v1576
    %v1580 = vld [vmem:[%s13] sm:$0xff]
    %v1581 = vld [vmem:[%s13 + $0x8] sm:$0xff]
    %v1582 = vld [vmem:[%s13 + $0x10] sm:$0xff]
    %v1583 = vld [vmem:[%s13 + $0x18] sm:$0xff]
    %v1584 = vld [vmem:[%s13 + $0x20] sm:$0xff]
    %v1585 = vld [vmem:[%s13 + $0x28] sm:$0xff]
    %v1586 = vld [vmem:[%s13 + $0x30] sm:$0xff]
    %v1587 = vld [vmem:[%s13 + $0x38] sm:$0xff]
    %v1588 = vpack.c.bf16 %v1581, %v1580
    %v1589 = vpack.c.bf16 %v1583, %v1582
    %v1590 = vpack.c.bf16 %v1585, %v1584
    %v1591 = vpack.c.bf16 %v1587, %v1586
    %v1592 = vld [vmem:[%s14] sm:$0x1]
    %v1594 = vlaneseq
    %v1595 = vshrl.u32 %v1594, 7
    %v1596 = vsub.s32 0, %v1595
    %v1597 = vrot.slane %v1592, %v1596
    %vm1599 = vcmask 523264
    %v1601 = vsel %vm1599, %v1578, 0
    %v1604 = vsel %vm1599, %v1579, 0
    %1606 = vmatprep.subr.bf16.mxu0 0
    %1607 = vmatpush1.bf16.msra.mxu0 0
    %1608 = vmatprep.subr.bf16.mxu0 0
    %1609 = vmatpush1.bf16.msra.mxu0 0
    %1610 = vmatprep.subr.bf16.mxu0 0
    %1611 = vmatpush1.bf16.msra.mxu0 0
    %1612 = vmatprep.subr.bf16.mxu0 0
    %1613 = vmatpush1.bf16.msra.mxu0 0
    %1614 = vmatprep.subr.bf16.mxu0 0
    %1615 = vmatpush1.bf16.msra.mxu0 %v1591
    %1616 = vmatprep.subr.bf16.mxu0 0
    %1617 = vmatpush1.bf16.msra.mxu0 %v1590
    %1618 = vmatprep.subr.bf16.mxu0 0
    %1619 = vmatpush1.bf16.msra.mxu0 %v1589
    %1620 = vmatprep.subr.bf16.mxu0 0
    %1621 = vmatpush1.bf16.msra.mxu0 %v1588
    %1622 = vmatprep.subr.bf16.mxu0 0
    %1623 = vmatpush2.bf16.msra.mxu0 0
    %1624 = vmatprep.subr.bf16.mxu0 0
    %1625 = vmatpush2.bf16.msra.mxu0 0
    %1626 = vmatprep.subr.bf16.mxu0 0
    %1627 = vmatpush2.bf16.msra.mxu0 0
    %1628 = vmatprep.subr.bf16.mxu0 0
    %1629 = vmatpush2.bf16.msra.mxu0 0
    %1630 = vmatprep.subr.bf16.mxu0 0
    %1631 = vmatpush2.bf16.msra.mxu0 0
    %1632 = vmatprep.subr.bf16.mxu0 0
    %1633 = vmatpush2.bf16.msra.mxu0 0
    %1634 = vmatprep.subr.bf16.mxu0 0
    %1635 = vmatpush2.bf16.msra.mxu0 0
    %1636 = vmatprep.subr.bf16.mxu0 0
    %1637 = vmatpush2.bf16.msra.mxu0 0
    %1638 = vmatprep.mubr.bf16.mxu0 0
    %1639 = vmatmul.mubr.bf16.gmra.mxu0 %v1601
    %v1640 = vpop.f32.mrf.mxu0
    %v1641 = vadd.f32 %v1597, %v1640
    %v1642 = vpop.f32.mrf.mxu0
    %v1643 = vpop.f32.mrf.mxu0
    %v1644 = vadd.f32 %v1597, %v1643
    %v1645 = vpop.f32.mrf.mxu0
    %1646 = vmatprep.mubr.bf16.mxu0 0
    %1647 = vmatmul.mubr.bf16.gmra.mxu0 %v1604
    %v1648 = vpop.f32.mrf.mxu0
    %v1649 = vadd.f32 %v1597, %v1648
    %v1650 = vpop.f32.mrf.mxu0
    %v1651 = vpop.f32.mrf.mxu0
    %v1652 = vadd.f32 %v1597, %v1651
    %v1653 = vpop.f32.mrf.mxu0
    %1654 = vdwg.mxu0
    %v1655 = vadd.f32 %v1641, %v1500
    %v1656 = vadd.f32 %v1644, %v1501
    %v1657 = vadd.f32 %v1649, %v1502
    %v1658 = vadd.f32 %v1652, %v1503
    %v1659 = vld [vmem:[%s15] sm:$0x1]
    %v1660 = vld [vmem:[%s16] sm:$0x1]
    %v1661 = vsel %vm83, %v1655, 0.0
    %1662 = vadd.xlane.f32.xlu0 %v1661
    %v1663 = vpop.xlane.xlu0 %1662
    %v1664 = vsel %vm83, %v1656, 0.0
    %1665 = vadd.xlane.f32.xlu0 %v1664
    %v1666 = vpop.xlane.xlu0 %1665
    %v1667 = vsel %vm83, %v1657, 0.0
    %1668 = vadd.xlane.f32.xlu0 %v1667
    %v1669 = vpop.xlane.xlu0 %1668
    %v1670 = vsel %vm83, %v1658, 0.0
    %1671 = vadd.xlane.f32.xlu0 %v1670
    %v1672 = vpop.xlane.xlu0 %1671
    %v1673 = vmul.f32 %v1663, %v1443
    %v1674 = vmul.f32 %v1666, %v1443
    %v1675 = vmul.f32 %v1669, %v1443
    %v1676 = vmul.f32 %v1672, %v1443
    %v1677 = vsub.f32 %v1655, %v1673
    %v1678 = vsub.f32 %v1656, %v1674
    %v1679 = vsub.f32 %v1657, %v1675
    %v1680 = vsub.f32 %v1658, %v1676
    %v1681 = vmul.f32 %v1677, %v1677
    %v1682 = vmul.f32 %v1678, %v1678
    %v1683 = vmul.f32 %v1679, %v1679
    %v1684 = vmul.f32 %v1680, %v1680
    %v1685 = vsel %vm83, %v1681, 0.0
    %1686 = vadd.xlane.f32.xlu0 %v1685
    %v1687 = vpop.xlane.xlu0 %1686
    %v1688 = vsel %vm83, %v1682, 0.0
    %1689 = vadd.xlane.f32.xlu0 %v1688
    %v1690 = vpop.xlane.xlu0 %1689
    %v1691 = vsel %vm83, %v1683, 0.0
    %1692 = vadd.xlane.f32.xlu0 %v1691
    %v1693 = vpop.xlane.xlu0 %1692
    %v1694 = vsel %vm83, %v1684, 0.0
    %1695 = vadd.xlane.f32.xlu0 %v1694
    %v1696 = vpop.xlane.xlu0 %1695
    %v1697 = vmul.f32 %v1687, %v1443
    %v1698 = vmul.f32 %v1690, %v1443
    %v1699 = vmul.f32 %v1693, %v1443
    %v1700 = vmul.f32 %v1696, %v1443
    %v1701 = vadd.f32 %v1697, 1e-06
    %v1702 = vadd.f32 %v1698, 1e-06
    %v1703 = vadd.f32 %v1699, 1e-06
    %v1704 = vadd.f32 %v1700, 1e-06
    %v1705 = vrsqrt.pop %v1701
    %v1706 = vrsqrt.pop %v1702
    %v1707 = vrsqrt.pop %v1703
    %v1708 = vrsqrt.pop %v1704
    %v1709 = vmul.f32 %v1677, %v1705
    %v1710 = vmul.f32 %v1678, %v1706
    %v1711 = vmul.f32 %v1679, %v1707
    %v1712 = vmul.f32 %v1680, %v1708
    %v1714 = vlaneseq
    %v1715 = vshrl.u32 %v1714, 7
    %v1716 = vsub.s32 0, %v1715
    %v1717 = vrot.slane %v1659, %v1716
    %v1719 = vmul.f32 %v1709, %v1717
    %v1720 = vmul.f32 %v1710, %v1717
    %v1721 = vmul.f32 %v1711, %v1717
    %v1722 = vmul.f32 %v1712, %v1717
    %v1724 = vlaneseq
    %v1725 = vshrl.u32 %v1724, 7
    %v1726 = vsub.s32 0, %v1725
    %v1727 = vrot.slane %v1660, %v1726
    %v1729 = vadd.f32 %v1719, %v1727
    %v1730 = vadd.f32 %v1720, %v1727
    %v1731 = vadd.f32 %v1721, %v1727
    %v1732 = vadd.f32 %v1722, %v1727
    %v1733 = vpack.c.bf16 %v1730, %v1729
    %v1734 = vpack.c.bf16 %v1732, %v1731
    %s1735 = scalar_lea.vmem %s5, 32
    %v1736 = vld [vmem:[%s1735] sm:$0xff]
    %v1737 = vld [vmem:[%s1735 + $0x8] sm:$0xff]
    %v1738 = vld [vmem:[%s1735 + $0x10] sm:$0xff]
    %v1739 = vld [vmem:[%s1735 + $0x18] sm:$0xff]
    %v1740 = vpack.c.bf16 %v1737, %v1736
    %v1741 = vpack.c.bf16 %v1739, %v1738
    %s1742 = scalar_lea.vmem %s6, 1
    %v1743 = vld [vmem:[%s1742] sm:$0x1]
    %v1745 = vlaneseq
    %v1746 = vshrl.u32 %v1745, 7
    %v1747 = vsub.s32 0, %v1746
    %v1748 = vrot.slane %v1743, %v1747
    %v1751 = vsel %vm83, %v1733, 0
    %v1754 = vsel %vm83, %v1734, 0
    %1756 = vmatprep.subr.bf16.mxu0 0
    %1757 = vmatpush1.bf16.msra.mxu0 0
    %1758 = vmatprep.subr.bf16.mxu0 0
    %1759 = vmatpush1.bf16.msra.mxu0 0
    %1760 = vmatprep.subr.bf16.mxu0 0
    %1761 = vmatpush1.bf16.msra.mxu0 0
    %1762 = vmatprep.subr.bf16.mxu0 0
    %1763 = vmatpush1.bf16.msra.mxu0 0
    %1764 = vmatprep.subr.bf16.mxu0 0
    %1765 = vmatpush1.bf16.msra.mxu0 0
    %1766 = vmatprep.subr.bf16.mxu0 0
    %1767 = vmatpush1.bf16.msra.mxu0 0
    %1768 = vmatprep.subr.bf16.mxu0 0
    %1769 = vmatpush1.bf16.msra.mxu0 %v1741
    %1770 = vmatprep.subr.bf16.mxu0 0
    %1771 = vmatpush1.bf16.msra.mxu0 %v1740
    %1772 = vmatprep.subr.bf16.mxu0 0
    %1773 = vmatpush2.bf16.msra.mxu0 0
    %1774 = vmatprep.subr.bf16.mxu0 0
    %1775 = vmatpush2.bf16.msra.mxu0 0
    %1776 = vmatprep.subr.bf16.mxu0 0
    %1777 = vmatpush2.bf16.msra.mxu0 0
    %1778 = vmatprep.subr.bf16.mxu0 0
    %1779 = vmatpush2.bf16.msra.mxu0 0
    %1780 = vmatprep.subr.bf16.mxu0 0
    %1781 = vmatpush2.bf16.msra.mxu0 0
    %1782 = vmatprep.subr.bf16.mxu0 0
    %1783 = vmatpush2.bf16.msra.mxu0 0
    %1784 = vmatprep.subr.bf16.mxu0 0
    %1785 = vmatpush2.bf16.msra.mxu0 0
    %1786 = vmatprep.subr.bf16.mxu0 0
    %1787 = vmatpush2.bf16.msra.mxu0 0
    %1788 = vmatprep.mubr.bf16.mxu0 0
    %1789 = vmatmul.mubr.bf16.gmra.mxu0 %v1751
    %v1790 = vpop.f32.mrf.mxu0
    %v1791 = vadd.f32 %v1748, %v1790
    %v1792 = vpop.f32.mrf.mxu0
    %v1793 = vpop.f32.mrf.mxu0
    %v1794 = vadd.f32 %v1748, %v1793
    %v1795 = vpop.f32.mrf.mxu0
    %1796 = vmatprep.mubr.bf16.mxu0 0
    %1797 = vmatmul.mubr.bf16.gmra.mxu0 %v1754
    %v1798 = vpop.f32.mrf.mxu0
    %v1799 = vadd.f32 %v1748, %v1798
    %v1800 = vpop.f32.mrf.mxu0
    %v1801 = vpop.f32.mrf.mxu0
    %v1802 = vadd.f32 %v1748, %v1801
    %v1803 = vpop.f32.mrf.mxu0
    %1804 = vdwg.mxu0
    %1809 = vrot.lane.b32.xlu0 %v1791, 120
    %v1810 = vpop.permute.xlu0 %1809
    %1811 = vrot.lane.b32.xlu0 %v1794, 120
    %v1812 = vpop.permute.xlu0 %1811
    %1813 = vrot.lane.b32.xlu0 %v1799, 120
    %v1814 = vpop.permute.xlu0 %1813
    %1815 = vrot.lane.b32.xlu0 %v1802, 120
    %v1816 = vpop.permute.xlu0 %1815
    %1821 = vrot.lane.b32.xlu0 %v1791, 112
    %v1822 = vpop.permute.xlu0 %1821
    %1823 = vrot.lane.b32.xlu0 %v1794, 112
    %v1824 = vpop.permute.xlu0 %1823
    %1825 = vrot.lane.b32.xlu0 %v1799, 112
    %v1826 = vpop.permute.xlu0 %1825
    %1827 = vrot.lane.b32.xlu0 %v1802, 112
    %v1828 = vpop.permute.xlu0 %1827
    %1833 = vrot.lane.b32.xlu0 %v1791, 104
    %v1834 = vpop.permute.xlu0 %1833
    %1835 = vrot.lane.b32.xlu0 %v1794, 104
    %v1836 = vpop.permute.xlu0 %1835
    %1837 = vrot.lane.b32.xlu0 %v1799, 104
    %v1838 = vpop.permute.xlu0 %1837
    %1839 = vrot.lane.b32.xlu0 %v1802, 104
    %v1840 = vpop.permute.xlu0 %1839
    %v1845 = vpack.c.bf16 %v1794, %v1791
    %v1846 = vpack.c.bf16 %v1802, %v1799
    %v1847 = vpack.c.bf16 %v1812, %v1810
    %v1848 = vpack.c.bf16 %v1816, %v1814
    %v1849 = vpack.c.bf16 %v1824, %v1822
    %v1850 = vpack.c.bf16 %v1828, %v1826
    %v1851 = vpack.c.bf16 %v1836, %v1834
    %v1852 = vpack.c.bf16 %v1840, %v1838
    %1854 = vrot.lane.b32.xlu0 %v1845, 96
    %v1855 = vpop.permute.xlu0 %1854
    %v1857 = vsel %vm303, %v1845, 0
    %v1860 = vsel %vm303, %v1855, 0
    %1862 = vmatprep.subr.bf16.mxu0 0
    %1863 = vmatpush1.bf16.xpose.msra.mxu0 0
    %1864 = vmatprep.subr.bf16.mxu0 0
    %1865 = vmatpush1.bf16.xpose.msra.mxu0 0
    %1866 = vmatprep.subr.bf16.mxu0 0
    %1867 = vmatpush1.bf16.xpose.msra.mxu0 0
    %1868 = vmatprep.subr.bf16.mxu0 0
    %1869 = vmatpush1.bf16.xpose.msra.mxu0 0
    %1870 = vmatprep.subr.bf16.mxu0 0
    %1871 = vmatpush1.bf16.xpose.msra.mxu0 0
    %1872 = vmatprep.subr.bf16.mxu0 0
    %1873 = vmatpush1.bf16.xpose.msra.mxu0 0
    %1874 = vmatprep.subr.bf16.mxu0 0
    %1875 = vmatpush1.bf16.xpose.msra.mxu0 0
    %1876 = vmatprep.subr.bf16.mxu0 0
    %1877 = vmatpush1.bf16.xpose.msra.mxu0 %v1860
    %1878 = vmatprep.subr.bf16.mxu0 0
    %1879 = vmatpush2.bf16.xpose.msra.mxu0 0
    %1880 = vmatprep.subr.bf16.mxu0 0
    %1881 = vmatpush2.bf16.xpose.msra.mxu0 0
    %1882 = vmatprep.subr.bf16.mxu0 0
    %1883 = vmatpush2.bf16.xpose.msra.mxu0 0
    %1884 = vmatprep.subr.bf16.mxu0 0
    %1885 = vmatpush2.bf16.xpose.msra.mxu0 0
    %1886 = vmatprep.subr.bf16.mxu0 0
    %1887 = vmatpush2.bf16.xpose.msra.mxu0 0
    %1888 = vmatprep.subr.bf16.mxu0 0
    %1889 = vmatpush2.bf16.xpose.msra.mxu0 0
    %1890 = vmatprep.subr.bf16.mxu0 0
    %1891 = vmatpush2.bf16.xpose.msra.mxu0 0
    %1892 = vmatprep.subr.bf16.mxu0 0
    %1893 = vmatpush2.bf16.xpose.msra.mxu0 0
    %1894 = vmatprep.mubr.bf16.mxu0 0
    %1895 = vmatmul.mubr.bf16.gmra.mxu0 %v1857
    %v1896 = vpop.f32.mrf.mxu0
    %v1897 = vadd.f32 0.0, %v1896
    %v1898 = vpop.f32.mrf.mxu0
    %v1899 = vpop.f32.mrf.mxu0
    %v1900 = vadd.f32 0.0, %v1899
    %v1901 = vpop.f32.mrf.mxu0
    %1902 = vdwg.mxu0
    %1904 = vrot.lane.b32.xlu0 %v1846, 96
    %v1905 = vpop.permute.xlu0 %1904
    %v1907 = vsel %vm303, %v1846, 0
    %v1910 = vsel %vm303, %v1905, 0
    %1912 = vmatprep.subr.bf16.mxu0 0
    %1913 = vmatpush1.bf16.xpose.msra.mxu0 0
    %1914 = vmatprep.subr.bf16.mxu0 0
    %1915 = vmatpush1.bf16.xpose.msra.mxu0 0
    %1916 = vmatprep.subr.bf16.mxu0 0
    %1917 = vmatpush1.bf16.xpose.msra.mxu0 0
    %1918 = vmatprep.subr.bf16.mxu0 0
    %1919 = vmatpush1.bf16.xpose.msra.mxu0 0
    %1920 = vmatprep.subr.bf16.mxu0 0
    %1921 = vmatpush1.bf16.xpose.msra.mxu0 0
    %1922 = vmatprep.subr.bf16.mxu0 0
    %1923 = vmatpush1.bf16.xpose.msra.mxu0 0
    %1924 = vmatprep.subr.bf16.mxu0 0
    %1925 = vmatpush1.bf16.xpose.msra.mxu0 0
    %1926 = vmatprep.subr.bf16.mxu0 0
    %1927 = vmatpush1.bf16.xpose.msra.mxu0 %v1910
    %1928 = vmatprep.subr.bf16.mxu0 0
    %1929 = vmatpush2.bf16.xpose.msra.mxu0 0
    %1930 = vmatprep.subr.bf16.mxu0 0
    %1931 = vmatpush2.bf16.xpose.msra.mxu0 0
    %1932 = vmatprep.subr.bf16.mxu0 0
    %1933 = vmatpush2.bf16.xpose.msra.mxu0 0
    %1934 = vmatprep.subr.bf16.mxu0 0
    %1935 = vmatpush2.bf16.xpose.msra.mxu0 0
    %1936 = vmatprep.subr.bf16.mxu0 0
    %1937 = vmatpush2.bf16.xpose.msra.mxu0 0
    %1938 = vmatprep.subr.bf16.mxu0 0
    %1939 = vmatpush2.bf16.xpose.msra.mxu0 0
    %1940 = vmatprep.subr.bf16.mxu0 0
    %1941 = vmatpush2.bf16.xpose.msra.mxu0 0
    %1942 = vmatprep.subr.bf16.mxu0 0
    %1943 = vmatpush2.bf16.xpose.msra.mxu0 0
    %1944 = vmatprep.mubr.bf16.mxu0 0
    %1945 = vmatmul.mubr.bf16.gmra.mxu0 %v1907
    %v1946 = vpop.f32.mrf.mxu0
    %v1947 = vadd.f32 0.0, %v1946
    %v1948 = vpop.f32.mrf.mxu0
    %v1949 = vpop.f32.mrf.mxu0
    %v1950 = vadd.f32 0.0, %v1949
    %v1951 = vpop.f32.mrf.mxu0
    %1952 = vdwg.mxu0
    %1954 = vrot.lane.b32.xlu0 %v1847, 96
    %v1955 = vpop.permute.xlu0 %1954
    %v1957 = vsel %vm303, %v1847, 0
    %v1960 = vsel %vm303, %v1955, 0
    %1962 = vmatprep.subr.bf16.mxu0 0
    %1963 = vmatpush1.bf16.xpose.msra.mxu0 0
    %1964 = vmatprep.subr.bf16.mxu0 0
    %1965 = vmatpush1.bf16.xpose.msra.mxu0 0
    %1966 = vmatprep.subr.bf16.mxu0 0
    %1967 = vmatpush1.bf16.xpose.msra.mxu0 0
    %1968 = vmatprep.subr.bf16.mxu0 0
    %1969 = vmatpush1.bf16.xpose.msra.mxu0 0
    %1970 = vmatprep.subr.bf16.mxu0 0
    %1971 = vmatpush1.bf16.xpose.msra.mxu0 0
    %1972 = vmatprep.subr.bf16.mxu0 0
    %1973 = vmatpush1.bf16.xpose.msra.mxu0 0
    %1974 = vmatprep.subr.bf16.mxu0 0
    %1975 = vmatpush1.bf16.xpose.msra.mxu0 0
    %1976 = vmatprep.subr.bf16.mxu0 0
    %1977 = vmatpush1.bf16.xpose.msra.mxu0 %v1960
    %1978 = vmatprep.subr.bf16.mxu0 0
    %1979 = vmatpush2.bf16.xpose.msra.mxu0 0
    %1980 = vmatprep.subr.bf16.mxu0 0
    %1981 = vmatpush2.bf16.xpose.msra.mxu0 0
    %1982 = vmatprep.subr.bf16.mxu0 0
    %1983 = vmatpush2.bf16.xpose.msra.mxu0 0
    %1984 = vmatprep.subr.bf16.mxu0 0
    %1985 = vmatpush2.bf16.xpose.msra.mxu0 0
    %1986 = vmatprep.subr.bf16.mxu0 0
    %1987 = vmatpush2.bf16.xpose.msra.mxu0 0
    %1988 = vmatprep.subr.bf16.mxu0 0
    %1989 = vmatpush2.bf16.xpose.msra.mxu0 0
    %1990 = vmatprep.subr.bf16.mxu0 0
    %1991 = vmatpush2.bf16.xpose.msra.mxu0 0
    %1992 = vmatprep.subr.bf16.mxu0 0
    %1993 = vmatpush2.bf16.xpose.msra.mxu0 0
    %1994 = vmatprep.mubr.bf16.mxu0 0
    %1995 = vmatmul.mubr.bf16.gmra.mxu0 %v1957
    %v1996 = vpop.f32.mrf.mxu0
    %v1997 = vadd.f32 0.0, %v1996
    %v1998 = vpop.f32.mrf.mxu0
    %v1999 = vpop.f32.mrf.mxu0
    %v2000 = vadd.f32 0.0, %v1999
    %v2001 = vpop.f32.mrf.mxu0
    %2002 = vdwg.mxu0
    %2004 = vrot.lane.b32.xlu0 %v1848, 96
    %v2005 = vpop.permute.xlu0 %2004
    %v2007 = vsel %vm303, %v1848, 0
    %v2010 = vsel %vm303, %v2005, 0
    %2012 = vmatprep.subr.bf16.mxu0 0
    %2013 = vmatpush1.bf16.xpose.msra.mxu0 0
    %2014 = vmatprep.subr.bf16.mxu0 0
    %2015 = vmatpush1.bf16.xpose.msra.mxu0 0
    %2016 = vmatprep.subr.bf16.mxu0 0
    %2017 = vmatpush1.bf16.xpose.msra.mxu0 0
    %2018 = vmatprep.subr.bf16.mxu0 0
    %2019 = vmatpush1.bf16.xpose.msra.mxu0 0
    %2020 = vmatprep.subr.bf16.mxu0 0
    %2021 = vmatpush1.bf16.xpose.msra.mxu0 0
    %2022 = vmatprep.subr.bf16.mxu0 0
    %2023 = vmatpush1.bf16.xpose.msra.mxu0 0
    %2024 = vmatprep.subr.bf16.mxu0 0
    %2025 = vmatpush1.bf16.xpose.msra.mxu0 0
    %2026 = vmatprep.subr.bf16.mxu0 0
    %2027 = vmatpush1.bf16.xpose.msra.mxu0 %v2010
    %2028 = vmatprep.subr.bf16.mxu0 0
    %2029 = vmatpush2.bf16.xpose.msra.mxu0 0
    %2030 = vmatprep.subr.bf16.mxu0 0
    %2031 = vmatpush2.bf16.xpose.msra.mxu0 0
    %2032 = vmatprep.subr.bf16.mxu0 0
    %2033 = vmatpush2.bf16.xpose.msra.mxu0 0
    %2034 = vmatprep.subr.bf16.mxu0 0
    %2035 = vmatpush2.bf16.xpose.msra.mxu0 0
    %2036 = vmatprep.subr.bf16.mxu0 0
    %2037 = vmatpush2.bf16.xpose.msra.mxu0 0
    %2038 = vmatprep.subr.bf16.mxu0 0
    %2039 = vmatpush2.bf16.xpose.msra.mxu0 0
    %2040 = vmatprep.subr.bf16.mxu0 0
    %2041 = vmatpush2.bf16.xpose.msra.mxu0 0
    %2042 = vmatprep.subr.bf16.mxu0 0
    %2043 = vmatpush2.bf16.xpose.msra.mxu0 0
    %2044 = vmatprep.mubr.bf16.mxu0 0
    %2045 = vmatmul.mubr.bf16.gmra.mxu0 %v2007
    %v2046 = vpop.f32.mrf.mxu0
    %v2047 = vadd.f32 0.0, %v2046
    %v2048 = vpop.f32.mrf.mxu0
    %v2049 = vpop.f32.mrf.mxu0
    %v2050 = vadd.f32 0.0, %v2049
    %v2051 = vpop.f32.mrf.mxu0
    %2052 = vdwg.mxu0
    %2054 = vrot.lane.b32.xlu0 %v1849, 96
    %v2055 = vpop.permute.xlu0 %2054
    %v2057 = vsel %vm303, %v1849, 0
    %v2060 = vsel %vm303, %v2055, 0
    %2062 = vmatprep.subr.bf16.mxu0 0
    %2063 = vmatpush1.bf16.xpose.msra.mxu0 0
    %2064 = vmatprep.subr.bf16.mxu0 0
    %2065 = vmatpush1.bf16.xpose.msra.mxu0 0
    %2066 = vmatprep.subr.bf16.mxu0 0
    %2067 = vmatpush1.bf16.xpose.msra.mxu0 0
    %2068 = vmatprep.subr.bf16.mxu0 0
    %2069 = vmatpush1.bf16.xpose.msra.mxu0 0
    %2070 = vmatprep.subr.bf16.mxu0 0
    %2071 = vmatpush1.bf16.xpose.msra.mxu0 0
    %2072 = vmatprep.subr.bf16.mxu0 0
    %2073 = vmatpush1.bf16.xpose.msra.mxu0 0
    %2074 = vmatprep.subr.bf16.mxu0 0
    %2075 = vmatpush1.bf16.xpose.msra.mxu0 0
    %2076 = vmatprep.subr.bf16.mxu0 0
    %2077 = vmatpush1.bf16.xpose.msra.mxu0 %v2060
    %2078 = vmatprep.subr.bf16.mxu0 0
    %2079 = vmatpush2.bf16.xpose.msra.mxu0 0
    %2080 = vmatprep.subr.bf16.mxu0 0
    %2081 = vmatpush2.bf16.xpose.msra.mxu0 0
    %2082 = vmatprep.subr.bf16.mxu0 0
    %2083 = vmatpush2.bf16.xpose.msra.mxu0 0
    %2084 = vmatprep.subr.bf16.mxu0 0
    %2085 = vmatpush2.bf16.xpose.msra.mxu0 0
    %2086 = vmatprep.subr.bf16.mxu0 0
    %2087 = vmatpush2.bf16.xpose.msra.mxu0 0
    %2088 = vmatprep.subr.bf16.mxu0 0
    %2089 = vmatpush2.bf16.xpose.msra.mxu0 0
    %2090 = vmatprep.subr.bf16.mxu0 0
    %2091 = vmatpush2.bf16.xpose.msra.mxu0 0
    %2092 = vmatprep.subr.bf16.mxu0 0
    %2093 = vmatpush2.bf16.xpose.msra.mxu0 0
    %2094 = vmatprep.mubr.bf16.mxu0 0
    %2095 = vmatmul.mubr.bf16.gmra.mxu0 %v2057
    %v2096 = vpop.f32.mrf.mxu0
    %v2097 = vadd.f32 0.0, %v2096
    %v2098 = vpop.f32.mrf.mxu0
    %v2099 = vpop.f32.mrf.mxu0
    %v2100 = vadd.f32 0.0, %v2099
    %v2101 = vpop.f32.mrf.mxu0
    %2102 = vdwg.mxu0
    %2104 = vrot.lane.b32.xlu0 %v1850, 96
    %v2105 = vpop.permute.xlu0 %2104
    %v2107 = vsel %vm303, %v1850, 0
    %v2110 = vsel %vm303, %v2105, 0
    %2112 = vmatprep.subr.bf16.mxu0 0
    %2113 = vmatpush1.bf16.xpose.msra.mxu0 0
    %2114 = vmatprep.subr.bf16.mxu0 0
    %2115 = vmatpush1.bf16.xpose.msra.mxu0 0
    %2116 = vmatprep.subr.bf16.mxu0 0
    %2117 = vmatpush1.bf16.xpose.msra.mxu0 0
    %2118 = vmatprep.subr.bf16.mxu0 0
    %2119 = vmatpush1.bf16.xpose.msra.mxu0 0
    %2120 = vmatprep.subr.bf16.mxu0 0
    %2121 = vmatpush1.bf16.xpose.msra.mxu0 0
    %2122 = vmatprep.subr.bf16.mxu0 0
    %2123 = vmatpush1.bf16.xpose.msra.mxu0 0
    %2124 = vmatprep.subr.bf16.mxu0 0
    %2125 = vmatpush1.bf16.xpose.msra.mxu0 0
    %2126 = vmatprep.subr.bf16.mxu0 0
    %2127 = vmatpush1.bf16.xpose.msra.mxu0 %v2110
    %2128 = vmatprep.subr.bf16.mxu0 0
    %2129 = vmatpush2.bf16.xpose.msra.mxu0 0
    %2130 = vmatprep.subr.bf16.mxu0 0
    %2131 = vmatpush2.bf16.xpose.msra.mxu0 0
    %2132 = vmatprep.subr.bf16.mxu0 0
    %2133 = vmatpush2.bf16.xpose.msra.mxu0 0
    %2134 = vmatprep.subr.bf16.mxu0 0
    %2135 = vmatpush2.bf16.xpose.msra.mxu0 0
    %2136 = vmatprep.subr.bf16.mxu0 0
    %2137 = vmatpush2.bf16.xpose.msra.mxu0 0
    %2138 = vmatprep.subr.bf16.mxu0 0
    %2139 = vmatpush2.bf16.xpose.msra.mxu0 0
    %2140 = vmatprep.subr.bf16.mxu0 0
    %2141 = vmatpush2.bf16.xpose.msra.mxu0 0
    %2142 = vmatprep.subr.bf16.mxu0 0
    %2143 = vmatpush2.bf16.xpose.msra.mxu0 0
    %2144 = vmatprep.mubr.bf16.mxu0 0
    %2145 = vmatmul.mubr.bf16.gmra.mxu0 %v2107
    %v2146 = vpop.f32.mrf.mxu0
    %v2147 = vadd.f32 0.0, %v2146
    %v2148 = vpop.f32.mrf.mxu0
    %v2149 = vpop.f32.mrf.mxu0
    %v2150 = vadd.f32 0.0, %v2149
    %v2151 = vpop.f32.mrf.mxu0
    %2152 = vdwg.mxu0
    %2154 = vrot.lane.b32.xlu0 %v1851, 96
    %v2155 = vpop.permute.xlu0 %2154
    %v2157 = vsel %vm303, %v1851, 0
    %v2160 = vsel %vm303, %v2155, 0
    %2162 = vmatprep.subr.bf16.mxu0 0
    %2163 = vmatpush1.bf16.xpose.msra.mxu0 0
    %2164 = vmatprep.subr.bf16.mxu0 0
    %2165 = vmatpush1.bf16.xpose.msra.mxu0 0
    %2166 = vmatprep.subr.bf16.mxu0 0
    %2167 = vmatpush1.bf16.xpose.msra.mxu0 0
    %2168 = vmatprep.subr.bf16.mxu0 0
    %2169 = vmatpush1.bf16.xpose.msra.mxu0 0
    %2170 = vmatprep.subr.bf16.mxu0 0
    %2171 = vmatpush1.bf16.xpose.msra.mxu0 0
    %2172 = vmatprep.subr.bf16.mxu0 0
    %2173 = vmatpush1.bf16.xpose.msra.mxu0 0
    %2174 = vmatprep.subr.bf16.mxu0 0
    %2175 = vmatpush1.bf16.xpose.msra.mxu0 0
    %2176 = vmatprep.subr.bf16.mxu0 0
    %2177 = vmatpush1.bf16.xpose.msra.mxu0 %v2160
    %2178 = vmatprep.subr.bf16.mxu0 0
    %2179 = vmatpush2.bf16.xpose.msra.mxu0 0
    %2180 = vmatprep.subr.bf16.mxu0 0
    %2181 = vmatpush2.bf16.xpose.msra.mxu0 0
    %2182 = vmatprep.subr.bf16.mxu0 0
    %2183 = vmatpush2.bf16.xpose.msra.mxu0 0
    %2184 = vmatprep.subr.bf16.mxu0 0
    %2185 = vmatpush2.bf16.xpose.msra.mxu0 0
    %2186 = vmatprep.subr.bf16.mxu0 0
    %2187 = vmatpush2.bf16.xpose.msra.mxu0 0
    %2188 = vmatprep.subr.bf16.mxu0 0
    %2189 = vmatpush2.bf16.xpose.msra.mxu0 0
    %2190 = vmatprep.subr.bf16.mxu0 0
    %2191 = vmatpush2.bf16.xpose.msra.mxu0 0
    %2192 = vmatprep.subr.bf16.mxu0 0
    %2193 = vmatpush2.bf16.xpose.msra.mxu0 0
    %2194 = vmatprep.mubr.bf16.mxu0 0
    %2195 = vmatmul.mubr.bf16.gmra.mxu0 %v2157
    %v2196 = vpop.f32.mrf.mxu0
    %v2197 = vadd.f32 0.0, %v2196
    %v2198 = vpop.f32.mrf.mxu0
    %v2199 = vpop.f32.mrf.mxu0
    %v2200 = vadd.f32 0.0, %v2199
    %v2201 = vpop.f32.mrf.mxu0
    %2202 = vdwg.mxu0
    %2204 = vrot.lane.b32.xlu0 %v1852, 96
    %v2205 = vpop.permute.xlu0 %2204
    %v2207 = vsel %vm303, %v1852, 0
    %v2210 = vsel %vm303, %v2205, 0
    %2212 = vmatprep.subr.bf16.mxu0 0
    %2213 = vmatpush1.bf16.xpose.msra.mxu0 0
    %2214 = vmatprep.subr.bf16.mxu0 0
    %2215 = vmatpush1.bf16.xpose.msra.mxu0 0
    %2216 = vmatprep.subr.bf16.mxu0 0
    %2217 = vmatpush1.bf16.xpose.msra.mxu0 0
    %2218 = vmatprep.subr.bf16.mxu0 0
    %2219 = vmatpush1.bf16.xpose.msra.mxu0 0
    %2220 = vmatprep.subr.bf16.mxu0 0
    %2221 = vmatpush1.bf16.xpose.msra.mxu0 0
    %2222 = vmatprep.subr.bf16.mxu0 0
    %2223 = vmatpush1.bf16.xpose.msra.mxu0 0
    %2224 = vmatprep.subr.bf16.mxu0 0
    %2225 = vmatpush1.bf16.xpose.msra.mxu0 0
    %2226 = vmatprep.subr.bf16.mxu0 0
    %2227 = vmatpush1.bf16.xpose.msra.mxu0 %v2210
    %2228 = vmatprep.subr.bf16.mxu0 0
    %2229 = vmatpush2.bf16.xpose.msra.mxu0 0
    %2230 = vmatprep.subr.bf16.mxu0 0
    %2231 = vmatpush2.bf16.xpose.msra.mxu0 0
    %2232 = vmatprep.subr.bf16.mxu0 0
    %2233 = vmatpush2.bf16.xpose.msra.mxu0 0
    %2234 = vmatprep.subr.bf16.mxu0 0
    %2235 = vmatpush2.bf16.xpose.msra.mxu0 0
    %2236 = vmatprep.subr.bf16.mxu0 0
    %2237 = vmatpush2.bf16.xpose.msra.mxu0 0
    %2238 = vmatprep.subr.bf16.mxu0 0
    %2239 = vmatpush2.bf16.xpose.msra.mxu0 0
    %2240 = vmatprep.subr.bf16.mxu0 0
    %2241 = vmatpush2.bf16.xpose.msra.mxu0 0
    %2242 = vmatprep.subr.bf16.mxu0 0
    %2243 = vmatpush2.bf16.xpose.msra.mxu0 0
    %2244 = vmatprep.mubr.bf16.mxu0 0
    %2245 = vmatmul.mubr.bf16.gmra.mxu0 %v2207
    %v2246 = vpop.f32.mrf.mxu0
    %v2247 = vadd.f32 0.0, %v2246
    %v2248 = vpop.f32.mrf.mxu0
    %v2249 = vpop.f32.mrf.mxu0
    %v2250 = vadd.f32 0.0, %v2249
    %v2251 = vpop.f32.mrf.mxu0
    %2252 = vdwg.mxu0
    %v2253 = vmul.f32 %v1897, 0.35355338
    %v2254 = vmul.f32 %v1900, 0.35355338
    %v2255 = vmul.f32 %v1947, 0.35355338
    %v2256 = vmul.f32 %v1950, 0.35355338
    %v2257 = vmul.f32 %v1997, 0.35355338
    %v2258 = vmul.f32 %v2000, 0.35355338
    %v2259 = vmul.f32 %v2047, 0.35355338
    %v2260 = vmul.f32 %v2050, 0.35355338
    %v2261 = vmul.f32 %v2097, 0.35355338
    %v2262 = vmul.f32 %v2100, 0.35355338
    %v2263 = vmul.f32 %v2147, 0.35355338
    %v2264 = vmul.f32 %v2150, 0.35355338
    %v2265 = vmul.f32 %v2197, 0.35355338
    %v2266 = vmul.f32 %v2200, 0.35355338
    %v2267 = vmul.f32 %v2247, 0.35355338
    %v2268 = vmul.f32 %v2250, 0.35355338
    %v2269 = vadd.f32 %v2253, %v181
    %v2270 = vadd.f32 %v2254, %v181
    %v2271 = vadd.f32 %v2255, %v181
    %v2272 = vadd.f32 %v2256, %v181
    %v2273 = vadd.f32 %v2257, %v181
    %v2274 = vadd.f32 %v2258, %v181
    %v2275 = vadd.f32 %v2259, %v181
    %v2276 = vadd.f32 %v2260, %v181
    %v2277 = vadd.f32 %v2261, %v181
    %v2278 = vadd.f32 %v2262, %v181
    %v2279 = vadd.f32 %v2263, %v181
    %v2280 = vadd.f32 %v2264, %v181
    %v2281 = vadd.f32 %v2265, %v181
    %v2282 = vadd.f32 %v2266, %v181
    %v2283 = vadd.f32 %v2267, %v181
    %v2284 = vadd.f32 %v2268, %v181
    %v2285 = vsel %vm733, %v2269, -inf
    %2286 = vmax.xlane.f32.xlu0 %v2285
    %v2287 = vpop.xlane.xlu0 %2286
    %v2288 = vsel %vm733, %v2270, -inf
    %2289 = vmax.xlane.f32.xlu0 %v2288
    %v2290 = vpop.xlane.xlu0 %2289
    %v2291 = vsel %vm733, %v2271, -inf
    %2292 = vmax.xlane.f32.xlu0 %v2291
    %v2293 = vpop.xlane.xlu0 %2292
    %v2294 = vsel %vm733, %v2272, -inf
    %2295 = vmax.xlane.f32.xlu0 %v2294
    %v2296 = vpop.xlane.xlu0 %2295
    %v2297 = vsel %vm733, %v2273, -inf
    %2298 = vmax.xlane.f32.xlu0 %v2297
    %v2299 = vpop.xlane.xlu0 %2298
    %v2300 = vsel %vm733, %v2274, -inf
    %2301 = vmax.xlane.f32.xlu0 %v2300
    %v2302 = vpop.xlane.xlu0 %2301
    %v2303 = vsel %vm733, %v2275, -inf
    %2304 = vmax.xlane.f32.xlu0 %v2303
    %v2305 = vpop.xlane.xlu0 %2304
    %v2306 = vsel %vm733, %v2276, -inf
    %2307 = vmax.xlane.f32.xlu0 %v2306
    %v2308 = vpop.xlane.xlu0 %2307
    %v2309 = vsel %vm733, %v2277, -inf
    %2310 = vmax.xlane.f32.xlu0 %v2309
    %v2311 = vpop.xlane.xlu0 %2310
    %v2312 = vsel %vm733, %v2278, -inf
    %2313 = vmax.xlane.f32.xlu0 %v2312
    %v2314 = vpop.xlane.xlu0 %2313
    %v2315 = vsel %vm733, %v2279, -inf
    %2316 = vmax.xlane.f32.xlu0 %v2315
    %v2317 = vpop.xlane.xlu0 %2316
    %v2318 = vsel %vm733, %v2280, -inf
    %2319 = vmax.xlane.f32.xlu0 %v2318
    %v2320 = vpop.xlane.xlu0 %2319
    %v2321 = vsel %vm733, %v2281, -inf
    %2322 = vmax.xlane.f32.xlu0 %v2321
    %v2323 = vpop.xlane.xlu0 %2322
    %v2324 = vsel %vm733, %v2282, -inf
    %2325 = vmax.xlane.f32.xlu0 %v2324
    %v2326 = vpop.xlane.xlu0 %2325
    %v2327 = vsel %vm733, %v2283, -inf
    %2328 = vmax.xlane.f32.xlu0 %v2327
    %v2329 = vpop.xlane.xlu0 %2328
    %v2330 = vsel %vm733, %v2284, -inf
    %2331 = vmax.xlane.f32.xlu0 %v2330
    %v2332 = vpop.xlane.xlu0 %2331
    %v2333 = vsub.f32 %v2269, %v2287
    %v2334 = vsub.f32 %v2270, %v2290
    %v2335 = vsub.f32 %v2271, %v2293
    %v2336 = vsub.f32 %v2272, %v2296
    %v2337 = vsub.f32 %v2273, %v2299
    %v2338 = vsub.f32 %v2274, %v2302
    %v2339 = vsub.f32 %v2275, %v2305
    %v2340 = vsub.f32 %v2276, %v2308
    %v2341 = vsub.f32 %v2277, %v2311
    %v2342 = vsub.f32 %v2278, %v2314
    %v2343 = vsub.f32 %v2279, %v2317
    %v2344 = vsub.f32 %v2280, %v2320
    %v2345 = vsub.f32 %v2281, %v2323
    %v2346 = vsub.f32 %v2282, %v2326
    %v2347 = vsub.f32 %v2283, %v2329
    %v2348 = vsub.f32 %v2284, %v2332
    %v2349 = vmul.f32 %v2333, 1.442695
    %v2350 = vpow.pop %v2349
    %v2351 = vmul.f32 %v2334, 1.442695
    %v2352 = vpow.pop %v2351
    %v2353 = vmul.f32 %v2335, 1.442695
    %v2354 = vpow.pop %v2353
    %v2355 = vmul.f32 %v2336, 1.442695
    %v2356 = vpow.pop %v2355
    %v2357 = vmul.f32 %v2337, 1.442695
    %v2358 = vpow.pop %v2357
    %v2359 = vmul.f32 %v2338, 1.442695
    %v2360 = vpow.pop %v2359
    %v2361 = vmul.f32 %v2339, 1.442695
    %v2362 = vpow.pop %v2361
    %v2363 = vmul.f32 %v2340, 1.442695
    %v2364 = vpow.pop %v2363
    %v2365 = vmul.f32 %v2341, 1.442695
    %v2366 = vpow.pop %v2365
    %v2367 = vmul.f32 %v2342, 1.442695
    %v2368 = vpow.pop %v2367
    %v2369 = vmul.f32 %v2343, 1.442695
    %v2370 = vpow.pop %v2369
    %v2371 = vmul.f32 %v2344, 1.442695
    %v2372 = vpow.pop %v2371
    %v2373 = vmul.f32 %v2345, 1.442695
    %v2374 = vpow.pop %v2373
    %v2375 = vmul.f32 %v2346, 1.442695
    %v2376 = vpow.pop %v2375
    %v2377 = vmul.f32 %v2347, 1.442695
    %v2378 = vpow.pop %v2377
    %v2379 = vmul.f32 %v2348, 1.442695
    %v2380 = vpow.pop %v2379
    %v2381 = vsel %vm733, %v2350, 0.0
    %2382 = vadd.xlane.f32.xlu0 %v2381
    %v2383 = vpop.xlane.xlu0 %2382
    %v2384 = vsel %vm733, %v2352, 0.0
    %2385 = vadd.xlane.f32.xlu0 %v2384
    %v2386 = vpop.xlane.xlu0 %2385
    %v2387 = vsel %vm733, %v2354, 0.0
    %2388 = vadd.xlane.f32.xlu0 %v2387
    %v2389 = vpop.xlane.xlu0 %2388
    %v2390 = vsel %vm733, %v2356, 0.0
    %2391 = vadd.xlane.f32.xlu0 %v2390
    %v2392 = vpop.xlane.xlu0 %2391
    %v2393 = vsel %vm733, %v2358, 0.0
    %2394 = vadd.xlane.f32.xlu0 %v2393
    %v2395 = vpop.xlane.xlu0 %2394
    %v2396 = vsel %vm733, %v2360, 0.0
    %2397 = vadd.xlane.f32.xlu0 %v2396
    %v2398 = vpop.xlane.xlu0 %2397
    %v2399 = vsel %vm733, %v2362, 0.0
    %2400 = vadd.xlane.f32.xlu0 %v2399
    %v2401 = vpop.xlane.xlu0 %2400
    %v2402 = vsel %vm733, %v2364, 0.0
    %2403 = vadd.xlane.f32.xlu0 %v2402
    %v2404 = vpop.xlane.xlu0 %2403
    %v2405 = vsel %vm733, %v2366, 0.0
    %2406 = vadd.xlane.f32.xlu0 %v2405
    %v2407 = vpop.xlane.xlu0 %2406
    %v2408 = vsel %vm733, %v2368, 0.0
    %2409 = vadd.xlane.f32.xlu0 %v2408
    %v2410 = vpop.xlane.xlu0 %2409
    %v2411 = vsel %vm733, %v2370, 0.0
    %2412 = vadd.xlane.f32.xlu0 %v2411
    %v2413 = vpop.xlane.xlu0 %2412
    %v2414 = vsel %vm733, %v2372, 0.0
    %2415 = vadd.xlane.f32.xlu0 %v2414
    %v2416 = vpop.xlane.xlu0 %2415
    %v2417 = vsel %vm733, %v2374, 0.0
    %2418 = vadd.xlane.f32.xlu0 %v2417
    %v2419 = vpop.xlane.xlu0 %2418
    %v2420 = vsel %vm733, %v2376, 0.0
    %2421 = vadd.xlane.f32.xlu0 %v2420
    %v2422 = vpop.xlane.xlu0 %2421
    %v2423 = vsel %vm733, %v2378, 0.0
    %2424 = vadd.xlane.f32.xlu0 %v2423
    %v2425 = vpop.xlane.xlu0 %2424
    %v2426 = vsel %vm733, %v2380, 0.0
    %2427 = vadd.xlane.f32.xlu0 %v2426
    %v2428 = vpop.xlane.xlu0 %2427
    %v2429 = vrcp.pop %v2383
    %v2430 = vrcp.pop %v2386
    %v2431 = vrcp.pop %v2389
    %v2432 = vrcp.pop %v2392
    %v2433 = vrcp.pop %v2395
    %v2434 = vrcp.pop %v2398
    %v2435 = vrcp.pop %v2401
    %v2436 = vrcp.pop %v2404
    %v2437 = vrcp.pop %v2407
    %v2438 = vrcp.pop %v2410
    %v2439 = vrcp.pop %v2413
    %v2440 = vrcp.pop %v2416
    %v2441 = vrcp.pop %v2419
    %v2442 = vrcp.pop %v2422
    %v2443 = vrcp.pop %v2425
    %v2444 = vrcp.pop %v2428
    %v2445 = vmul.f32 %v2350, %v2429
    %v2446 = vmul.f32 %v2352, %v2430
    %v2447 = vmul.f32 %v2354, %v2431
    %v2448 = vmul.f32 %v2356, %v2432
    %v2449 = vmul.f32 %v2358, %v2433
    %v2450 = vmul.f32 %v2360, %v2434
    %v2451 = vmul.f32 %v2362, %v2435
    %v2452 = vmul.f32 %v2364, %v2436
    %v2453 = vmul.f32 %v2366, %v2437
    %v2454 = vmul.f32 %v2368, %v2438
    %v2455 = vmul.f32 %v2370, %v2439
    %v2456 = vmul.f32 %v2372, %v2440
    %v2457 = vmul.f32 %v2374, %v2441
    %v2458 = vmul.f32 %v2376, %v2442
    %v2459 = vmul.f32 %v2378, %v2443
    %v2460 = vmul.f32 %v2380, %v2444
    %v2461 = vpack.c.bf16 %v2446, %v2445
    %v2462 = vpack.c.bf16 %v2448, %v2447
    %v2463 = vpack.c.bf16 %v2450, %v2449
    %v2464 = vpack.c.bf16 %v2452, %v2451
    %v2465 = vpack.c.bf16 %v2454, %v2453
    %v2466 = vpack.c.bf16 %v2456, %v2455
    %v2467 = vpack.c.bf16 %v2458, %v2457
    %v2468 = vpack.c.bf16 %v2460, %v2459
    %2469 = vrot.lane.b32.xlu0 %v1845, 64
    %v2470 = vpop.permute.xlu0 %2469
    %v2473 = vsel %vm733, %v2461, 0
    %2475 = vmatprep.subr.bf16.mxu0 0
    %2476 = vmatpush1.bf16.msra.mxu0 0
    %2477 = vmatprep.subr.bf16.mxu0 0
    %2478 = vmatpush1.bf16.msra.mxu0 0
    %2479 = vmatprep.subr.bf16.mxu0 0
    %2480 = vmatpush1.bf16.msra.mxu0 0
    %2481 = vmatprep.subr.bf16.mxu0 0
    %2482 = vmatpush1.bf16.msra.mxu0 0
    %2483 = vmatprep.subr.bf16.mxu0 0
    %2484 = vmatpush1.bf16.msra.mxu0 0
    %2485 = vmatprep.subr.bf16.mxu0 0
    %2486 = vmatpush1.bf16.msra.mxu0 0
    %2487 = vmatprep.subr.bf16.mxu0 0
    %2488 = vmatpush1.bf16.msra.mxu0 0
    %2489 = vmatprep.subr.bf16.mxu0 0
    %2490 = vmatpush1.bf16.msra.mxu0 %v2470
    %2491 = vmatprep.subr.bf16.mxu0 0
    %2492 = vmatpush2.bf16.msra.mxu0 0
    %2493 = vmatprep.subr.bf16.mxu0 0
    %2494 = vmatpush2.bf16.msra.mxu0 0
    %2495 = vmatprep.subr.bf16.mxu0 0
    %2496 = vmatpush2.bf16.msra.mxu0 0
    %2497 = vmatprep.subr.bf16.mxu0 0
    %2498 = vmatpush2.bf16.msra.mxu0 0
    %2499 = vmatprep.subr.bf16.mxu0 0
    %2500 = vmatpush2.bf16.msra.mxu0 0
    %2501 = vmatprep.subr.bf16.mxu0 0
    %2502 = vmatpush2.bf16.msra.mxu0 0
    %2503 = vmatprep.subr.bf16.mxu0 0
    %2504 = vmatpush2.bf16.msra.mxu0 0
    %2505 = vmatprep.subr.bf16.mxu0 0
    %2506 = vmatpush2.bf16.msra.mxu0 0
    %2507 = vmatprep.mubr.bf16.mxu0 0
    %2508 = vmatmul.mubr.bf16.gmra.mxu0 %v2473
    %v2509 = vpop.f32.mrf.mxu0
    %v2510 = vadd.f32 0.0, %v2509
    %v2511 = vpop.f32.mrf.mxu0
    %v2512 = vpop.f32.mrf.mxu0
    %v2513 = vadd.f32 0.0, %v2512
    %v2514 = vpop.f32.mrf.mxu0
    %2515 = vdwg.mxu0
    %2516 = vrot.lane.b32.xlu0 %v1846, 64
    %v2517 = vpop.permute.xlu0 %2516
    %v2520 = vsel %vm733, %v2462, 0
    %2522 = vmatprep.subr.bf16.mxu0 0
    %2523 = vmatpush1.bf16.msra.mxu0 0
    %2524 = vmatprep.subr.bf16.mxu0 0
    %2525 = vmatpush1.bf16.msra.mxu0 0
    %2526 = vmatprep.subr.bf16.mxu0 0
    %2527 = vmatpush1.bf16.msra.mxu0 0
    %2528 = vmatprep.subr.bf16.mxu0 0
    %2529 = vmatpush1.bf16.msra.mxu0 0
    %2530 = vmatprep.subr.bf16.mxu0 0
    %2531 = vmatpush1.bf16.msra.mxu0 0
    %2532 = vmatprep.subr.bf16.mxu0 0
    %2533 = vmatpush1.bf16.msra.mxu0 0
    %2534 = vmatprep.subr.bf16.mxu0 0
    %2535 = vmatpush1.bf16.msra.mxu0 0
    %2536 = vmatprep.subr.bf16.mxu0 0
    %2537 = vmatpush1.bf16.msra.mxu0 %v2517
    %2538 = vmatprep.subr.bf16.mxu0 0
    %2539 = vmatpush2.bf16.msra.mxu0 0
    %2540 = vmatprep.subr.bf16.mxu0 0
    %2541 = vmatpush2.bf16.msra.mxu0 0
    %2542 = vmatprep.subr.bf16.mxu0 0
    %2543 = vmatpush2.bf16.msra.mxu0 0
    %2544 = vmatprep.subr.bf16.mxu0 0
    %2545 = vmatpush2.bf16.msra.mxu0 0
    %2546 = vmatprep.subr.bf16.mxu0 0
    %2547 = vmatpush2.bf16.msra.mxu0 0
    %2548 = vmatprep.subr.bf16.mxu0 0
    %2549 = vmatpush2.bf16.msra.mxu0 0
    %2550 = vmatprep.subr.bf16.mxu0 0
    %2551 = vmatpush2.bf16.msra.mxu0 0
    %2552 = vmatprep.subr.bf16.mxu0 0
    %2553 = vmatpush2.bf16.msra.mxu0 0
    %2554 = vmatprep.mubr.bf16.mxu0 0
    %2555 = vmatmul.mubr.bf16.gmra.mxu0 %v2520
    %v2556 = vpop.f32.mrf.mxu0
    %v2557 = vadd.f32 0.0, %v2556
    %v2558 = vpop.f32.mrf.mxu0
    %v2559 = vpop.f32.mrf.mxu0
    %v2560 = vadd.f32 0.0, %v2559
    %v2561 = vpop.f32.mrf.mxu0
    %2562 = vdwg.mxu0
    %2563 = vrot.lane.b32.xlu0 %v1847, 64
    %v2564 = vpop.permute.xlu0 %2563
    %v2567 = vsel %vm733, %v2463, 0
    %2569 = vmatprep.subr.bf16.mxu0 0
    %2570 = vmatpush1.bf16.msra.mxu0 0
    %2571 = vmatprep.subr.bf16.mxu0 0
    %2572 = vmatpush1.bf16.msra.mxu0 0
    %2573 = vmatprep.subr.bf16.mxu0 0
    %2574 = vmatpush1.bf16.msra.mxu0 0
    %2575 = vmatprep.subr.bf16.mxu0 0
    %2576 = vmatpush1.bf16.msra.mxu0 0
    %2577 = vmatprep.subr.bf16.mxu0 0
    %2578 = vmatpush1.bf16.msra.mxu0 0
    %2579 = vmatprep.subr.bf16.mxu0 0
    %2580 = vmatpush1.bf16.msra.mxu0 0
    %2581 = vmatprep.subr.bf16.mxu0 0
    %2582 = vmatpush1.bf16.msra.mxu0 0
    %2583 = vmatprep.subr.bf16.mxu0 0
    %2584 = vmatpush1.bf16.msra.mxu0 %v2564
    %2585 = vmatprep.subr.bf16.mxu0 0
    %2586 = vmatpush2.bf16.msra.mxu0 0
    %2587 = vmatprep.subr.bf16.mxu0 0
    %2588 = vmatpush2.bf16.msra.mxu0 0
    %2589 = vmatprep.subr.bf16.mxu0 0
    %2590 = vmatpush2.bf16.msra.mxu0 0
    %2591 = vmatprep.subr.bf16.mxu0 0
    %2592 = vmatpush2.bf16.msra.mxu0 0
    %2593 = vmatprep.subr.bf16.mxu0 0
    %2594 = vmatpush2.bf16.msra.mxu0 0
    %2595 = vmatprep.subr.bf16.mxu0 0
    %2596 = vmatpush2.bf16.msra.mxu0 0
    %2597 = vmatprep.subr.bf16.mxu0 0
    %2598 = vmatpush2.bf16.msra.mxu0 0
    %2599 = vmatprep.subr.bf16.mxu0 0
    %2600 = vmatpush2.bf16.msra.mxu0 0
    %2601 = vmatprep.mubr.bf16.mxu0 0
    %2602 = vmatmul.mubr.bf16.gmra.mxu0 %v2567
    %v2603 = vpop.f32.mrf.mxu0
    %v2604 = vadd.f32 0.0, %v2603
    %v2605 = vpop.f32.mrf.mxu0
    %v2606 = vpop.f32.mrf.mxu0
    %v2607 = vadd.f32 0.0, %v2606
    %v2608 = vpop.f32.mrf.mxu0
    %2609 = vdwg.mxu0
    %2610 = vrot.lane.b32.xlu0 %v1848, 64
    %v2611 = vpop.permute.xlu0 %2610
    %v2614 = vsel %vm733, %v2464, 0
    %2616 = vmatprep.subr.bf16.mxu0 0
    %2617 = vmatpush1.bf16.msra.mxu0 0
    %2618 = vmatprep.subr.bf16.mxu0 0
    %2619 = vmatpush1.bf16.msra.mxu0 0
    %2620 = vmatprep.subr.bf16.mxu0 0
    %2621 = vmatpush1.bf16.msra.mxu0 0
    %2622 = vmatprep.subr.bf16.mxu0 0
    %2623 = vmatpush1.bf16.msra.mxu0 0
    %2624 = vmatprep.subr.bf16.mxu0 0
    %2625 = vmatpush1.bf16.msra.mxu0 0
    %2626 = vmatprep.subr.bf16.mxu0 0
    %2627 = vmatpush1.bf16.msra.mxu0 0
    %2628 = vmatprep.subr.bf16.mxu0 0
    %2629 = vmatpush1.bf16.msra.mxu0 0
    %2630 = vmatprep.subr.bf16.mxu0 0
    %2631 = vmatpush1.bf16.msra.mxu0 %v2611
    %2632 = vmatprep.subr.bf16.mxu0 0
    %2633 = vmatpush2.bf16.msra.mxu0 0
    %2634 = vmatprep.subr.bf16.mxu0 0
    %2635 = vmatpush2.bf16.msra.mxu0 0
    %2636 = vmatprep.subr.bf16.mxu0 0
    %2637 = vmatpush2.bf16.msra.mxu0 0
    %2638 = vmatprep.subr.bf16.mxu0 0
    %2639 = vmatpush2.bf16.msra.mxu0 0
    %2640 = vmatprep.subr.bf16.mxu0 0
    %2641 = vmatpush2.bf16.msra.mxu0 0
    %2642 = vmatprep.subr.bf16.mxu0 0
    %2643 = vmatpush2.bf16.msra.mxu0 0
    %2644 = vmatprep.subr.bf16.mxu0 0
    %2645 = vmatpush2.bf16.msra.mxu0 0
    %2646 = vmatprep.subr.bf16.mxu0 0
    %2647 = vmatpush2.bf16.msra.mxu0 0
    %2648 = vmatprep.mubr.bf16.mxu0 0
    %2649 = vmatmul.mubr.bf16.gmra.mxu0 %v2614
    %v2650 = vpop.f32.mrf.mxu0
    %v2651 = vadd.f32 0.0, %v2650
    %v2652 = vpop.f32.mrf.mxu0
    %v2653 = vpop.f32.mrf.mxu0
    %v2654 = vadd.f32 0.0, %v2653
    %v2655 = vpop.f32.mrf.mxu0
    %2656 = vdwg.mxu0
    %2657 = vrot.lane.b32.xlu0 %v1849, 64
    %v2658 = vpop.permute.xlu0 %2657
    %v2661 = vsel %vm733, %v2465, 0
    %2663 = vmatprep.subr.bf16.mxu0 0
    %2664 = vmatpush1.bf16.msra.mxu0 0
    %2665 = vmatprep.subr.bf16.mxu0 0
    %2666 = vmatpush1.bf16.msra.mxu0 0
    %2667 = vmatprep.subr.bf16.mxu0 0
    %2668 = vmatpush1.bf16.msra.mxu0 0
    %2669 = vmatprep.subr.bf16.mxu0 0
    %2670 = vmatpush1.bf16.msra.mxu0 0
    %2671 = vmatprep.subr.bf16.mxu0 0
    %2672 = vmatpush1.bf16.msra.mxu0 0
    %2673 = vmatprep.subr.bf16.mxu0 0
    %2674 = vmatpush1.bf16.msra.mxu0 0
    %2675 = vmatprep.subr.bf16.mxu0 0
    %2676 = vmatpush1.bf16.msra.mxu0 0
    %2677 = vmatprep.subr.bf16.mxu0 0
    %2678 = vmatpush1.bf16.msra.mxu0 %v2658
    %2679 = vmatprep.subr.bf16.mxu0 0
    %2680 = vmatpush2.bf16.msra.mxu0 0
    %2681 = vmatprep.subr.bf16.mxu0 0
    %2682 = vmatpush2.bf16.msra.mxu0 0
    %2683 = vmatprep.subr.bf16.mxu0 0
    %2684 = vmatpush2.bf16.msra.mxu0 0
    %2685 = vmatprep.subr.bf16.mxu0 0
    %2686 = vmatpush2.bf16.msra.mxu0 0
    %2687 = vmatprep.subr.bf16.mxu0 0
    %2688 = vmatpush2.bf16.msra.mxu0 0
    %2689 = vmatprep.subr.bf16.mxu0 0
    %2690 = vmatpush2.bf16.msra.mxu0 0
    %2691 = vmatprep.subr.bf16.mxu0 0
    %2692 = vmatpush2.bf16.msra.mxu0 0
    %2693 = vmatprep.subr.bf16.mxu0 0
    %2694 = vmatpush2.bf16.msra.mxu0 0
    %2695 = vmatprep.mubr.bf16.mxu0 0
    %2696 = vmatmul.mubr.bf16.gmra.mxu0 %v2661
    %v2697 = vpop.f32.mrf.mxu0
    %v2698 = vadd.f32 0.0, %v2697
    %v2699 = vpop.f32.mrf.mxu0
    %v2700 = vpop.f32.mrf.mxu0
    %v2701 = vadd.f32 0.0, %v2700
    %v2702 = vpop.f32.mrf.mxu0
    %2703 = vdwg.mxu0
    %2704 = vrot.lane.b32.xlu0 %v1850, 64
    %v2705 = vpop.permute.xlu0 %2704
    %v2708 = vsel %vm733, %v2466, 0
    %2710 = vmatprep.subr.bf16.mxu0 0
    %2711 = vmatpush1.bf16.msra.mxu0 0
    %2712 = vmatprep.subr.bf16.mxu0 0
    %2713 = vmatpush1.bf16.msra.mxu0 0
    %2714 = vmatprep.subr.bf16.mxu0 0
    %2715 = vmatpush1.bf16.msra.mxu0 0
    %2716 = vmatprep.subr.bf16.mxu0 0
    %2717 = vmatpush1.bf16.msra.mxu0 0
    %2718 = vmatprep.subr.bf16.mxu0 0
    %2719 = vmatpush1.bf16.msra.mxu0 0
    %2720 = vmatprep.subr.bf16.mxu0 0
    %2721 = vmatpush1.bf16.msra.mxu0 0
    %2722 = vmatprep.subr.bf16.mxu0 0
    %2723 = vmatpush1.bf16.msra.mxu0 0
    %2724 = vmatprep.subr.bf16.mxu0 0
    %2725 = vmatpush1.bf16.msra.mxu0 %v2705
    %2726 = vmatprep.subr.bf16.mxu0 0
    %2727 = vmatpush2.bf16.msra.mxu0 0
    %2728 = vmatprep.subr.bf16.mxu0 0
    %2729 = vmatpush2.bf16.msra.mxu0 0
    %2730 = vmatprep.subr.bf16.mxu0 0
    %2731 = vmatpush2.bf16.msra.mxu0 0
    %2732 = vmatprep.subr.bf16.mxu0 0
    %2733 = vmatpush2.bf16.msra.mxu0 0
    %2734 = vmatprep.subr.bf16.mxu0 0
    %2735 = vmatpush2.bf16.msra.mxu0 0
    %2736 = vmatprep.subr.bf16.mxu0 0
    %2737 = vmatpush2.bf16.msra.mxu0 0
    %2738 = vmatprep.subr.bf16.mxu0 0
    %2739 = vmatpush2.bf16.msra.mxu0 0
    %2740 = vmatprep.subr.bf16.mxu0 0
    %2741 = vmatpush2.bf16.msra.mxu0 0
    %2742 = vmatprep.mubr.bf16.mxu0 0
    %2743 = vmatmul.mubr.bf16.gmra.mxu0 %v2708
    %v2744 = vpop.f32.mrf.mxu0
    %v2745 = vadd.f32 0.0, %v2744
    %v2746 = vpop.f32.mrf.mxu0
    %v2747 = vpop.f32.mrf.mxu0
    %v2748 = vadd.f32 0.0, %v2747
    %v2749 = vpop.f32.mrf.mxu0
    %2750 = vdwg.mxu0
    %2751 = vrot.lane.b32.xlu0 %v1851, 64
    %v2752 = vpop.permute.xlu0 %2751
    %v2755 = vsel %vm733, %v2467, 0
    %2757 = vmatprep.subr.bf16.mxu0 0
    %2758 = vmatpush1.bf16.msra.mxu0 0
    %2759 = vmatprep.subr.bf16.mxu0 0
    %2760 = vmatpush1.bf16.msra.mxu0 0
    %2761 = vmatprep.subr.bf16.mxu0 0
    %2762 = vmatpush1.bf16.msra.mxu0 0
    %2763 = vmatprep.subr.bf16.mxu0 0
    %2764 = vmatpush1.bf16.msra.mxu0 0
    %2765 = vmatprep.subr.bf16.mxu0 0
    %2766 = vmatpush1.bf16.msra.mxu0 0
    %2767 = vmatprep.subr.bf16.mxu0 0
    %2768 = vmatpush1.bf16.msra.mxu0 0
    %2769 = vmatprep.subr.bf16.mxu0 0
    %2770 = vmatpush1.bf16.msra.mxu0 0
    %2771 = vmatprep.subr.bf16.mxu0 0
    %2772 = vmatpush1.bf16.msra.mxu0 %v2752
    %2773 = vmatprep.subr.bf16.mxu0 0
    %2774 = vmatpush2.bf16.msra.mxu0 0
    %2775 = vmatprep.subr.bf16.mxu0 0
    %2776 = vmatpush2.bf16.msra.mxu0 0
    %2777 = vmatprep.subr.bf16.mxu0 0
    %2778 = vmatpush2.bf16.msra.mxu0 0
    %2779 = vmatprep.subr.bf16.mxu0 0
    %2780 = vmatpush2.bf16.msra.mxu0 0
    %2781 = vmatprep.subr.bf16.mxu0 0
    %2782 = vmatpush2.bf16.msra.mxu0 0
    %2783 = vmatprep.subr.bf16.mxu0 0
    %2784 = vmatpush2.bf16.msra.mxu0 0
    %2785 = vmatprep.subr.bf16.mxu0 0
    %2786 = vmatpush2.bf16.msra.mxu0 0
    %2787 = vmatprep.subr.bf16.mxu0 0
    %2788 = vmatpush2.bf16.msra.mxu0 0
    %2789 = vmatprep.mubr.bf16.mxu0 0
    %2790 = vmatmul.mubr.bf16.gmra.mxu0 %v2755
    %v2791 = vpop.f32.mrf.mxu0
    %v2792 = vadd.f32 0.0, %v2791
    %v2793 = vpop.f32.mrf.mxu0
    %v2794 = vpop.f32.mrf.mxu0
    %v2795 = vadd.f32 0.0, %v2794
    %v2796 = vpop.f32.mrf.mxu0
    %2797 = vdwg.mxu0
    %2798 = vrot.lane.b32.xlu0 %v1852, 64
    %v2799 = vpop.permute.xlu0 %2798
    %v2802 = vsel %vm733, %v2468, 0
    %2804 = vmatprep.subr.bf16.mxu0 0
    %2805 = vmatpush1.bf16.msra.mxu0 0
    %2806 = vmatprep.subr.bf16.mxu0 0
    %2807 = vmatpush1.bf16.msra.mxu0 0
    %2808 = vmatprep.subr.bf16.mxu0 0
    %2809 = vmatpush1.bf16.msra.mxu0 0
    %2810 = vmatprep.subr.bf16.mxu0 0
    %2811 = vmatpush1.bf16.msra.mxu0 0
    %2812 = vmatprep.subr.bf16.mxu0 0
    %2813 = vmatpush1.bf16.msra.mxu0 0
    %2814 = vmatprep.subr.bf16.mxu0 0
    %2815 = vmatpush1.bf16.msra.mxu0 0
    %2816 = vmatprep.subr.bf16.mxu0 0
    %2817 = vmatpush1.bf16.msra.mxu0 0
    %2818 = vmatprep.subr.bf16.mxu0 0
    %2819 = vmatpush1.bf16.msra.mxu0 %v2799
    %2820 = vmatprep.subr.bf16.mxu0 0
    %2821 = vmatpush2.bf16.msra.mxu0 0
    %2822 = vmatprep.subr.bf16.mxu0 0
    %2823 = vmatpush2.bf16.msra.mxu0 0
    %2824 = vmatprep.subr.bf16.mxu0 0
    %2825 = vmatpush2.bf16.msra.mxu0 0
    %2826 = vmatprep.subr.bf16.mxu0 0
    %2827 = vmatpush2.bf16.msra.mxu0 0
    %2828 = vmatprep.subr.bf16.mxu0 0
    %2829 = vmatpush2.bf16.msra.mxu0 0
    %2830 = vmatprep.subr.bf16.mxu0 0
    %2831 = vmatpush2.bf16.msra.mxu0 0
    %2832 = vmatprep.subr.bf16.mxu0 0
    %2833 = vmatpush2.bf16.msra.mxu0 0
    %2834 = vmatprep.subr.bf16.mxu0 0
    %2835 = vmatpush2.bf16.msra.mxu0 0
    %2836 = vmatprep.mubr.bf16.mxu0 0
    %2837 = vmatmul.mubr.bf16.gmra.mxu0 %v2802
    %v2838 = vpop.f32.mrf.mxu0
    %v2839 = vadd.f32 0.0, %v2838
    %v2840 = vpop.f32.mrf.mxu0
    %v2841 = vpop.f32.mrf.mxu0
    %v2842 = vadd.f32 0.0, %v2841
    %v2843 = vpop.f32.mrf.mxu0
    %2844 = vdwg.mxu0
    %2849 = vrot.lane.b32.xlu0 %v2604, 8
    %v2850 = vpop.permute.xlu0 %2849
    %2851 = vrot.lane.b32.xlu0 %v2607, 8
    %v2852 = vpop.permute.xlu0 %2851
    %2853 = vrot.lane.b32.xlu0 %v2651, 8
    %v2854 = vpop.permute.xlu0 %2853
    %2855 = vrot.lane.b32.xlu0 %v2654, 8
    %v2856 = vpop.permute.xlu0 %2855
    %2865 = vrot.lane.b32.xlu0 %v2698, 16
    %v2866 = vpop.permute.xlu0 %2865
    %2867 = vrot.lane.b32.xlu0 %v2701, 16
    %v2868 = vpop.permute.xlu0 %2867
    %2869 = vrot.lane.b32.xlu0 %v2745, 16
    %v2870 = vpop.permute.xlu0 %2869
    %2871 = vrot.lane.b32.xlu0 %v2748, 16
    %v2872 = vpop.permute.xlu0 %2871
    %2881 = vrot.lane.b32.xlu0 %v2792, 24
    %v2882 = vpop.permute.xlu0 %2881
    %2883 = vrot.lane.b32.xlu0 %v2795, 24
    %v2884 = vpop.permute.xlu0 %2883
    %2885 = vrot.lane.b32.xlu0 %v2839, 24
    %v2886 = vpop.permute.xlu0 %2885
    %2887 = vrot.lane.b32.xlu0 %v2842, 24
    %v2888 = vpop.permute.xlu0 %2887
    %v2893 = vsel %vm303, %v2510, %v2850
    %v2894 = vsel %vm303, %v2513, %v2852
    %v2895 = vsel %vm303, %v2557, %v2854
    %v2896 = vsel %vm303, %v2560, %v2856
    %v2897 = vsel %vm733, %v2893, %v2866
    %v2898 = vsel %vm733, %v2894, %v2868
    %v2899 = vsel %vm733, %v2895, %v2870
    %v2900 = vsel %vm733, %v2896, %v2872
    %v2901 = vsel %vm1350, %v2897, %v2882
    %v2902 = vsel %vm1350, %v2898, %v2884
    %v2903 = vsel %vm1350, %v2899, %v2886
    %v2904 = vsel %vm1350, %v2900, %v2888
    %v2905 = vpack.c.bf16 %v2902, %v2901
    %v2906 = vpack.c.bf16 %v2904, %v2903
    %s2907 = scalar_lea.vmem %s7, 32
    %v2908 = vld [vmem:[%s2907] sm:$0xff]
    %v2909 = vld [vmem:[%s2907 + $0x8] sm:$0xff]
    %v2910 = vld [vmem:[%s2907 + $0x10] sm:$0xff]
    %v2911 = vld [vmem:[%s2907 + $0x18] sm:$0xff]
    %v2912 = vpack.c.bf16 %v2909, %v2908
    %v2913 = vpack.c.bf16 %v2911, %v2910
    %s2914 = scalar_lea.vmem %s8, 1
    %v2915 = vld [vmem:[%s2914] sm:$0x1]
    %v2917 = vlaneseq
    %v2918 = vshrl.u32 %v2917, 7
    %v2919 = vsub.s32 0, %v2918
    %v2920 = vrot.slane %v2915, %v2919
    %v2923 = vsel %vm83, %v2905, 0
    %v2926 = vsel %vm83, %v2906, 0
    %2928 = vmatprep.subr.bf16.mxu0 0
    %2929 = vmatpush1.bf16.msra.mxu0 0
    %2930 = vmatprep.subr.bf16.mxu0 0
    %2931 = vmatpush1.bf16.msra.mxu0 0
    %2932 = vmatprep.subr.bf16.mxu0 0
    %2933 = vmatpush1.bf16.msra.mxu0 0
    %2934 = vmatprep.subr.bf16.mxu0 0
    %2935 = vmatpush1.bf16.msra.mxu0 0
    %2936 = vmatprep.subr.bf16.mxu0 0
    %2937 = vmatpush1.bf16.msra.mxu0 0
    %2938 = vmatprep.subr.bf16.mxu0 0
    %2939 = vmatpush1.bf16.msra.mxu0 0
    %2940 = vmatprep.subr.bf16.mxu0 0
    %2941 = vmatpush1.bf16.msra.mxu0 %v2913
    %2942 = vmatprep.subr.bf16.mxu0 0
    %2943 = vmatpush1.bf16.msra.mxu0 %v2912
    %2944 = vmatprep.subr.bf16.mxu0 0
    %2945 = vmatpush2.bf16.msra.mxu0 0
    %2946 = vmatprep.subr.bf16.mxu0 0
    %2947 = vmatpush2.bf16.msra.mxu0 0
    %2948 = vmatprep.subr.bf16.mxu0 0
    %2949 = vmatpush2.bf16.msra.mxu0 0
    %2950 = vmatprep.subr.bf16.mxu0 0
    %2951 = vmatpush2.bf16.msra.mxu0 0
    %2952 = vmatprep.subr.bf16.mxu0 0
    %2953 = vmatpush2.bf16.msra.mxu0 0
    %2954 = vmatprep.subr.bf16.mxu0 0
    %2955 = vmatpush2.bf16.msra.mxu0 0
    %2956 = vmatprep.subr.bf16.mxu0 0
    %2957 = vmatpush2.bf16.msra.mxu0 0
    %2958 = vmatprep.subr.bf16.mxu0 0
    %2959 = vmatpush2.bf16.msra.mxu0 0
    %2960 = vmatprep.mubr.bf16.mxu0 0
    %2961 = vmatmul.mubr.bf16.gmra.mxu0 %v2923
    %v2962 = vpop.f32.mrf.mxu0
    %v2963 = vadd.f32 %v2920, %v2962
    %v2964 = vpop.f32.mrf.mxu0
    %v2965 = vpop.f32.mrf.mxu0
    %v2966 = vadd.f32 %v2920, %v2965
    %v2967 = vpop.f32.mrf.mxu0
    %2968 = vmatprep.mubr.bf16.mxu0 0
    %2969 = vmatmul.mubr.bf16.gmra.mxu0 %v2926
    %v2970 = vpop.f32.mrf.mxu0
    %v2971 = vadd.f32 %v2920, %v2970
    %v2972 = vpop.f32.mrf.mxu0
    %v2973 = vpop.f32.mrf.mxu0
    %v2974 = vadd.f32 %v2920, %v2973
    %v2975 = vpop.f32.mrf.mxu0
    %2976 = vdwg.mxu0
    %v2977 = vadd.f32 %v2963, %v1729
    %v2978 = vadd.f32 %v2966, %v1730
    %v2979 = vadd.f32 %v2971, %v1731
    %v2980 = vadd.f32 %v2974, %v1732
    %s2981 = scalar_lea.vmem %s9, 1
    %v2982 = vld [vmem:[%s2981] sm:$0x1]
    %s2983 = scalar_lea.vmem %s10, 1
    %v2984 = vld [vmem:[%s2983] sm:$0x1]
    %v2985 = vsel %vm83, %v2977, 0.0
    %2986 = vadd.xlane.f32.xlu0 %v2985
    %v2987 = vpop.xlane.xlu0 %2986
    %v2988 = vsel %vm83, %v2978, 0.0
    %2989 = vadd.xlane.f32.xlu0 %v2988
    %v2990 = vpop.xlane.xlu0 %2989
    %v2991 = vsel %vm83, %v2979, 0.0
    %2992 = vadd.xlane.f32.xlu0 %v2991
    %v2993 = vpop.xlane.xlu0 %2992
    %v2994 = vsel %vm83, %v2980, 0.0
    %2995 = vadd.xlane.f32.xlu0 %v2994
    %v2996 = vpop.xlane.xlu0 %2995
    %v2997 = vmul.f32 %v2987, %v1443
    %v2998 = vmul.f32 %v2990, %v1443
    %v2999 = vmul.f32 %v2993, %v1443
    %v3000 = vmul.f32 %v2996, %v1443
    %v3001 = vsub.f32 %v2977, %v2997
    %v3002 = vsub.f32 %v2978, %v2998
    %v3003 = vsub.f32 %v2979, %v2999
    %v3004 = vsub.f32 %v2980, %v3000
    %v3005 = vmul.f32 %v3001, %v3001
    %v3006 = vmul.f32 %v3002, %v3002
    %v3007 = vmul.f32 %v3003, %v3003
    %v3008 = vmul.f32 %v3004, %v3004
    %v3009 = vsel %vm83, %v3005, 0.0
    %3010 = vadd.xlane.f32.xlu0 %v3009
    %v3011 = vpop.xlane.xlu0 %3010
    %v3012 = vsel %vm83, %v3006, 0.0
    %3013 = vadd.xlane.f32.xlu0 %v3012
    %v3014 = vpop.xlane.xlu0 %3013
    %v3015 = vsel %vm83, %v3007, 0.0
    %3016 = vadd.xlane.f32.xlu0 %v3015
    %v3017 = vpop.xlane.xlu0 %3016
    %v3018 = vsel %vm83, %v3008, 0.0
    %3019 = vadd.xlane.f32.xlu0 %v3018
    %v3020 = vpop.xlane.xlu0 %3019
    %v3021 = vmul.f32 %v3011, %v1443
    %v3022 = vmul.f32 %v3014, %v1443
    %v3023 = vmul.f32 %v3017, %v1443
    %v3024 = vmul.f32 %v3020, %v1443
    %v3025 = vadd.f32 %v3021, 1e-06
    %v3026 = vadd.f32 %v3022, 1e-06
    %v3027 = vadd.f32 %v3023, 1e-06
    %v3028 = vadd.f32 %v3024, 1e-06
    %v3029 = vrsqrt.pop %v3025
    %v3030 = vrsqrt.pop %v3026
    %v3031 = vrsqrt.pop %v3027
    %v3032 = vrsqrt.pop %v3028
    %v3033 = vmul.f32 %v3001, %v3029
    %v3034 = vmul.f32 %v3002, %v3030
    %v3035 = vmul.f32 %v3003, %v3031
    %v3036 = vmul.f32 %v3004, %v3032
    %v3038 = vlaneseq
    %v3039 = vshrl.u32 %v3038, 7
    %v3040 = vsub.s32 0, %v3039
    %v3041 = vrot.slane %v2982, %v3040
    %v3043 = vmul.f32 %v3033, %v3041
    %v3044 = vmul.f32 %v3034, %v3041
    %v3045 = vmul.f32 %v3035, %v3041
    %v3046 = vmul.f32 %v3036, %v3041
    %v3048 = vlaneseq
    %v3049 = vshrl.u32 %v3048, 7
    %v3050 = vsub.s32 0, %v3049
    %v3051 = vrot.slane %v2984, %v3050
    %v3053 = vadd.f32 %v3043, %v3051
    %v3054 = vadd.f32 %v3044, %v3051
    %v3055 = vadd.f32 %v3045, %v3051
    %v3056 = vadd.f32 %v3046, %v3051
    %v3057 = vpack.c.bf16 %v3054, %v3053
    %v3058 = vpack.c.bf16 %v3056, %v3055
    %s3059 = scalar_lea.vmem %s11, 32
    %v3060 = vld [vmem:[%s3059] sm:$0xff]
    %v3061 = vld [vmem:[%s3059 + $0x8] sm:$0xff]
    %v3062 = vld [vmem:[%s3059 + $0x10] sm:$0xff]
    %v3063 = vld [vmem:[%s3059 + $0x18] sm:$0xff]
    %v3064 = vpack.c.bf16 %v3061, %v3060
    %v3065 = vpack.c.bf16 %v3063, %v3062
    %s3066 = scalar_lea.vmem %s12, 1
    %v3067 = vld [vmem:[%s3066] sm:$0x1]
    %v3069 = vlaneseq
    %v3070 = vshrl.u32 %v3069, 7
    %v3071 = vsub.s32 0, %v3070
    %v3072 = vrot.slane %v3067, %v3071
    %v3075 = vsel %vm83, %v3057, 0
    %v3078 = vsel %vm83, %v3058, 0
    %3080 = vmatprep.subr.bf16.mxu0 0
    %3081 = vmatpush1.bf16.msra.mxu0 0
    %3082 = vmatprep.subr.bf16.mxu0 0
    %3083 = vmatpush1.bf16.msra.mxu0 0
    %3084 = vmatprep.subr.bf16.mxu0 0
    %3085 = vmatpush1.bf16.msra.mxu0 0
    %3086 = vmatprep.subr.bf16.mxu0 0
    %3087 = vmatpush1.bf16.msra.mxu0 0
    %3088 = vmatprep.subr.bf16.mxu0 0
    %3089 = vmatpush1.bf16.msra.mxu0 0
    %3090 = vmatprep.subr.bf16.mxu0 0
    %3091 = vmatpush1.bf16.msra.mxu0 0
    %3092 = vmatprep.subr.bf16.mxu0 0
    %3093 = vmatpush1.bf16.msra.mxu0 %v3065
    %3094 = vmatprep.subr.bf16.mxu0 0
    %3095 = vmatpush1.bf16.msra.mxu0 %v3064
    %3096 = vmatprep.subr.bf16.mxu0 0
    %3097 = vmatpush2.bf16.msra.mxu0 0
    %3098 = vmatprep.subr.bf16.mxu0 0
    %3099 = vmatpush2.bf16.msra.mxu0 0
    %3100 = vmatprep.subr.bf16.mxu0 0
    %3101 = vmatpush2.bf16.msra.mxu0 0
    %3102 = vmatprep.subr.bf16.mxu0 0
    %3103 = vmatpush2.bf16.msra.mxu0 0
    %3104 = vmatprep.subr.bf16.mxu0 0
    %3105 = vmatpush2.bf16.msra.mxu0 0
    %3106 = vmatprep.subr.bf16.mxu0 0
    %3107 = vmatpush2.bf16.msra.mxu0 0
    %3108 = vmatprep.subr.bf16.mxu0 0
    %3109 = vmatpush2.bf16.msra.mxu0 0
    %3110 = vmatprep.subr.bf16.mxu0 0
    %3111 = vmatpush2.bf16.msra.mxu0 0
    %3112 = vmatprep.mubr.bf16.mxu0 0
    %3113 = vmatmul.mubr.bf16.gmra.mxu0 %v3075
    %v3114 = vpop.f32.mrf.mxu0
    %v3115 = vadd.f32 %v3072, %v3114
    %v3116 = vpop.f32.mrf.mxu0
    %v3117 = vpop.f32.mrf.mxu0
    %v3118 = vadd.f32 %v3072, %v3117
    %v3119 = vpop.f32.mrf.mxu0
    %3120 = vmatprep.mubr.bf16.mxu0 0
    %3121 = vmatmul.mubr.bf16.gmra.mxu0 %v3078
    %v3122 = vpop.f32.mrf.mxu0
    %v3123 = vadd.f32 %v3072, %v3122
    %v3124 = vpop.f32.mrf.mxu0
    %v3125 = vpop.f32.mrf.mxu0
    %v3126 = vadd.f32 %v3072, %v3125
    %v3127 = vpop.f32.mrf.mxu0
    %3128 = vdwg.mxu0
    %v3129 = vmax.f32 %v3115, 0.0
    %v3130 = vmax.f32 %v3118, 0.0
    %v3131 = vmax.f32 %v3123, 0.0
    %v3132 = vmax.f32 %v3126, 0.0
    %v3133 = vpack.c.bf16 %v3130, %v3129
    %v3134 = vpack.c.bf16 %v3132, %v3131
    %s3135 = scalar_lea.vmem %s13, 64
    %v3136 = vld [vmem:[%s3135] sm:$0xff]
    %v3137 = vld [vmem:[%s3135 + $0x8] sm:$0xff]
    %v3138 = vld [vmem:[%s3135 + $0x10] sm:$0xff]
    %v3139 = vld [vmem:[%s3135 + $0x18] sm:$0xff]
    %v3140 = vld [vmem:[%s3135 + $0x20] sm:$0xff]
    %v3141 = vld [vmem:[%s3135 + $0x28] sm:$0xff]
    %v3142 = vld [vmem:[%s3135 + $0x30] sm:$0xff]
    %v3143 = vld [vmem:[%s3135 + $0x38] sm:$0xff]
    %v3144 = vpack.c.bf16 %v3137, %v3136
    %v3145 = vpack.c.bf16 %v3139, %v3138
    %v3146 = vpack.c.bf16 %v3141, %v3140
    %v3147 = vpack.c.bf16 %v3143, %v3142
    %s3148 = scalar_lea.vmem %s14, 1
    %v3149 = vld [vmem:[%s3148] sm:$0x1]
    %v3151 = vlaneseq
    %v3152 = vshrl.u32 %v3151, 7
    %v3153 = vsub.s32 0, %v3152
    %v3154 = vrot.slane %v3149, %v3153
    %v3157 = vsel %vm1599, %v3133, 0
    %v3160 = vsel %vm1599, %v3134, 0
    %3162 = vmatprep.subr.bf16.mxu0 0
    %3163 = vmatpush1.bf16.msra.mxu0 0
    %3164 = vmatprep.subr.bf16.mxu0 0
    %3165 = vmatpush1.bf16.msra.mxu0 0
    %3166 = vmatprep.subr.bf16.mxu0 0
    %3167 = vmatpush1.bf16.msra.mxu0 0
    %3168 = vmatprep.subr.bf16.mxu0 0
    %3169 = vmatpush1.bf16.msra.mxu0 0
    %3170 = vmatprep.subr.bf16.mxu0 0
    %3171 = vmatpush1.bf16.msra.mxu0 %v3147
    %3172 = vmatprep.subr.bf16.mxu0 0
    %3173 = vmatpush1.bf16.msra.mxu0 %v3146
    %3174 = vmatprep.subr.bf16.mxu0 0
    %3175 = vmatpush1.bf16.msra.mxu0 %v3145
    %3176 = vmatprep.subr.bf16.mxu0 0
    %3177 = vmatpush1.bf16.msra.mxu0 %v3144
    %3178 = vmatprep.subr.bf16.mxu0 0
    %3179 = vmatpush2.bf16.msra.mxu0 0
    %3180 = vmatprep.subr.bf16.mxu0 0
    %3181 = vmatpush2.bf16.msra.mxu0 0
    %3182 = vmatprep.subr.bf16.mxu0 0
    %3183 = vmatpush2.bf16.msra.mxu0 0
    %3184 = vmatprep.subr.bf16.mxu0 0
    %3185 = vmatpush2.bf16.msra.mxu0 0
    %3186 = vmatprep.subr.bf16.mxu0 0
    %3187 = vmatpush2.bf16.msra.mxu0 0
    %3188 = vmatprep.subr.bf16.mxu0 0
    %3189 = vmatpush2.bf16.msra.mxu0 0
    %3190 = vmatprep.subr.bf16.mxu0 0
    %3191 = vmatpush2.bf16.msra.mxu0 0
    %3192 = vmatprep.subr.bf16.mxu0 0
    %3193 = vmatpush2.bf16.msra.mxu0 0
    %3194 = vmatprep.mubr.bf16.mxu0 0
    %3195 = vmatmul.mubr.bf16.gmra.mxu0 %v3157
    %v3196 = vpop.f32.mrf.mxu0
    %v3197 = vadd.f32 %v3154, %v3196
    %v3198 = vpop.f32.mrf.mxu0
    %v3199 = vpop.f32.mrf.mxu0
    %v3200 = vadd.f32 %v3154, %v3199
    %v3201 = vpop.f32.mrf.mxu0
    %3202 = vmatprep.mubr.bf16.mxu0 0
    %3203 = vmatmul.mubr.bf16.gmra.mxu0 %v3160
    %v3204 = vpop.f32.mrf.mxu0
    %v3205 = vadd.f32 %v3154, %v3204
    %v3206 = vpop.f32.mrf.mxu0
    %v3207 = vpop.f32.mrf.mxu0
    %v3208 = vadd.f32 %v3154, %v3207
    %v3209 = vpop.f32.mrf.mxu0
    %3210 = vdwg.mxu0
    %v3211 = vadd.f32 %v3197, %v3053
    %v3212 = vadd.f32 %v3200, %v3054
    %v3213 = vadd.f32 %v3205, %v3055
    %v3214 = vadd.f32 %v3208, %v3056
    %s3215 = scalar_lea.vmem %s15, 1
    %v3216 = vld [vmem:[%s3215] sm:$0x1]
    %s3217 = scalar_lea.vmem %s16, 1
    %v3218 = vld [vmem:[%s3217] sm:$0x1]
    %v3219 = vsel %vm83, %v3211, 0.0
    %3220 = vadd.xlane.f32.xlu0 %v3219
    %v3221 = vpop.xlane.xlu0 %3220
    %v3222 = vsel %vm83, %v3212, 0.0
    %3223 = vadd.xlane.f32.xlu0 %v3222
    %v3224 = vpop.xlane.xlu0 %3223
    %v3225 = vsel %vm83, %v3213, 0.0
    %3226 = vadd.xlane.f32.xlu0 %v3225
    %v3227 = vpop.xlane.xlu0 %3226
    %v3228 = vsel %vm83, %v3214, 0.0
    %3229 = vadd.xlane.f32.xlu0 %v3228
    %v3230 = vpop.xlane.xlu0 %3229
    %v3231 = vmul.f32 %v3221, %v1443
    %v3232 = vmul.f32 %v3224, %v1443
    %v3233 = vmul.f32 %v3227, %v1443
    %v3234 = vmul.f32 %v3230, %v1443
    %v3235 = vsub.f32 %v3211, %v3231
    %v3236 = vsub.f32 %v3212, %v3232
    %v3237 = vsub.f32 %v3213, %v3233
    %v3238 = vsub.f32 %v3214, %v3234
    %v3239 = vmul.f32 %v3235, %v3235
    %v3240 = vmul.f32 %v3236, %v3236
    %v3241 = vmul.f32 %v3237, %v3237
    %v3242 = vmul.f32 %v3238, %v3238
    %v3243 = vsel %vm83, %v3239, 0.0
    %3244 = vadd.xlane.f32.xlu0 %v3243
    %v3245 = vpop.xlane.xlu0 %3244
    %v3246 = vsel %vm83, %v3240, 0.0
    %3247 = vadd.xlane.f32.xlu0 %v3246
    %v3248 = vpop.xlane.xlu0 %3247
    %v3249 = vsel %vm83, %v3241, 0.0
    %3250 = vadd.xlane.f32.xlu0 %v3249
    %v3251 = vpop.xlane.xlu0 %3250
    %v3252 = vsel %vm83, %v3242, 0.0
    %3253 = vadd.xlane.f32.xlu0 %v3252
    %v3254 = vpop.xlane.xlu0 %3253
    %v3255 = vmul.f32 %v3245, %v1443
    %v3256 = vmul.f32 %v3248, %v1443
    %v3257 = vmul.f32 %v3251, %v1443
    %v3258 = vmul.f32 %v3254, %v1443
    %v3259 = vadd.f32 %v3255, 1e-06
    %v3260 = vadd.f32 %v3256, 1e-06
    %v3261 = vadd.f32 %v3257, 1e-06
    %v3262 = vadd.f32 %v3258, 1e-06
    %v3263 = vrsqrt.pop %v3259
    %v3264 = vrsqrt.pop %v3260
    %v3265 = vrsqrt.pop %v3261
    %v3266 = vrsqrt.pop %v3262
    %v3267 = vmul.f32 %v3235, %v3263
    %v3268 = vmul.f32 %v3236, %v3264
    %v3269 = vmul.f32 %v3237, %v3265
    %v3270 = vmul.f32 %v3238, %v3266
    %v3272 = vlaneseq
    %v3273 = vshrl.u32 %v3272, 7
    %v3274 = vsub.s32 0, %v3273
    %v3275 = vrot.slane %v3216, %v3274
    %v3277 = vmul.f32 %v3267, %v3275
    %v3278 = vmul.f32 %v3268, %v3275
    %v3279 = vmul.f32 %v3269, %v3275
    %v3280 = vmul.f32 %v3270, %v3275
    %v3282 = vlaneseq
    %v3283 = vshrl.u32 %v3282, 7
    %v3284 = vsub.s32 0, %v3283
    %v3285 = vrot.slane %v3218, %v3284
    %v3287 = vadd.f32 %v3277, %v3285
    %v3288 = vadd.f32 %v3278, %v3285
    %v3289 = vadd.f32 %v3279, %v3285
    %v3290 = vadd.f32 %v3280, %v3285
    %v3291 = vpack.c.bf16 %v3288, %v3287
    %v3292 = vpack.c.bf16 %v3290, %v3289
    %v3293 = vld [vmem:[%s17] sm:$0xff]
    %v3294 = vld [vmem:[%s17 + $0x8] sm:$0xff]
    %v3295 = vld [vmem:[%s17 + $0x10] sm:$0xff]
    %v3296 = vld [vmem:[%s17 + $0x18] sm:$0xff]
    %v3297 = vpack.c.bf16 %v3294, %v3293
    %v3298 = vpack.c.bf16 %v3296, %v3295
    %v3299 = vld [vmem:[%s18] sm:$0x1]
    %v3301 = vlaneseq
    %v3302 = vshrl.u32 %v3301, 7
    %v3303 = vsub.s32 0, %v3302
    %v3304 = vrot.slane %v3299, %v3303
    %v3307 = vsel %vm83, %v3291, 0
    %v3310 = vsel %vm83, %v3292, 0
    %3312 = vmatprep.subr.bf16.mxu0 0
    %3313 = vmatpush1.bf16.msra.mxu0 0
    %3314 = vmatprep.subr.bf16.mxu0 0
    %3315 = vmatpush1.bf16.msra.mxu0 0
    %3316 = vmatprep.subr.bf16.mxu0 0
    %3317 = vmatpush1.bf16.msra.mxu0 0
    %3318 = vmatprep.subr.bf16.mxu0 0
    %3319 = vmatpush1.bf16.msra.mxu0 0
    %3320 = vmatprep.subr.bf16.mxu0 0
    %3321 = vmatpush1.bf16.msra.mxu0 0
    %3322 = vmatprep.subr.bf16.mxu0 0
    %3323 = vmatpush1.bf16.msra.mxu0 0
    %3324 = vmatprep.subr.bf16.mxu0 0
    %3325 = vmatpush1.bf16.msra.mxu0 %v3298
    %3326 = vmatprep.subr.bf16.mxu0 0
    %3327 = vmatpush1.bf16.msra.mxu0 %v3297
    %3328 = vmatprep.subr.bf16.mxu0 0
    %3329 = vmatpush2.bf16.msra.mxu0 0
    %3330 = vmatprep.subr.bf16.mxu0 0
    %3331 = vmatpush2.bf16.msra.mxu0 0
    %3332 = vmatprep.subr.bf16.mxu0 0
    %3333 = vmatpush2.bf16.msra.mxu0 0
    %3334 = vmatprep.subr.bf16.mxu0 0
    %3335 = vmatpush2.bf16.msra.mxu0 0
    %3336 = vmatprep.subr.bf16.mxu0 0
    %3337 = vmatpush2.bf16.msra.mxu0 0
    %3338 = vmatprep.subr.bf16.mxu0 0
    %3339 = vmatpush2.bf16.msra.mxu0 0
    %3340 = vmatprep.subr.bf16.mxu0 0
    %3341 = vmatpush2.bf16.msra.mxu0 0
    %3342 = vmatprep.subr.bf16.mxu0 0
    %3343 = vmatpush2.bf16.msra.mxu0 0
    %3344 = vmatprep.mubr.bf16.mxu0 0
    %3345 = vmatmul.mubr.bf16.gmra.mxu0 %v3307
    %v3346 = vpop.f32.mrf.mxu0
    %v3347 = vadd.f32 %v3304, %v3346
    %v3348 = vpop.f32.mrf.mxu0
    %v3349 = vpop.f32.mrf.mxu0
    %v3350 = vpop.f32.mrf.mxu0
    %3351 = vmatprep.mubr.bf16.mxu0 0
    %3352 = vmatmul.mubr.bf16.gmra.mxu0 %v3310
    %v3353 = vpop.f32.mrf.mxu0
    %v3354 = vadd.f32 %v3304, %v3353
    %v3355 = vpop.f32.mrf.mxu0
    %v3356 = vpop.f32.mrf.mxu0
    %v3357 = vpop.f32.mrf.mxu0
    %3358 = vdwg.mxu0
    %3359 = vst [vmem:[#allocation2] sm:$0xff] %v3347
    %3360 = vst [vmem:[#allocation2 + $0x8] sm:$0xff] %v3354
    // Predicated region
    $region78: #{transformer_diffusion_forward.1} parent=1 // pred_check
      _
    $region79: #{transformer_diffusion_forward.1} parent=1 // pred_check_branch
      %3362 = sbr.rel (0) target = $region81
    $region80: #{transformer_diffusion_forward.1} parent=1 // pred_region
      %s3364 = ssub.s32 256, 256
      %3365 = vsyncadd [#allocation3], %s3364
      %s3366 = sshll.u32 [#allocation2], 4
      %s3367 = int_to_ptr.vmem [resolvable:$true] %s3366
      %3372 = dma.vmem_to_hbm [thread:$0]  %s3367, 256, %s19, [#allocation3], 128, 128, 8
    $region81: #{transformer_diffusion_forward.1} parent=1 // pred_fallthru
      _
    // Predicated region
    $region82: #{transformer_diffusion_forward.1} parent=1 // pred_check
      _
    $region83: #{transformer_diffusion_forward.1} parent=1 // pred_check_branch
      %3374 = sbr.rel (0) target = $region85
    $region84: #{transformer_diffusion_forward.1} parent=1 // pred_region
      %3375 = dma.done [#allocation3], 256
    $region85: #{transformer_diffusion_forward.1} parent=1 // pred_fallthru
      _
    %3376 = vsyncpa [#allocation3], 1

</llo_original>
